<compile_context>
chip_gen: v5e
topology: v5e:2x2
jax: 0.10.0
libtpu: 0.0.40
codegen_flags: <defaults>
</compile_context>

<pallas_src>
import functools

import jax
import jax.numpy as jnp
from jax import lax
from jax.experimental import pallas as pl
from jax.experimental.pallas import tpu as pltpu


_VMEM_BUDGET = 40 * 1024 * 1024   # per-step footprint target (v7x-safe)
_VMEM_LIMIT = 48 * 1024 * 1024    # scoped VMEM limit handed to Mosaic


def _round_up(v, m):
    return ((v + m - 1) // m) * m


def _upsample_conv_kernel(xm_ref, xp_ref, xn_ref, e_ref, b_ref, o_ref, xs_ref,
                          *, pack):
    # xm_ref: (RB, Wp, C)        main block of source rows (cols zero-padded)
    # xp_ref: (1,  Wp, C)        halo row above (clamped; zeroed here at top)
    # xn_ref: (1,  Wp, C)        halo row below (clamped; zeroed at bottom)
    # e_ref:  (4, 4, C, Cout)    folded weights: [parity pr*2+pc, tap a*2+b]
    # b_ref:  (1, Cout)          bias (f32)
    # o_ref:  (4, RB, Wpad, Cout) per-parity outputs on the source grid
    # xs_ref: (RB+2, Wp, C)      VMEM scratch: halo + main rows, contiguous
    RB, Wp, C = xm_ref.shape
    Wpad = Wp - 2
    Cout = e_ref.shape[-1]

    hb = pl.program_id(1)
    nb = pl.num_programs(1)
    dt = xm_ref.dtype
    top = jnp.where(hb > 0, 1.0, 0.0).astype(dt)       # zero top halo at hb==0
    bot = jnp.where(hb < nb - 1, 1.0, 0.0).astype(dt)  # zero bottom halo at end

    # One copy per step; afterwards every shifted operand is a static ref slice
    # of the scratch (no per-tap concatenates, review #2).
    xs_ref[0] = xp_ref[0] * top
    xs_ref[pl.ds(1, RB)] = xm_ref[...]
    xs_ref[RB + 1] = xn_ref[0] * bot

    bias = b_ref[...]                                   # (1, Cout), f32

    # Parity-outer: one live accumulator, store before the next parity (#3).
    for pr in (0, 1):
        for pc in (0, 1):
            p = pr * 2 + pc
            # Tap (a, b) of parity (pr, pc) reads source x[i+a-1+pr, j+b-1+pc],
            # i.e. scratch rows [pr+a, pr+a+RB), padded cols [pc+b, pc+b+Wpad).
            taps = [xs_ref[pl.ds(pr + a, RB), pl.ds(pc + b, Wpad), :]
                    for a in (0, 1) for b in (0, 1)]
            if pack:
                # Pack the 4 taps along K -> a single MXU matmul (review #1).
                xpk = jnp.concatenate(taps, axis=-1).reshape(RB * Wpad, 4 * C)
                w_p = e_ref[p].reshape(4 * C, Cout)
                acc = jnp.dot(xpk, w_p, preferred_element_type=jnp.float32)
            else:
                acc = jnp.zeros((RB * Wpad, Cout), jnp.float32)
                for t, tap in enumerate(taps):
                    acc = acc + jnp.dot(tap.reshape(RB * Wpad, C), e_ref[p, t],
                                        preferred_element_type=jnp.float32)
            acc = acc + bias
            o_ref[p] = acc.reshape(RB, Wpad, Cout).astype(o_ref.dtype)


def _subpixel_weights(weight_oihw):
    """Fold the 3x3 conv on the nearest-2x grid into 4 effective 2x2 kernels.

    Returns (4, 4, Cin, Cout) indexed [pr*2 + pc, a*2 + b], where tap (a, b) of
    output parity (pr, pc) reads source pixel x[i + a - 1 + pr, j + b - 1 + pc]
    for output pixel (2i + pr, 2j + pc).
    """
    w = jnp.transpose(weight_oihw, (2, 3, 1, 0)).astype(jnp.float32)  # HWIO
    groups = (((0,), (1, 2)), ((0, 1), (2,)))   # [parity][tap] -> 3x3 rows/cols
    parities = []
    for pr in range(2):
        for pc in range(2):
            taps = []
            for a in range(2):
                for b in range(2):
                    terms = [w[dy, dx]
                             for dy in groups[pr][a] for dx in groups[pc][b]]
                    taps.append(functools.reduce(jnp.add, terms))  # (Cin, Cout)
            parities.append(jnp.stack(taps, axis=0))               # (4, Ci, Co)
    return jnp.stack(parities, axis=0)                             # (4, 4, Ci, Co)


def _pick_row_block(H, Wp, Wpad, C, itemsize, budget_bytes=_VMEM_BUDGET,
                    max_rows=256):
    """Largest row block whose FULL per-step VMEM footprint fits the budget.

    Counts the double-buffered input/halo/weight blocks, the double-buffered
    f32 output block, the halo+main scratch and the live packed operand +
    accumulator (review #4/#5), not just the input block.
    """
    def footprint(rb):
        xin = rb * Wp * C * itemsize                  # main input block
        halo = 2 * Wp * C * itemsize                  # two 1-row halos
        wts = 16 * C * C * itemsize + 4 * C           # folded weights + bias
        outb = 4 * rb * Wpad * C * 4                  # f32 output block
        scratch = (rb + 2) * Wp * C * itemsize        # halo+main copy
        live = rb * Wpad * C * (4 * itemsize + 4)     # packed operand + f32 acc
        return 2 * (xin + halo + wts + outb) + scratch + live

    hi = min(max_rows, _round_up(max(H, 1), 8))
    best = 8                                          # multiples of 8 only
    rb = 16
    while rb <= hi and footprint(rb) <= budget_bytes:
        best = rb
        rb += 8
    return best


def upsample_forward(x_nchw, weight_oihw=None, bias=None, with_conv=True,
                     compute_dtype=jnp.float32, out_layout="NCHW"):
    """Equivalent of Upsample.forward: nearest-2x upsample (+ 3x3 'same' conv)."""
    assert out_layout in ("NCHW", "NHWC")
    N, C, H, W = x_nchw.shape

    if not with_conv:
        # Pure nearest upsample: memcpy-with-duplication, HBM-bandwidth bound;
        # emit as a plain XLA broadcast/reshape.
        up = jnp.broadcast_to(x_nchw[:, :, :, None, :, None],
                              (N, C, H, 2, W, 2)).reshape(N, C, 2 * H, 2 * W)
        return jnp.transpose(up, (0, 2, 3, 1)) if out_layout == "NHWC" else up

    cdt = jnp.dtype(compute_dtype)
    sub = 16 if cdt.itemsize < 4 else 8          # sublane multiple (review #10)
    Wpad = _round_up(W, sub)
    Wp = Wpad + 2                                # +1 zero column on each side
    RB = _pick_row_block(H, Wp, Wpad, C, cdt.itemsize)
    Hpad = _round_up(max(H, 1), RB)              # H need not divide RB (#13)
    pack = (C % 128 == 0)                        # tap packing (review #1)

    # NCHW -> NHWC, cast for the MXU, and fold all zero padding (conv 'same'
    # column padding + sublane/row-block padding) into one pad.
    x = jnp.transpose(x_nchw, (0, 2, 3, 1)).astype(compute_dtype)
    x = jnp.pad(x, ((0, 0), (0, Hpad - H), (1, Wp - 1 - W), (0, 0)))

    e = _subpixel_weights(weight_oihw).astype(compute_dtype)   # (4, 4, C, C)
    b2 = bias.reshape(1, C).astype(jnp.float32)

    # Weights/bias never change across the grid; skip double-buffering them
    # when large enough to matter (review #7; v7x has only 64 MiB VMEM).
    w_kwargs = {}
    if 16 * C * C * cdt.itemsize > (4 << 20):
        w_kwargs = dict(pipeline_mode=pl.Buffered(1))
    # TODO(synk): for very large C (>=1024) also tile Cout over a third
    # "parallel" grid axis so the weight block stays bounded (review #6).

    grid = (N, Hpad // RB)
    out = pl.pallas_call(
        functools.partial(_upsample_conv_kernel, pack=pack),
        out_shape=jax.ShapeDtypeStruct((N, 4, Hpad, Wpad, C), jnp.float32),
        grid_spec=pltpu.PrefetchScalarGridSpec(
            num_scalar_prefetch=0,
            grid=grid,
            in_specs=[
                # main RB-row block of (column-padded) source rows
                pl.BlockSpec((None, RB, Wp, C), lambda n, hb: (n, hb, 0, 0)),
                # 1-row halo above (row i0-1, clamped; zeroed in-kernel at top)
                pl.BlockSpec((None, 1, Wp, C),
                             lambda n, hb: (n, jnp.maximum(hb * RB - 1, 0), 0, 0)),
                # 1-row halo below (row i0+RB, clamped; zeroed at bottom)
                pl.BlockSpec((None, 1, Wp, C),
                             lambda n, hb: (n, jnp.minimum((hb + 1) * RB, Hpad - 1),
                                            0, 0)),
                # folded sub-pixel weights + bias: same block every step
                pl.BlockSpec((4, 4, C, C), lambda n, hb: (0, 0, 0, 0), **w_kwargs),
                pl.BlockSpec((1, C), lambda n, hb: (0, 0)),
            ],
            out_specs=pl.BlockSpec((None, 4, RB, Wpad, C),
                                   lambda n, hb: (n, 0, hb, 0, 0)),
            scratch_shapes=[pltpu.VMEM((RB + 2, Wp, C), compute_dtype)],
        ),
        compiler_params=pltpu.CompilerParams(
            # No cross-step accumulator -> both axes parallel (v7x's 2 TCs).
            dimension_semantics=("parallel", "parallel"),
            vmem_limit_bytes=_VMEM_LIMIT),
    )(x, x, x, e, b2)

    # (N, 4 = pr*2+pc, Hpad, Wpad, C) -> crop padding -> interleave parities.
    out = out.reshape(N, 2, 2, Hpad, Wpad, C)[:, :, :, :H, :W, :]
    if out_layout == "NHWC":
        out = jnp.transpose(out, (0, 3, 1, 4, 2, 5))      # (N, H, pr, W, pc, C)
        return out.reshape(N, 2 * H, 2 * W, C)
    out = jnp.transpose(out, (0, 5, 3, 1, 4, 2))          # (N, C, H, pr, W, pc)
    return out.reshape(N, C, 2 * H, 2 * W)


def _reference(x_nchw, weight_oihw, bias, with_conv=True):
    up = jnp.repeat(jnp.repeat(x_nchw, 2, axis=2), 2, axis=3)
    if not with_conv:
        return up
    y = lax.conv_general_dilated(
        up, weight_oihw, window_strides=(1, 1), padding=((1, 1), (1, 1)),
        dimension_numbers=("NCHW", "OIHW", "NCHW"),
        precision=lax.Precision.HIGHEST)
    return y + bias[None, :, None, None]


if __name__ == "__main__":
    key = jax.random.PRNGKey(0)
    kx, kw, kb = jax.random.split(key, 3)

    N, C, H, W = 2, 4, 16, 16
    x = jax.random.normal(kx, (N, C, H, W), dtype=jnp.float32)
    # Shapes from nn.Conv2d(C, C, kernel_size=3, stride=1, padding=1).
    weight = 0.1 * jax.random.normal(kw, (C, C, 3, 3), dtype=jnp.float32)
    bias = 0.1 * jax.random.normal(kb, (C,), dtype=jnp.float32)

    # with_conv=True, f32 compute (matches the PyTorch module's numerics).
    out = jax.block_until_ready(upsample_forward(x, weight, bias, with_conv=True))
    ref = _reference(x, weight, bias, with_conv=True)
    assert out.shape == (N, C, 2 * H, 2 * W), out.shape
    assert jnp.allclose(out, ref, rtol=1e-4, atol=1e-4), float(
        jnp.max(jnp.abs(out - ref)))

    # Ragged H/W exercises the pad-and-crop path (H not a multiple of RB).
    x2 = jax.random.normal(kx, (1, C, 10, 12), dtype=jnp.float32)
    out2 = jax.block_until_ready(upsample_forward(x2, weight, bias))
    ref2 = _reference(x2, weight, bias)
    assert out2.shape == (1, C, 20, 24), out2.shape
    assert jnp.allclose(out2, ref2, rtol=1e-4, atol=1e-4), float(
        jnp.max(jnp.abs(out2 - ref2)))

    # NHWC output layout (skips the post-kernel NCHW transpose pass).
    out_nhwc = jax.block_until_ready(
        upsample_forward(x, weight, bias, out_layout="NHWC"))
    assert jnp.allclose(out_nhwc, jnp.transpose(ref, (0, 2, 3, 1)),
                        rtol=1e-4, atol=1e-4)

    # Optional bf16 MXU operands (f32 accumulation) -- looser tolerance.
    out_bf16 = jax.block_until_ready(
        upsample_forward(x, weight, bias, compute_dtype=jnp.bfloat16))
    assert jnp.allclose(out_bf16, ref, rtol=1e-1, atol=1e-1), float(
        jnp.max(jnp.abs(out_bf16 - ref)))

    # with_conv=False fast path (pure nearest upsample).
    out_nc = jax.block_until_ready(upsample_forward(x, with_conv=False))
    assert jnp.allclose(out_nc, _reference(x, None, None, with_conv=False))

    print("KERNEL_OK")
</pallas_src>

<mosaic_0001>
module attributes {stable_mosaic.version = 11 : i64} {
  func.func @_upsample_conv_kernel(%arg0: i32, %arg1: i32, %arg2: memref<1x16x18x4xf32, #tpu.memory_space<vmem>>, %arg3: memref<1x1x18x4xf32, #tpu.memory_space<vmem>>, %arg4: memref<1x1x18x4xf32, #tpu.memory_space<vmem>>, %arg5: memref<4x4x4x4xf32, #tpu.memory_space<vmem>>, %arg6: memref<1x4xf32, #tpu.memory_space<vmem>>, %arg7: memref<1x4x16x16x4xf32, #tpu.memory_space<vmem>>, %arg8: memref<18x18x4xf32, #tpu.memory_space<vmem>>) attributes {dimension_semantics = [#tpu.dimension_semantics<parallel>, #tpu.dimension_semantics<parallel>], iteration_bounds = array<i64: 2, 1>, scalar_prefetch = 0 : i64, scratch_operands = 1 : i64, tpu.core_type = #tpu.core_type<tc>, window_params = [{transform_indices = @transform_0, window_bounds = array<i64: 1, 16, 18, 4>}, {transform_indices = @transform_1, window_bounds = array<i64: 1, 1, 18, 4>}, {transform_indices = @transform_2, window_bounds = array<i64: 1, 1, 18, 4>}, {pipeline_mode = #tpu.pipeline_mode<synchronous>, transform_indices = @transform_3, window_bounds = array<i64: 4, 4, 4, 4>}, {pipeline_mode = #tpu.pipeline_mode<synchronous>, transform_indices = @transform_4, window_bounds = array<i64: 1, 4>}, {transform_indices = @transform_5, window_bounds = array<i64: 1, 4, 16, 16, 4>}]} {
    %c0_i32 = arith.constant 0 : i32
    %0 = arith.cmpi sgt, %arg1, %c0_i32 : i32
    %cst = arith.constant 1.000000e+00 : f32
    %cst_0 = arith.constant 0.000000e+00 : f32
    %1 = arith.select %0, %cst, %cst_0 : f32
    %c0_i32_1 = arith.constant 0 : i32
    %2 = arith.cmpi slt, %arg1, %c0_i32_1 : i32
    %cst_2 = arith.constant 1.000000e+00 : f32
    %cst_3 = arith.constant 0.000000e+00 : f32
    %3 = arith.select %2, %cst_2, %cst_3 : f32
    %c0 = arith.constant 0 : index
    %c0_4 = arith.constant 0 : index
    %c0_5 = arith.constant 0 : index
    %c0_6 = arith.constant 0 : index
    %4 = vector.load %arg3[%c0, %c0_4, %c0_5, %c0_6] : memref<1x1x18x4xf32, #tpu.memory_space<vmem>>, vector<1x1x18x4xf32>
    %5 = vector.shape_cast %4 : vector<1x1x18x4xf32> to vector<18x4xf32>
    %6 = vector.broadcast %1 : f32 to vector<18x4xf32>
    %7 = arith.mulf %5, %6 : vector<18x4xf32>
    %c0_7 = arith.constant 0 : index
    %c0_8 = arith.constant 0 : index
    %c0_9 = arith.constant 0 : index
    %8 = vector.load %arg8[%c0_7, %c0_8, %c0_9] : memref<18x18x4xf32, #tpu.memory_space<vmem>>, vector<1x18x4xf32>
    %9 = vector.shape_cast %8 : vector<1x18x4xf32> to vector<18x4xf32>
    %10 = vector.shape_cast %7 : vector<18x4xf32> to vector<1x18x4xf32>
    tpu.vector_store %arg8[%c0_7, %c0_8, %c0_9], %10 {strides = array<i32>} : memref<18x18x4xf32, #tpu.memory_space<vmem>>, vector<1x18x4xf32>,
    %c0_10 = arith.constant 0 : index
    %c0_11 = arith.constant 0 : index
    %c0_12 = arith.constant 0 : index
    %c0_13 = arith.constant 0 : index
    %11 = vector.load %arg2[%c0_10, %c0_11, %c0_12, %c0_13] : memref<1x16x18x4xf32, #tpu.memory_space<vmem>>, vector<1x16x18x4xf32>
    %12 = vector.shape_cast %11 : vector<1x16x18x4xf32> to vector<16x18x4xf32>
    %c1 = arith.constant 1 : index
    %c0_14 = arith.constant 0 : index
    %c0_15 = arith.constant 0 : index
    %13 = vector.load %arg8[%c1, %c0_14, %c0_15] : memref<18x18x4xf32, #tpu.memory_space<vmem>>, vector<16x18x4xf32>
    tpu.vector_store %arg8[%c1, %c0_14, %c0_15], %12 {strides = array<i32>} : memref<18x18x4xf32, #tpu.memory_space<vmem>>, vector<16x18x4xf32>,
    %c0_16 = arith.constant 0 : index
    %c0_17 = arith.constant 0 : index
    %c0_18 = arith.constant 0 : index
    %c0_19 = arith.constant 0 : index
    %14 = vector.load %arg4[%c0_16, %c0_17, %c0_18, %c0_19] : memref<1x1x18x4xf32, #tpu.memory_space<vmem>>, vector<1x1x18x4xf32>
    %15 = vector.shape_cast %14 : vector<1x1x18x4xf32> to vector<18x4xf32>
    %16 = vector.broadcast %3 : f32 to vector<18x4xf32>
    %17 = arith.mulf %15, %16 : vector<18x4xf32>
    %c17 = arith.constant 17 : index
    %c0_20 = arith.constant 0 : index
    %c0_21 = arith.constant 0 : index
    %18 = vector.load %arg8[%c17, %c0_20, %c0_21] : memref<18x18x4xf32, #tpu.memory_space<vmem>>, vector<1x18x4xf32>
    %19 = vector.shape_cast %18 : vector<1x18x4xf32> to vector<18x4xf32>
    %20 = vector.shape_cast %17 : vector<18x4xf32> to vector<1x18x4xf32>
    tpu.vector_store %arg8[%c17, %c0_20, %c0_21], %20 {strides = array<i32>} : memref<18x18x4xf32, #tpu.memory_space<vmem>>, vector<1x18x4xf32>,
    %c0_22 = arith.constant 0 : index
    %c0_23 = arith.constant 0 : index
    %21 = vector.load %arg6[%c0_22, %c0_23] : memref<1x4xf32, #tpu.memory_space<vmem>>, vector<1x4xf32>
    %c0_24 = arith.constant 0 : index
    %c0_25 = arith.constant 0 : index
    %c0_26 = arith.constant 0 : index
    %22 = vector.load %arg8[%c0_24, %c0_25, %c0_26] : memref<18x18x4xf32, #tpu.memory_space<vmem>>, vector<16x16x4xf32>
    %c0_27 = arith.constant 0 : index
    %c1_28 = arith.constant 1 : index
    %c0_29 = arith.constant 0 : index
    %23 = vector.load %arg8[%c0_27, %c1_28, %c0_29] : memref<18x18x4xf32, #tpu.memory_space<vmem>>, vector<16x16x4xf32>
    %c1_30 = arith.constant 1 : index
    %c0_31 = arith.constant 0 : index
    %c0_32 = arith.constant 0 : index
    %24 = vector.load %arg8[%c1_30, %c0_31, %c0_32] : memref<18x18x4xf32, #tpu.memory_space<vmem>>, vector<16x16x4xf32>
    %c1_33 = arith.constant 1 : index
    %c1_34 = arith.constant 1 : index
    %c0_35 = arith.constant 0 : index
    %25 = vector.load %arg8[%c1_33, %c1_34, %c0_35] : memref<18x18x4xf32, #tpu.memory_space<vmem>>, vector<16x16x4xf32>
    %cst_36 = arith.constant 0.000000e+00 : f32
    %26 = vector.broadcast %cst_36 : f32 to vector<256x4xf32>
    %27 = vector.shape_cast %22 : vector<16x16x4xf32> to vector<256x4xf32>
    %c0_37 = arith.constant 0 : index
    %c0_38 = arith.constant 0 : index
    %c0_39 = arith.constant 0 : index
    %c0_40 = arith.constant 0 : index
    %28 = vector.load %arg5[%c0_37, %c0_38, %c0_39, %c0_40] : memref<4x4x4x4xf32, #tpu.memory_space<vmem>>, vector<1x1x4x4xf32>
    %29 = vector.shape_cast %28 : vector<1x1x4x4xf32> to vector<4x4xf32>
    %cst_41 = arith.constant dense<0.000000e+00> : vector<256x4xf32>
    %30 = tpu.matmul %27, %29, %cst_41 {dimension_numbers = #tpu.dot_dimension_numbers<[1], [0], [0], [1], [0, 0, 1, 1], [], []>} : vector<256x4xf32>, vector<4x4xf32>, vector<256x4xf32> -> vector<256x4xf32>
    %31 = arith.addf %26, %30 : vector<256x4xf32>
    %32 = vector.shape_cast %23 : vector<16x16x4xf32> to vector<256x4xf32>
    %c0_42 = arith.constant 0 : index
    %c1_43 = arith.constant 1 : index
    %c0_44 = arith.constant 0 : index
    %c0_45 = arith.constant 0 : index
    %33 = vector.load %arg5[%c0_42, %c1_43, %c0_44, %c0_45] : memref<4x4x4x4xf32, #tpu.memory_space<vmem>>, vector<1x1x4x4xf32>
    %34 = vector.shape_cast %33 : vector<1x1x4x4xf32> to vector<4x4xf32>
    %cst_46 = arith.constant dense<0.000000e+00> : vector<256x4xf32>
    %35 = tpu.matmul %32, %34, %cst_46 {dimension_numbers = #tpu.dot_dimension_numbers<[1], [0], [0], [1], [0, 0, 1, 1], [], []>} : vector<256x4xf32>, vector<4x4xf32>, vector<256x4xf32> -> vector<256x4xf32>
    %36 = arith.addf %31, %35 : vector<256x4xf32>
    %37 = vector.shape_cast %24 : vector<16x16x4xf32> to vector<256x4xf32>
    %c0_47 = arith.constant 0 : index
    %c2 = arith.constant 2 : index
    %c0_48 = arith.constant 0 : index
    %c0_49 = arith.constant 0 : index
    %38 = vector.load %arg5[%c0_47, %c2, %c0_48, %c0_49] : memref<4x4x4x4xf32, #tpu.memory_space<vmem>>, vector<1x1x4x4xf32>
    %39 = vector.shape_cast %38 : vector<1x1x4x4xf32> to vector<4x4xf32>
    %cst_50 = arith.constant dense<0.000000e+00> : vector<256x4xf32>
    %40 = tpu.matmul %37, %39, %cst_50 {dimension_numbers = #tpu.dot_dimension_numbers<[1], [0], [0], [1], [0, 0, 1, 1], [], []>} : vector<256x4xf32>, vector<4x4xf32>, vector<256x4xf32> -> vector<256x4xf32>
    %41 = arith.addf %36, %40 : vector<256x4xf32>
    %42 = vector.shape_cast %25 : vector<16x16x4xf32> to vector<256x4xf32>
    %c0_51 = arith.constant 0 : index
    %c3 = arith.constant 3 : index
    %c0_52 = arith.constant 0 : index
    %c0_53 = arith.constant 0 : index
    %43 = vector.load %arg5[%c0_51, %c3, %c0_52, %c0_53] : memref<4x4x4x4xf32, #tpu.memory_space<vmem>>, vector<1x1x4x4xf32>
    %44 = vector.shape_cast %43 : vector<1x1x4x4xf32> to vector<4x4xf32>
    %cst_54 = arith.constant dense<0.000000e+00> : vector<256x4xf32>
    %45 = tpu.matmul %42, %44, %cst_54 {dimension_numbers = #tpu.dot_dimension_numbers<[1], [0], [0], [1], [0, 0, 1, 1], [], []>} : vector<256x4xf32>, vector<4x4xf32>, vector<256x4xf32> -> vector<256x4xf32>
    %46 = arith.addf %41, %45 : vector<256x4xf32>
    %47 = vector.broadcast %21 : vector<1x4xf32> to vector<256x4xf32>
    %48 = arith.addf %46, %47 : vector<256x4xf32>
    %49 = vector.shape_cast %48 : vector<256x4xf32> to vector<16x16x4xf32>
    %c0_55 = arith.constant 0 : index
    %c0_56 = arith.constant 0 : index
    %c0_57 = arith.constant 0 : index
    %c0_58 = arith.constant 0 : index
    %c0_59 = arith.constant 0 : index
    %50 = vector.load %arg7[%c0_55, %c0_56, %c0_57, %c0_58, %c0_59] : memref<1x4x16x16x4xf32, #tpu.memory_space<vmem>>, vector<1x1x16x16x4xf32>
    %51 = vector.shape_cast %50 : vector<1x1x16x16x4xf32> to vector<16x16x4xf32>
    %52 = vector.shape_cast %49 : vector<16x16x4xf32> to vector<1x1x16x16x4xf32>
    tpu.vector_store %arg7[%c0_55, %c0_56, %c0_57, %c0_58, %c0_59], %52 {strides = array<i32>} : memref<1x4x16x16x4xf32, #tpu.memory_space<vmem>>, vector<1x1x16x16x4xf32>,
    %c0_60 = arith.constant 0 : index
    %c1_61 = arith.constant 1 : index
    %c0_62 = arith.constant 0 : index
    %53 = vector.load %arg8[%c0_60, %c1_61, %c0_62] : memref<18x18x4xf32, #tpu.memory_space<vmem>>, vector<16x16x4xf32>
    %c0_63 = arith.constant 0 : index
    %c2_64 = arith.constant 2 : index
    %c0_65 = arith.constant 0 : index
    %54 = vector.load %arg8[%c0_63, %c2_64, %c0_65] : memref<18x18x4xf32, #tpu.memory_space<vmem>>, vector<16x16x4xf32>
    %c1_66 = arith.constant 1 : index
    %c1_67 = arith.constant 1 : index
    %c0_68 = arith.constant 0 : index
    %55 = vector.load %arg8[%c1_66, %c1_67, %c0_68] : memref<18x18x4xf32, #tpu.memory_space<vmem>>, vector<16x16x4xf32>
    %c1_69 = arith.constant 1 : index
    %c2_70 = arith.constant 2 : index
    %c0_71 = arith.constant 0 : index
    %56 = vector.load %arg8[%c1_69, %c2_70, %c0_71] : memref<18x18x4xf32, #tpu.memory_space<vmem>>, vector<16x16x4xf32>
    %cst_72 = arith.constant 0.000000e+00 : f32
    %57 = vector.broadcast %cst_72 : f32 to vector<256x4xf32>
    %58 = vector.shape_cast %53 : vector<16x16x4xf32> to vector<256x4xf32>
    %c1_73 = arith.constant 1 : index
    %c0_74 = arith.constant 0 : index
    %c0_75 = arith.constant 0 : index
    %c0_76 = arith.constant 0 : index
    %59 = vector.load %arg5[%c1_73, %c0_74, %c0_75, %c0_76] : memref<4x4x4x4xf32, #tpu.memory_space<vmem>>, vector<1x1x4x4xf32>
    %60 = vector.shape_cast %59 : vector<1x1x4x4xf32> to vector<4x4xf32>
    %cst_77 = arith.constant dense<0.000000e+00> : vector<256x4xf32>
    %61 = tpu.matmul %58, %60, %cst_77 {dimension_numbers = #tpu.dot_dimension_numbers<[1], [0], [0], [1], [0, 0, 1, 1], [], []>} : vector<256x4xf32>, vector<4x4xf32>, vector<256x4xf32> -> vector<256x4xf32>
    %62 = arith.addf %57, %61 : vector<256x4xf32>
    %63 = vector.shape_cast %54 : vector<16x16x4xf32> to vector<256x4xf32>
    %c1_78 = arith.constant 1 : index
    %c1_79 = arith.constant 1 : index
    %c0_80 = arith.constant 0 : index
    %c0_81 = arith.constant 0 : index
    %64 = vector.load %arg5[%c1_78, %c1_79, %c0_80, %c0_81] : memref<4x4x4x4xf32, #tpu.memory_space<vmem>>, vector<1x1x4x4xf32>
    %65 = vector.shape_cast %64 : vector<1x1x4x4xf32> to vector<4x4xf32>
    %cst_82 = arith.constant dense<0.000000e+00> : vector<256x4xf32>
    %66 = tpu.matmul %63, %65, %cst_82 {dimension_numbers = #tpu.dot_dimension_numbers<[1], [0], [0], [1], [0, 0, 1, 1], [], []>} : vector<256x4xf32>, vector<4x4xf32>, vector<256x4xf32> -> vector<256x4xf32>
    %67 = arith.addf %62, %66 : vector<256x4xf32>
    %68 = vector.shape_cast %55 : vector<16x16x4xf32> to vector<256x4xf32>
    %c1_83 = arith.constant 1 : index
    %c2_84 = arith.constant 2 : index
    %c0_85 = arith.constant 0 : index
    %c0_86 = arith.constant 0 : index
    %69 = vector.load %arg5[%c1_83, %c2_84, %c0_85, %c0_86] : memref<4x4x4x4xf32, #tpu.memory_space<vmem>>, vector<1x1x4x4xf32>
    %70 = vector.shape_cast %69 : vector<1x1x4x4xf32> to vector<4x4xf32>
    %cst_87 = arith.constant dense<0.000000e+00> : vector<256x4xf32>
    %71 = tpu.matmul %68, %70, %cst_87 {dimension_numbers = #tpu.dot_dimension_numbers<[1], [0], [0], [1], [0, 0, 1, 1], [], []>} : vector<256x4xf32>, vector<4x4xf32>, vector<256x4xf32> -> vector<256x4xf32>
    %72 = arith.addf %67, %71 : vector<256x4xf32>
    %73 = vector.shape_cast %56 : vector<16x16x4xf32> to vector<256x4xf32>
    %c1_88 = arith.constant 1 : index
    %c3_89 = arith.constant 3 : index
    %c0_90 = arith.constant 0 : index
    %c0_91 = arith.constant 0 : index
    %74 = vector.load %arg5[%c1_88, %c3_89, %c0_90, %c0_91] : memref<4x4x4x4xf32, #tpu.memory_space<vmem>>, vector<1x1x4x4xf32>
    %75 = vector.shape_cast %74 : vector<1x1x4x4xf32> to vector<4x4xf32>
    %cst_92 = arith.constant dense<0.000000e+00> : vector<256x4xf32>
    %76 = tpu.matmul %73, %75, %cst_92 {dimension_numbers = #tpu.dot_dimension_numbers<[1], [0], [0], [1], [0, 0, 1, 1], [], []>} : vector<256x4xf32>, vector<4x4xf32>, vector<256x4xf32> -> vector<256x4xf32>
    %77 = arith.addf %72, %76 : vector<256x4xf32>
    %78 = vector.broadcast %21 : vector<1x4xf32> to vector<256x4xf32>
    %79 = arith.addf %77, %78 : vector<256x4xf32>
    %80 = vector.shape_cast %79 : vector<256x4xf32> to vector<16x16x4xf32>
    %c0_93 = arith.constant 0 : index
    %c1_94 = arith.constant 1 : index
    %c0_95 = arith.constant 0 : index
    %c0_96 = arith.constant 0 : index
    %c0_97 = arith.constant 0 : index
    %81 = vector.load %arg7[%c0_93, %c1_94, %c0_95, %c0_96, %c0_97] : memref<1x4x16x16x4xf32, #tpu.memory_space<vmem>>, vector<1x1x16x16x4xf32>
    %82 = vector.shape_cast %81 : vector<1x1x16x16x4xf32> to vector<16x16x4xf32>
    %83 = vector.shape_cast %80 : vector<16x16x4xf32> to vector<1x1x16x16x4xf32>
    tpu.vector_store %arg7[%c0_93, %c1_94, %c0_95, %c0_96, %c0_97], %83 {strides = array<i32>} : memref<1x4x16x16x4xf32, #tpu.memory_space<vmem>>, vector<1x1x16x16x4xf32>,
    %c1_98 = arith.constant 1 : index
    %c0_99 = arith.constant 0 : index
    %c0_100 = arith.constant 0 : index
    %84 = vector.load %arg8[%c1_98, %c0_99, %c0_100] : memref<18x18x4xf32, #tpu.memory_space<vmem>>, vector<16x16x4xf32>
    %c1_101 = arith.constant 1 : index
    %c1_102 = arith.constant 1 : index
    %c0_103 = arith.constant 0 : index
    %85 = vector.load %arg8[%c1_101, %c1_102, %c0_103] : memref<18x18x4xf32, #tpu.memory_space<vmem>>, vector<16x16x4xf32>
    %c2_104 = arith.constant 2 : index
    %c0_105 = arith.constant 0 : index
    %c0_106 = arith.constant 0 : index
    %86 = vector.load %arg8[%c2_104, %c0_105, %c0_106] : memref<18x18x4xf32, #tpu.memory_space<vmem>>, vector<16x16x4xf32>
    %c2_107 = arith.constant 2 : index
    %c1_108 = arith.constant 1 : index
    %c0_109 = arith.constant 0 : index
    %87 = vector.load %arg8[%c2_107, %c1_108, %c0_109] : memref<18x18x4xf32, #tpu.memory_space<vmem>>, vector<16x16x4xf32>
    %cst_110 = arith.constant 0.000000e+00 : f32
    %88 = vector.broadcast %cst_110 : f32 to vector<256x4xf32>
    %89 = vector.shape_cast %84 : vector<16x16x4xf32> to vector<256x4xf32>
    %c2_111 = arith.constant 2 : index
    %c0_112 = arith.constant 0 : index
    %c0_113 = arith.constant 0 : index
    %c0_114 = arith.constant 0 : index
    %90 = vector.load %arg5[%c2_111, %c0_112, %c0_113, %c0_114] : memref<4x4x4x4xf32, #tpu.memory_space<vmem>>, vector<1x1x4x4xf32>
    %91 = vector.shape_cast %90 : vector<1x1x4x4xf32> to vector<4x4xf32>
    %cst_115 = arith.constant dense<0.000000e+00> : vector<256x4xf32>
    %92 = tpu.matmul %89, %91, %cst_115 {dimension_numbers = #tpu.dot_dimension_numbers<[1], [0], [0], [1], [0, 0, 1, 1], [], []>} : vector<256x4xf32>, vector<4x4xf32>, vector<256x4xf32> -> vector<256x4xf32>
    %93 = arith.addf %88, %92 : vector<256x4xf32>
    %94 = vector.shape_cast %85 : vector<16x16x4xf32> to vector<256x4xf32>
    %c2_116 = arith.constant 2 : index
    %c1_117 = arith.constant 1 : index
    %c0_118 = arith.constant 0 : index
    %c0_119 = arith.constant 0 : index
    %95 = vector.load %arg5[%c2_116, %c1_117, %c0_118, %c0_119] : memref<4x4x4x4xf32, #tpu.memory_space<vmem>>, vector<1x1x4x4xf32>
    %96 = vector.shape_cast %95 : vector<1x1x4x4xf32> to vector<4x4xf32>
    %cst_120 = arith.constant dense<0.000000e+00> : vector<256x4xf32>
    %97 = tpu.matmul %94, %96, %cst_120 {dimension_numbers = #tpu.dot_dimension_numbers<[1], [0], [0], [1], [0, 0, 1, 1], [], []>} : vector<256x4xf32>, vector<4x4xf32>, vector<256x4xf32> -> vector<256x4xf32>
    %98 = arith.addf %93, %97 : vector<256x4xf32>
    %99 = vector.shape_cast %86 : vector<16x16x4xf32> to vector<256x4xf32>
    %c2_121 = arith.constant 2 : index
    %c2_122 = arith.constant 2 : index
    %c0_123 = arith.constant 0 : index
    %c0_124 = arith.constant 0 : index
    %100 = vector.load %arg5[%c2_121, %c2_122, %c0_123, %c0_124] : memref<4x4x4x4xf32, #tpu.memory_space<vmem>>, vector<1x1x4x4xf32>
    %101 = vector.shape_cast %100 : vector<1x1x4x4xf32> to vector<4x4xf32>
    %cst_125 = arith.constant dense<0.000000e+00> : vector<256x4xf32>
    %102 = tpu.matmul %99, %101, %cst_125 {dimension_numbers = #tpu.dot_dimension_numbers<[1], [0], [0], [1], [0, 0, 1, 1], [], []>} : vector<256x4xf32>, vector<4x4xf32>, vector<256x4xf32> -> vector<256x4xf32>
    %103 = arith.addf %98, %102 : vector<256x4xf32>
    %104 = vector.shape_cast %87 : vector<16x16x4xf32> to vector<256x4xf32>
    %c2_126 = arith.constant 2 : index
    %c3_127 = arith.constant 3 : index
    %c0_128 = arith.constant 0 : index
    %c0_129 = arith.constant 0 : index
    %105 = vector.load %arg5[%c2_126, %c3_127, %c0_128, %c0_129] : memref<4x4x4x4xf32, #tpu.memory_space<vmem>>, vector<1x1x4x4xf32>
    %106 = vector.shape_cast %105 : vector<1x1x4x4xf32> to vector<4x4xf32>
    %cst_130 = arith.constant dense<0.000000e+00> : vector<256x4xf32>
    %107 = tpu.matmul %104, %106, %cst_130 {dimension_numbers = #tpu.dot_dimension_numbers<[1], [0], [0], [1], [0, 0, 1, 1], [], []>} : vector<256x4xf32>, vector<4x4xf32>, vector<256x4xf32> -> vector<256x4xf32>
    %108 = arith.addf %103, %107 : vector<256x4xf32>
    %109 = vector.broadcast %21 : vector<1x4xf32> to vector<256x4xf32>
    %110 = arith.addf %108, %109 : vector<256x4xf32>
    %111 = vector.shape_cast %110 : vector<256x4xf32> to vector<16x16x4xf32>
    %c0_131 = arith.constant 0 : index
    %c2_132 = arith.constant 2 : index
    %c0_133 = arith.constant 0 : index
    %c0_134 = arith.constant 0 : index
    %c0_135 = arith.constant 0 : index
    %112 = vector.load %arg7[%c0_131, %c2_132, %c0_133, %c0_134, %c0_135] : memref<1x4x16x16x4xf32, #tpu.memory_space<vmem>>, vector<1x1x16x16x4xf32>
    %113 = vector.shape_cast %112 : vector<1x1x16x16x4xf32> to vector<16x16x4xf32>
    %114 = vector.shape_cast %111 : vector<16x16x4xf32> to vector<1x1x16x16x4xf32>
    tpu.vector_store %arg7[%c0_131, %c2_132, %c0_133, %c0_134, %c0_135], %114 {strides = array<i32>} : memref<1x4x16x16x4xf32, #tpu.memory_space<vmem>>, vector<1x1x16x16x4xf32>,
    %c1_136 = arith.constant 1 : index
    %c1_137 = arith.constant 1 : index
    %c0_138 = arith.constant 0 : index
    %115 = vector.load %arg8[%c1_136, %c1_137, %c0_138] : memref<18x18x4xf32, #tpu.memory_space<vmem>>, vector<16x16x4xf32>
    %c1_139 = arith.constant 1 : index
    %c2_140 = arith.constant 2 : index
    %c0_141 = arith.constant 0 : index
    %116 = vector.load %arg8[%c1_139, %c2_140, %c0_141] : memref<18x18x4xf32, #tpu.memory_space<vmem>>, vector<16x16x4xf32>
    %c2_142 = arith.constant 2 : index
    %c1_143 = arith.constant 1 : index
    %c0_144 = arith.constant 0 : index
    %117 = vector.load %arg8[%c2_142, %c1_143, %c0_144] : memref<18x18x4xf32, #tpu.memory_space<vmem>>, vector<16x16x4xf32>
    %c2_145 = arith.constant 2 : index
    %c2_146 = arith.constant 2 : index
    %c0_147 = arith.constant 0 : index
    %118 = vector.load %arg8[%c2_145, %c2_146, %c0_147] : memref<18x18x4xf32, #tpu.memory_space<vmem>>, vector<16x16x4xf32>
    %cst_148 = arith.constant 0.000000e+00 : f32
    %119 = vector.broadcast %cst_148 : f32 to vector<256x4xf32>
    %120 = vector.shape_cast %115 : vector<16x16x4xf32> to vector<256x4xf32>
    %c3_149 = arith.constant 3 : index
    %c0_150 = arith.constant 0 : index
    %c0_151 = arith.constant 0 : index
    %c0_152 = arith.constant 0 : index
    %121 = vector.load %arg5[%c3_149, %c0_150, %c0_151, %c0_152] : memref<4x4x4x4xf32, #tpu.memory_space<vmem>>, vector<1x1x4x4xf32>
    %122 = vector.shape_cast %121 : vector<1x1x4x4xf32> to vector<4x4xf32>
    %cst_153 = arith.constant dense<0.000000e+00> : vector<256x4xf32>
    %123 = tpu.matmul %120, %122, %cst_153 {dimension_numbers = #tpu.dot_dimension_numbers<[1], [0], [0], [1], [0, 0, 1, 1], [], []>} : vector<256x4xf32>, vector<4x4xf32>, vector<256x4xf32> -> vector<256x4xf32>
    %124 = arith.addf %119, %123 : vector<256x4xf32>
    %125 = vector.shape_cast %116 : vector<16x16x4xf32> to vector<256x4xf32>
    %c3_154 = arith.constant 3 : index
    %c1_155 = arith.constant 1 : index
    %c0_156 = arith.constant 0 : index
    %c0_157 = arith.constant 0 : index
    %126 = vector.load %arg5[%c3_154, %c1_155, %c0_156, %c0_157] : memref<4x4x4x4xf32, #tpu.memory_space<vmem>>, vector<1x1x4x4xf32>
    %127 = vector.shape_cast %126 : vector<1x1x4x4xf32> to vector<4x4xf32>
    %cst_158 = arith.constant dense<0.000000e+00> : vector<256x4xf32>
    %128 = tpu.matmul %125, %127, %cst_158 {dimension_numbers = #tpu.dot_dimension_numbers<[1], [0], [0], [1], [0, 0, 1, 1], [], []>} : vector<256x4xf32>, vector<4x4xf32>, vector<256x4xf32> -> vector<256x4xf32>
    %129 = arith.addf %124, %128 : vector<256x4xf32>
    %130 = vector.shape_cast %117 : vector<16x16x4xf32> to vector<256x4xf32>
    %c3_159 = arith.constant 3 : index
    %c2_160 = arith.constant 2 : index
    %c0_161 = arith.constant 0 : index
    %c0_162 = arith.constant 0 : index
    %131 = vector.load %arg5[%c3_159, %c2_160, %c0_161, %c0_162] : memref<4x4x4x4xf32, #tpu.memory_space<vmem>>, vector<1x1x4x4xf32>
    %132 = vector.shape_cast %131 : vector<1x1x4x4xf32> to vector<4x4xf32>
    %cst_163 = arith.constant dense<0.000000e+00> : vector<256x4xf32>
    %133 = tpu.matmul %130, %132, %cst_163 {dimension_numbers = #tpu.dot_dimension_numbers<[1], [0], [0], [1], [0, 0, 1, 1], [], []>} : vector<256x4xf32>, vector<4x4xf32>, vector<256x4xf32> -> vector<256x4xf32>
    %134 = arith.addf %129, %133 : vector<256x4xf32>
    %135 = vector.shape_cast %118 : vector<16x16x4xf32> to vector<256x4xf32>
    %c3_164 = arith.constant 3 : index
    %c3_165 = arith.constant 3 : index
    %c0_166 = arith.constant 0 : index
    %c0_167 = arith.constant 0 : index
    %136 = vector.load %arg5[%c3_164, %c3_165, %c0_166, %c0_167] : memref<4x4x4x4xf32, #tpu.memory_space<vmem>>, vector<1x1x4x4xf32>
    %137 = vector.shape_cast %136 : vector<1x1x4x4xf32> to vector<4x4xf32>
    %cst_168 = arith.constant dense<0.000000e+00> : vector<256x4xf32>
    %138 = tpu.matmul %135, %137, %cst_168 {dimension_numbers = #tpu.dot_dimension_numbers<[1], [0], [0], [1], [0, 0, 1, 1], [], []>} : vector<256x4xf32>, vector<4x4xf32>, vector<256x4xf32> -> vector<256x4xf32>
    %139 = arith.addf %134, %138 : vector<256x4xf32>
    %140 = vector.broadcast %21 : vector<1x4xf32> to vector<256x4xf32>
    %141 = arith.addf %139, %140 : vector<256x4xf32>
    %142 = vector.shape_cast %141 : vector<256x4xf32> to vector<16x16x4xf32>
    %c0_169 = arith.constant 0 : index
    %c3_170 = arith.constant 3 : index
    %c0_171 = arith.constant 0 : index
    %c0_172 = arith.constant 0 : index
    %c0_173 = arith.constant 0 : index
    %143 = vector.load %arg7[%c0_169, %c3_170, %c0_171, %c0_172, %c0_173] : memref<1x4x16x16x4xf32, #tpu.memory_space<vmem>>, vector<1x1x16x16x4xf32>
    %144 = vector.shape_cast %143 : vector<1x1x16x16x4xf32> to vector<16x16x4xf32>
    %145 = vector.shape_cast %142 : vector<16x16x4xf32> to vector<1x1x16x16x4xf32>
    tpu.vector_store %arg7[%c0_169, %c3_170, %c0_171, %c0_172, %c0_173], %145 {strides = array<i32>} : memref<1x4x16x16x4xf32, #tpu.memory_space<vmem>>, vector<1x1x16x16x4xf32>,
    return
  }
  func.func @transform_0(%arg0: i32, %arg1: i32) -> (i32, i32, i32, i32) {
    %c0_i32 = arith.constant 0 : i32
    %c0_i32_0 = arith.constant 0 : i32
    %c0_i32_1 = arith.constant 0 : i32
    return %arg0, %arg1, %c0_i32, %c0_i32_0 : i32, i32, i32, i32
  }
  func.func @transform_1(%arg0: i32, %arg1: i32) -> (i32, i32, i32, i32) {
    %c16_i32 = arith.constant 16 : i32
    %0 = arith.muli %arg1, %c16_i32 : i32
    %c1_i32 = arith.constant 1 : i32
    %1 = arith.subi %0, %c1_i32 : i32
    %c0_i32 = arith.constant 0 : i32
    %2 = arith.maxsi %1, %c0_i32 : i32
    %c0_i32_0 = arith.constant 0 : i32
    %c0_i32_1 = arith.constant 0 : i32
    %c0_i32_2 = arith.constant 0 : i32
    return %arg0, %2, %c0_i32_0, %c0_i32_1 : i32, i32, i32, i32
  }
  func.func @transform_2(%arg0: i32, %arg1: i32) -> (i32, i32, i32, i32) {
    %c1_i32 = arith.constant 1 : i32
    %0 = arith.addi %arg1, %c1_i32 : i32
    %c16_i32 = arith.constant 16 : i32
    %1 = arith.muli %0, %c16_i32 : i32
    %c15_i32 = arith.constant 15 : i32
    %2 = arith.minsi %1, %c15_i32 : i32
    %c0_i32 = arith.constant 0 : i32
    %c0_i32_0 = arith.constant 0 : i32
    %c0_i32_1 = arith.constant 0 : i32
    return %arg0, %2, %c0_i32, %c0_i32_0 : i32, i32, i32, i32
  }
  func.func @transform_3(%arg0: i32, %arg1: i32) -> (i32, i32, i32, i32) {
    %c0_i32 = arith.constant 0 : i32
    %c0_i32_0 = arith.constant 0 : i32
    %c0_i32_1 = arith.constant 0 : i32
    %c0_i32_2 = arith.constant 0 : i32
    %c0_i32_3 = arith.constant 0 : i32
    return %c0_i32, %c0_i32_0, %c0_i32_1, %c0_i32_2 : i32, i32, i32, i32
  }
  func.func @transform_4(%arg0: i32, %arg1: i32) -> (i32, i32) {
    %c0_i32 = arith.constant 0 : i32
    %c0_i32_0 = arith.constant 0 : i32
    %c0_i32_1 = arith.constant 0 : i32
    return %c0_i32, %c0_i32_0 : i32, i32
  }
  func.func @transform_5(%arg0: i32, %arg1: i32) -> (i32, i32, i32, i32, i32) {
    %c0_i32 = arith.constant 0 : i32
    %c0_i32_0 = arith.constant 0 : i32
    %c0_i32_1 = arith.constant 0 : i32
    %c0_i32_2 = arith.constant 0 : i32
    return %arg0, %c0_i32, %arg1, %c0_i32_0, %c0_i32_1 : i32, i32, i32, i32, i32
  }
}

</mosaic_0001>

<llo_original>
// kernel: tpu_custom_call.1
$region0: #{tpu_custom_call.1}
  #allocation0 [shape = 'u32[]', space=smem, size = 0x4, offset = 0x4, fixed_abs, tag = 'smem constant byte address 0x4 - core index']
  #allocation1 [shape = 'u32[72,128]{1,0:T(1,128)}', space=vmem, size = 0x9000, scoped, tag = 'internal scratch']
  #allocation2 [shape = 'f32[18,18,4]{2,1,0:T(8,128)}', space=vmem, size = 0x36000, scoped, tag = 'scratch operand']
  %s0 = inlined_call_operand.vmem [shape: f32[2,16,18,4], index: 0, kind: input, shape index: {}]
  %s1 = inlined_call_operand.vmem [shape: f32[2,16,18,4], index: 1, kind: input, shape index: {}]
  %s2 = inlined_call_operand.vmem [shape: f32[2,16,18,4], index: 2, kind: input, shape index: {}]
  %s3 = inlined_call_operand.vmem [shape: f32[4,4,4,4], index: 3, kind: input, shape index: {}]
  %s4 = inlined_call_operand.vmem [shape: f32[1,4], index: 4, kind: input, shape index: {}]
  %s5 = inlined_call_operand.vmem [shape: f32[2,4,16,16,4], index: 5, kind: output, shape index: {}]
  %s6 = sld [smem:[#allocation0]]
  $region53: #{tpu_custom_call.1} parent=0
    _
  %s8 = ssub.s32 1, %s6
  %s9 = scalar_select 0, %s8, %s6
  loop: start=0, step=1, limit=4
  $region2: #{tpu_custom_call.1} parent=0 // loop_pre_header
    _
  $region3: #{tpu_custom_call.1} parent=0 // loop_header
    %s11 = sphi 0, %s15
    %p12 = scmp.ge.s32.totalorder %s11, 4
    %s18 = sphi 0, %s30
    %s19 = sphi 0, %s26
    %s20 = sphi 0, %s18
    %s21 = sphi 0, %s19
    %s22 = sphi 0, %s20
    %s23 = sphi 0, %s21
    %s35 = sphi 0, %s37
    %s38 = sphi 0, %s35
    %s39 = sphi 0, %s38
    %s55 = sphi 0, %s39
    %s71 = sphi 0, %s73
    %s74 = sphi 0, %s71
    %s75 = sphi 0, %s74
    %s91 = sphi 0, %s75
    %s107 = sphi 0, %s109
    %s110 = sphi 0, %s107
    %s111 = sphi 0, %s110
    %s127 = sphi 0, %s111
    %s131 = sphi 0, %s131
    %s133 = sphi 0, %s131
    %s134 = sphi 0, %s133
    %s148 = sphi 0, %s134
    %s152 = sphi 0, %s152
    %s154 = sphi 0, %s152
    %s155 = sphi 0, %s154
    %s169 = sphi 0, %s155
    %s177 = sphi 0, %s179
    %s180 = sphi 0, %s177
    %s181 = sphi 0, %s180
    %s197 = sphi 0, %s181
  $region4: #{tpu_custom_call.1} parent=0 // loop_header_branch
    %14 = sbr.rel (%p12) target = $region8
  $region5: #{tpu_custom_call.1} parent=0 // loop_body
    %s16 = ssub.s32 %s11, 1
    %s17 = ssub.s32 %s11, 2
    %s24 = sadd.s32 1, %s19
    %p25 = scmp.ge.s32.totalorder %s24, 1
    %s26 = scalar_select %p25, 0, %s24
    %s27 = sadd.s32 1, %s18
    %s28 = scalar_select %p25, %s27, %s18
    %p29 = scmp.ge.s32.totalorder %s28, 2
    %s30 = scalar_select %p29, 0, %s28
    %s31 = ssub.s32 %s18, %s30
    %s32 = ssub.s32 %s19, %s26
    %s33 = sor.u32 %s31, %s32
    %p34 = scmp.eq.s32.totalorder %s33, 0
    %s36 = sadd.s32 %s35, 1
    %s37 = scalar_select %p34, %s35, %s36
    %p40 = pneg %p34
    %p41 = scmp.eq.s32.totalorder %s11, 1
    %p42 = por %p40, %p41
    %p43 = scmp.ne.s32.totalorder %s35, %s38
    %p44 = scmp.eq.s32.totalorder %s11, 0
    %p45 = por %p43, %p44
    %p46 = scmp.ne.s32.totalorder %s35, %s38
    %p47 = scmp.eq.s32.totalorder %s16, 1
    %p48 = por %p46, %p47
    %p49 = scmp.ne.s32.totalorder %s38, %s39
    %p50 = scmp.eq.s32.totalorder %s16, 0
    %p51 = por %p49, %p50
    %p52 = scmp.ne.s32.totalorder %s38, %s39
    %p53 = scmp.eq.s32.totalorder %s17, 1
    %p54 = por %p52, %p53
    %p56 = scmp.ne.s32.totalorder %s39, %s55
    %p57 = scmp.eq.s32.totalorder %s17, 0
    %p58 = por %p56, %p57
    %s59 = smul.u32 %s19, 16
    %s60 = ssub.s32 %s59, 1
    %p61 = scmp.gt.s32.totalorder %s60, 0
    %s62 = scalar_select %p61, %s60, 0
    %s63 = smul.u32 %s26, 16
    %s64 = ssub.s32 %s63, 1
    %p65 = scmp.gt.s32.totalorder %s64, 0
    %s66 = scalar_select %p65, %s64, 0
    %s67 = ssub.s32 %s18, %s30
    %s68 = ssub.s32 %s62, %s66
    %s69 = sor.u32 %s67, %s68
    %p70 = scmp.eq.s32.totalorder %s69, 0
    %s72 = sadd.s32 %s71, 1
    %s73 = scalar_select %p70, %s71, %s72
    %p76 = pneg %p70
    %p77 = scmp.eq.s32.totalorder %s11, 1
    %p78 = por %p76, %p77
    %p79 = scmp.ne.s32.totalorder %s71, %s74
    %p80 = scmp.eq.s32.totalorder %s11, 0
    %p81 = por %p79, %p80
    %p82 = scmp.ne.s32.totalorder %s71, %s74
    %p83 = scmp.eq.s32.totalorder %s16, 1
    %p84 = por %p82, %p83
    %p85 = scmp.ne.s32.totalorder %s74, %s75
    %p86 = scmp.eq.s32.totalorder %s16, 0
    %p87 = por %p85, %p86
    %p88 = scmp.ne.s32.totalorder %s74, %s75
    %p89 = scmp.eq.s32.totalorder %s17, 1
    %p90 = por %p88, %p89
    %p92 = scmp.ne.s32.totalorder %s75, %s91
    %p93 = scmp.eq.s32.totalorder %s17, 0
    %p94 = por %p92, %p93
    %s95 = sadd.s32 %s19, 1
    %s96 = smul.u32 %s95, 16
    %p97 = scmp.lt.s32.totalorder %s96, 15
    %s98 = scalar_select %p97, %s96, 15
    %s99 = sadd.s32 %s26, 1
    %s100 = smul.u32 %s99, 16
    %p101 = scmp.lt.s32.totalorder %s100, 15
    %s102 = scalar_select %p101, %s100, 15
    %s103 = ssub.s32 %s18, %s30
    %s104 = ssub.s32 %s98, %s102
    %s105 = sor.u32 %s103, %s104
    %p106 = scmp.eq.s32.totalorder %s105, 0
    %s108 = sadd.s32 %s107, 1
    %s109 = scalar_select %p106, %s107, %s108
    %p112 = pneg %p106
    %p113 = scmp.eq.s32.totalorder %s11, 1
    %p114 = por %p112, %p113
    %p115 = scmp.ne.s32.totalorder %s107, %s110
    %p116 = scmp.eq.s32.totalorder %s11, 0
    %p117 = por %p115, %p116
    %p118 = scmp.ne.s32.totalorder %s107, %s110
    %p119 = scmp.eq.s32.totalorder %s16, 1
    %p120 = por %p118, %p119
    %p121 = scmp.ne.s32.totalorder %s110, %s111
    %p122 = scmp.eq.s32.totalorder %s16, 0
    %p123 = por %p121, %p122
    %p124 = scmp.ne.s32.totalorder %s110, %s111
    %p125 = scmp.eq.s32.totalorder %s17, 1
    %p126 = por %p124, %p125
    %p128 = scmp.ne.s32.totalorder %s111, %s127
    %p129 = scmp.eq.s32.totalorder %s17, 0
    %p130 = por %p128, %p129
    %s132 = sadd.s32 %s131, 1
    %p135 = scmp.eq.s32.totalorder %s11, 1
    %p136 = scmp.ne.s32.totalorder %s131, %s133
    %p137 = scmp.eq.s32.totalorder %s11, 0
    %p138 = por %p136, %p137
    %p139 = scmp.ne.s32.totalorder %s131, %s133
    %p140 = scmp.eq.s32.totalorder %s16, 1
    %p141 = por %p139, %p140
    %p142 = scmp.ne.s32.totalorder %s133, %s134
    %p143 = scmp.eq.s32.totalorder %s16, 0
    %p144 = por %p142, %p143
    %p145 = scmp.ne.s32.totalorder %s133, %s134
    %p146 = scmp.eq.s32.totalorder %s17, 1
    %p147 = por %p145, %p146
    %p149 = scmp.ne.s32.totalorder %s134, %s148
    %p150 = scmp.eq.s32.totalorder %s17, 0
    %p151 = por %p149, %p150
    %s153 = sadd.s32 %s152, 1
    %p156 = scmp.eq.s32.totalorder %s11, 1
    %p157 = scmp.ne.s32.totalorder %s152, %s154
    %p158 = scmp.eq.s32.totalorder %s11, 0
    %p159 = por %p157, %p158
    %p160 = scmp.ne.s32.totalorder %s152, %s154
    %p161 = scmp.eq.s32.totalorder %s16, 1
    %p162 = por %p160, %p161
    %p163 = scmp.ne.s32.totalorder %s154, %s155
    %p164 = scmp.eq.s32.totalorder %s16, 0
    %p165 = por %p163, %p164
    %p166 = scmp.ne.s32.totalorder %s154, %s155
    %p167 = scmp.eq.s32.totalorder %s17, 1
    %p168 = por %p166, %p167
    %p170 = scmp.ne.s32.totalorder %s155, %s169
    %p171 = scmp.eq.s32.totalorder %s17, 0
    %p172 = por %p170, %p171
    %s173 = ssub.s32 %s18, %s30
    %s174 = ssub.s32 %s19, %s26
    %s175 = sor.u32 %s173, %s174
    %p176 = scmp.eq.s32.totalorder %s175, 0
    %s178 = sadd.s32 %s177, 1
    %s179 = scalar_select %p176, %s177, %s178
    %p182 = pneg %p176
    %p183 = scmp.eq.s32.totalorder %s11, 1
    %p184 = por %p182, %p183
    %p185 = scmp.ne.s32.totalorder %s177, %s180
    %p186 = scmp.eq.s32.totalorder %s11, 0
    %p187 = por %p185, %p186
    %p188 = scmp.ne.s32.totalorder %s177, %s180
    %p189 = scmp.eq.s32.totalorder %s16, 1
    %p190 = por %p188, %p189
    %p191 = scmp.ne.s32.totalorder %s180, %s181
    %p192 = scmp.eq.s32.totalorder %s16, 0
    %p193 = por %p191, %p192
    %p194 = scmp.ne.s32.totalorder %s180, %s181
    %p195 = scmp.eq.s32.totalorder %s17, 1
    %p196 = por %p194, %p195
    %p198 = scmp.ne.s32.totalorder %s181, %s197
    %p199 = scmp.eq.s32.totalorder %s17, 0
    %p200 = por %p198, %p199
    %p201 = scmp.le.s32.totalorder 1, %s11
    %p202 = scmp.lt.s32.totalorder %s11, 3
    %p203 = pnand %p201, %p202
    %p204 = pneg %p203
    // Predicated region
    $region9: #{tpu_custom_call.1} parent=5 // pred_check
      _
    $region10: #{tpu_custom_call.1} parent=5 // pred_check_branch
      %206 = sbr.rel (%p203) target = $region12
    $region11: #{tpu_custom_call.1} parent=5 // pred_region
      %s207 = ssub.s32 %s11, 1
      // Predicated region
      $region13: #{tpu_custom_call.1} parent=11 // pred_check
        %p208 = pneg %p144
      $region14: #{tpu_custom_call.1} parent=11 // pred_check_branch
        %210 = sbr.rel (%p208) target = $region16
      $region15: #{tpu_custom_call.1} parent=11 // pred_region
        _
      $region16: #{tpu_custom_call.1} parent=11 // pred_fallthru
        _
      // Predicated region
      $region17: #{tpu_custom_call.1} parent=11 // pred_check
        %p211 = pneg %p165
      $region18: #{tpu_custom_call.1} parent=11 // pred_check_branch
        %213 = sbr.rel (%p211) target = $region20
      $region19: #{tpu_custom_call.1} parent=11 // pred_region
        _
      $region20: #{tpu_custom_call.1} parent=11 // pred_fallthru
        _
    $region12: #{tpu_custom_call.1} parent=5 // pred_fallthru
      _
    %p214 = scmp.lt.s32.totalorder %s11, 2
    // Predicated region
    $region21: #{tpu_custom_call.1} parent=5 // pred_check
      %p215 = pneg %p214
    $region22: #{tpu_custom_call.1} parent=5 // pred_check_branch
      %217 = sbr.rel (%p215) target = $region24
    $region23: #{tpu_custom_call.1} parent=5 // pred_region
      // Predicated region
      $region25: #{tpu_custom_call.1} parent=23 // pred_check
        %p218 = pneg %p45
      $region26: #{tpu_custom_call.1} parent=23 // pred_check_branch
        %220 = sbr.rel (%p218) target = $region28
      $region27: #{tpu_custom_call.1} parent=23 // pred_region
        %s221 = smul.u32 16, %s19
        %p222 = scmp.lt.s32.totalorder %s18, 1
        %s223 = scalar_select %p222, %s18, 1
        %p224 = scmp.lt.s32.totalorder %s221, 15
        %s225 = scalar_select %p224, %s221, 15
        %s226 = smul.addr %s225, 3
        %s227 = smul.addr %s223, 48
        %s228 = sadd.s32 %s226, %s227
        %s229 = smul.addr %s228, 8
        %s230 = scalar_lea.vmem %s0, %s229
        %s231 = smul.u32 16, %s19
      $region28: #{tpu_custom_call.1} parent=23 // pred_fallthru
        _
      // Predicated region
      $region29: #{tpu_custom_call.1} parent=23 // pred_check
        %p232 = pneg %p81
      $region30: #{tpu_custom_call.1} parent=23 // pred_check_branch
        %234 = sbr.rel (%p232) target = $region32
      $region31: #{tpu_custom_call.1} parent=23 // pred_region
        %s235 = smul.u32 %s19, 16
        %s236 = ssub.s32 %s235, 1
        %p237 = scmp.gt.s32.totalorder %s236, 0
        %s238 = scalar_select %p237, %s236, 0
        %p239 = scmp.lt.s32.totalorder %s18, 1
        %s240 = scalar_select %p239, %s18, 1
        %p241 = scmp.lt.s32.totalorder %s238, 15
        %s242 = scalar_select %p241, %s238, 15
        %s243 = smul.addr %s242, 3
        %s244 = smul.addr %s240, 48
        %s245 = sadd.s32 %s243, %s244
        %s246 = smul.addr %s245, 8
        %s247 = scalar_lea.vmem %s1, %s246
        %s248 = smul.u32 %s19, 16
        %s249 = ssub.s32 %s248, 1
        %p250 = scmp.gt.s32.totalorder %s249, 0
        %s251 = scalar_select %p250, %s249, 0
      $region32: #{tpu_custom_call.1} parent=23 // pred_fallthru
        _
      // Predicated region
      $region33: #{tpu_custom_call.1} parent=23 // pred_check
        %p252 = pneg %p117
      $region34: #{tpu_custom_call.1} parent=23 // pred_check_branch
        %254 = sbr.rel (%p252) target = $region36
      $region35: #{tpu_custom_call.1} parent=23 // pred_region
        %s255 = sadd.s32 %s19, 1
        %s256 = smul.u32 %s255, 16
        %p257 = scmp.lt.s32.totalorder %s256, 15
        %s258 = scalar_select %p257, %s256, 15
        %p259 = scmp.lt.s32.totalorder %s18, 1
        %s260 = scalar_select %p259, %s18, 1
        %p261 = scmp.lt.s32.totalorder %s258, 15
        %s262 = scalar_select %p261, %s258, 15
        %s263 = smul.addr %s262, 3
        %s264 = smul.addr %s260, 48
        %s265 = sadd.s32 %s263, %s264
        %s266 = smul.addr %s265, 8
        %s267 = scalar_lea.vmem %s2, %s266
        %s268 = sadd.s32 %s19, 1
        %s269 = smul.u32 %s268, 16
        %p270 = scmp.lt.s32.totalorder %s269, 15
        %s271 = scalar_select %p270, %s269, 15
      $region36: #{tpu_custom_call.1} parent=23 // pred_fallthru
        _
    $region24: #{tpu_custom_call.1} parent=5 // pred_fallthru
      _
    %p272 = scmp.le.s32.totalorder 1, %s11
    %p273 = scmp.lt.s32.totalorder %s11, 3
    %p274 = pnand %p272, %p273
    %p275 = pneg %p274
    // Predicated region
    $region37: #{tpu_custom_call.1} parent=5 // pred_check
      _
    $region38: #{tpu_custom_call.1} parent=5 // pred_check_branch
      %277 = sbr.rel (%p274) target = $region40
    $region39: #{tpu_custom_call.1} parent=5 // pred_region
      %s278 = ssub.s32 %s11, 1
      %s279 = smul.u32 16, %s21
      %p280 = scmp.lt.s32.totalorder %s20, 1
      %s281 = scalar_select %p280, %s20, 1
      %p282 = scmp.lt.s32.totalorder %s279, 15
      %s283 = scalar_select %p282, %s279, 15
      %s284 = smul.addr %s283, 3
      %s285 = smul.addr %s281, 48
      %s286 = sadd.s32 %s284, %s285
      %s287 = smul.addr %s286, 8
      %s288 = scalar_lea.vmem %s0, %s287
      %p289 = pneg %p51
      %p290 = pneg %p48
      %s291 = smul.u32 %s21, 16
      %s292 = ssub.s32 %s291, 1
      %p293 = scmp.gt.s32.totalorder %s292, 0
      %s294 = scalar_select %p293, %s292, 0
      %p295 = scmp.lt.s32.totalorder %s20, 1
      %s296 = scalar_select %p295, %s20, 1
      %p297 = scmp.lt.s32.totalorder %s294, 15
      %s298 = scalar_select %p297, %s294, 15
      %s299 = smul.addr %s298, 3
      %s300 = smul.addr %s296, 48
      %s301 = sadd.s32 %s299, %s300
      %s302 = smul.addr %s301, 8
      %s303 = scalar_lea.vmem %s1, %s302
      %p304 = pneg %p87
      %p305 = pneg %p84
      %s306 = sadd.s32 %s21, 1
      %s307 = smul.u32 %s306, 16
      %p308 = scmp.lt.s32.totalorder %s307, 15
      %s309 = scalar_select %p308, %s307, 15
      %p310 = scmp.lt.s32.totalorder %s20, 1
      %s311 = scalar_select %p310, %s20, 1
      %p312 = scmp.lt.s32.totalorder %s309, 15
      %s313 = scalar_select %p312, %s309, 15
      %s314 = smul.addr %s313, 3
      %s315 = smul.addr %s311, 48
      %s316 = sadd.s32 %s314, %s315
      %s317 = smul.addr %s316, 8
      %s318 = scalar_lea.vmem %s2, %s317
      %p319 = pneg %p123
      %p320 = pneg %p120
      %p321 = pneg %p144
      %p322 = pneg %p141
      %p323 = pneg %p165
      %p324 = pneg %p162
      %p325 = pneg %p193
      %p326 = pneg %p190
      %s327 = smul.u32 16, %s21
      %p328 = scmp.lt.s32.totalorder %s20, 1
      %s329 = scalar_select %p328, %s20, 1
      %p330 = scmp.lt.s32.totalorder %s327, 15
      %s331 = scalar_select %p330, %s327, 15
      %s332 = smul.addr %s331, 2
      %s333 = smul.addr %s329, 128
      %s334 = sadd.s32 %s332, %s333
      %s335 = smul.addr %s334, 8
      %s336 = scalar_lea.vmem %s5, %s335
      %s337 = smul.u32 16, %s21
      %p338 = scmp.lt.s32.totalorder %s20, 1
      %s339 = scalar_select %p338, %s20, 1
      %p340 = scmp.lt.s32.totalorder %s337, 15
      %s341 = scalar_select %p340, %s337, 15
      %s342 = smul.addr %s341, 3
      %s343 = smul.addr %s339, 48
      %s344 = sadd.s32 %s342, %s343
      %s345 = smul.addr %s344, 8
      %s346 = scalar_lea.vmem %s0, %s345
      %s347 = smul.u32 16, %s21
      %s348 = smul.u32 %s21, 16
      %s349 = ssub.s32 %s348, 1
      %p350 = scmp.gt.s32.totalorder %s349, 0
      %s351 = scalar_select %p350, %s349, 0
      %p352 = scmp.lt.s32.totalorder %s20, 1
      %s353 = scalar_select %p352, %s20, 1
      %p354 = scmp.lt.s32.totalorder %s351, 15
      %s355 = scalar_select %p354, %s351, 15
      %s356 = smul.addr %s355, 3
      %s357 = smul.addr %s353, 48
      %s358 = sadd.s32 %s356, %s357
      %s359 = smul.addr %s358, 8
      %s360 = scalar_lea.vmem %s1, %s359
      %s361 = smul.u32 %s21, 16
      %s362 = ssub.s32 %s361, 1
      %p363 = scmp.gt.s32.totalorder %s362, 0
      %s364 = scalar_select %p363, %s362, 0
      %s365 = sadd.s32 %s21, 1
      %s366 = smul.u32 %s365, 16
      %p367 = scmp.lt.s32.totalorder %s366, 15
      %s368 = scalar_select %p367, %s366, 15
      %p369 = scmp.lt.s32.totalorder %s20, 1
      %s370 = scalar_select %p369, %s20, 1
      %p371 = scmp.lt.s32.totalorder %s368, 15
      %s372 = scalar_select %p371, %s368, 15
      %s373 = smul.addr %s372, 3
      %s374 = smul.addr %s370, 48
      %s375 = sadd.s32 %s373, %s374
      %s376 = smul.addr %s375, 8
      %s377 = scalar_lea.vmem %s2, %s376
      %s378 = sadd.s32 %s21, 1
      %s379 = smul.u32 %s378, 16
      %p380 = scmp.lt.s32.totalorder %s379, 15
      %s381 = scalar_select %p380, %s379, 15
      %s382 = smul.u32 16, %s21
      %p383 = scmp.lt.s32.totalorder %s20, 1
      %s384 = scalar_select %p383, %s20, 1
      %p385 = scmp.lt.s32.totalorder %s382, 15
      %s386 = scalar_select %p385, %s382, 15
      %s387 = smul.addr %s386, 2
      %s388 = smul.addr %s384, 128
      %s389 = sadd.s32 %s387, %s388
      %s390 = smul.addr %s389, 8
      %s391 = scalar_lea.vmem %s5, %s390
      %s392 = smul.u32 16, %s21
      %p393 = scmp.gt.s32.totalorder %s21, 0
      %s394 = scalar_select %p393, 1.0, 0.0
      %p395 = scmp.lt.s32.totalorder %s21, 0
      %s396 = scalar_select %p395, 1.0, 0.0
      %v397 = vld [vmem:[%s360] sm:$0xff]
      %v398 = vld [vmem:[%s360 + $0x8] sm:$0xff]
      %v399 = vld [vmem:[%s360 + $0x10] sm:$0x3]
      %v400 = vstv %s394
      %v401 = vmul.f32 %v397, %v400
      %v402 = vmul.f32 %v398, %v400
      %v403 = vmul.f32 %v399, %v400
      %vm404 = vcmask 31744
      %405 = vst.msk [vmem:[#allocation2] sm:$0xff] %vm404, %v401
      %406 = vst.msk [vmem:[#allocation2 + $0x8] sm:$0xff] %vm404, %v402
      %vm407 = vcmask 25600
      %408 = vst.msk [vmem:[#allocation2 + $0x10] sm:$0x3] %vm407, %v403
      %v409 = vld [vmem:[%s346] sm:$0xff]
      %v410 = vld [vmem:[%s346 + $0x8] sm:$0xff]
      %v411 = vld [vmem:[%s346 + $0x10] sm:$0x3]
      %v412 = vld [vmem:[%s346 + $0x18] sm:$0xff]
      %v413 = vld [vmem:[%s346 + $0x20] sm:$0xff]
      %v414 = vld [vmem:[%s346 + $0x28] sm:$0x3]
      %v415 = vld [vmem:[%s346 + $0x30] sm:$0xff]
      %v416 = vld [vmem:[%s346 + $0x38] sm:$0xff]
      %v417 = vld [vmem:[%s346 + $0x40] sm:$0x3]
      %v418 = vld [vmem:[%s346 + $0x48] sm:$0xff]
      %v419 = vld [vmem:[%s346 + $0x50] sm:$0xff]
      %v420 = vld [vmem:[%s346 + $0x58] sm:$0x3]
      %v421 = vld [vmem:[%s346 + $0x60] sm:$0xff]
      %v422 = vld [vmem:[%s346 + $0x68] sm:$0xff]
      %v423 = vld [vmem:[%s346 + $0x70] sm:$0x3]
      %v424 = vld [vmem:[%s346 + $0x78] sm:$0xff]
      %v425 = vld [vmem:[%s346 + $0x80] sm:$0xff]
      %v426 = vld [vmem:[%s346 + $0x88] sm:$0x3]
      %v427 = vld [vmem:[%s346 + $0x90] sm:$0xff]
      %v428 = vld [vmem:[%s346 + $0x98] sm:$0xff]
      %v429 = vld [vmem:[%s346 + $0xa0] sm:$0x3]
      %v430 = vld [vmem:[%s346 + $0xa8] sm:$0xff]
      %v431 = vld [vmem:[%s346 + $0xb0] sm:$0xff]
      %v432 = vld [vmem:[%s346 + $0xb8] sm:$0x3]
      %v433 = vld [vmem:[%s346 + $0xc0] sm:$0xff]
      %v434 = vld [vmem:[%s346 + $0xc8] sm:$0xff]
      %v435 = vld [vmem:[%s346 + $0xd0] sm:$0x3]
      %v436 = vld [vmem:[%s346 + $0xd8] sm:$0xff]
      %v437 = vld [vmem:[%s346 + $0xe0] sm:$0xff]
      %v438 = vld [vmem:[%s346 + $0xe8] sm:$0x3]
      %v439 = vld [vmem:[%s346 + $0xf0] sm:$0xff]
      %v440 = vld [vmem:[%s346 + $0xf8] sm:$0xff]
      %v441 = vld [vmem:[%s346 + $0x100] sm:$0x3]
      %v442 = vld [vmem:[%s346 + $0x108] sm:$0xff]
      %v443 = vld [vmem:[%s346 + $0x110] sm:$0xff]
      %v444 = vld [vmem:[%s346 + $0x118] sm:$0x3]
      %v445 = vld [vmem:[%s346 + $0x120] sm:$0xff]
      %v446 = vld [vmem:[%s346 + $0x128] sm:$0xff]
      %v447 = vld [vmem:[%s346 + $0x130] sm:$0x3]
      %v448 = vld [vmem:[%s346 + $0x138] sm:$0xff]
      %v449 = vld [vmem:[%s346 + $0x140] sm:$0xff]
      %v450 = vld [vmem:[%s346 + $0x148] sm:$0x3]
      %v451 = vld [vmem:[%s346 + $0x150] sm:$0xff]
      %v452 = vld [vmem:[%s346 + $0x158] sm:$0xff]
      %v453 = vld [vmem:[%s346 + $0x160] sm:$0x3]
      %v454 = vld [vmem:[%s346 + $0x168] sm:$0xff]
      %v455 = vld [vmem:[%s346 + $0x170] sm:$0xff]
      %v456 = vld [vmem:[%s346 + $0x178] sm:$0x3]
      %s457 = scalar_lea.vmem [#allocation2], 24
      %458 = vst.msk [vmem:[%s457] sm:$0xff] %vm404, %v409
      %459 = vst.msk [vmem:[%s457 + $0x8] sm:$0xff] %vm404, %v410
      %460 = vst.msk [vmem:[%s457 + $0x10] sm:$0x3] %vm407, %v411
      %461 = vst.msk [vmem:[%s457 + $0x18] sm:$0xff] %vm404, %v412
      %462 = vst.msk [vmem:[%s457 + $0x20] sm:$0xff] %vm404, %v413
      %463 = vst.msk [vmem:[%s457 + $0x28] sm:$0x3] %vm407, %v414
      %464 = vst.msk [vmem:[%s457 + $0x30] sm:$0xff] %vm404, %v415
      %465 = vst.msk [vmem:[%s457 + $0x38] sm:$0xff] %vm404, %v416
      %466 = vst.msk [vmem:[%s457 + $0x40] sm:$0x3] %vm407, %v417
      %467 = vst.msk [vmem:[%s457 + $0x48] sm:$0xff] %vm404, %v418
      %468 = vst.msk [vmem:[%s457 + $0x50] sm:$0xff] %vm404, %v419
      %469 = vst.msk [vmem:[%s457 + $0x58] sm:$0x3] %vm407, %v420
      %470 = vst.msk [vmem:[%s457 + $0x60] sm:$0xff] %vm404, %v421
      %471 = vst.msk [vmem:[%s457 + $0x68] sm:$0xff] %vm404, %v422
      %472 = vst.msk [vmem:[%s457 + $0x70] sm:$0x3] %vm407, %v423
      %473 = vst.msk [vmem:[%s457 + $0x78] sm:$0xff] %vm404, %v424
      %474 = vst.msk [vmem:[%s457 + $0x80] sm:$0xff] %vm404, %v425
      %475 = vst.msk [vmem:[%s457 + $0x88] sm:$0x3] %vm407, %v426
      %476 = vst.msk [vmem:[%s457 + $0x90] sm:$0xff] %vm404, %v427
      %477 = vst.msk [vmem:[%s457 + $0x98] sm:$0xff] %vm404, %v428
      %478 = vst.msk [vmem:[%s457 + $0xa0] sm:$0x3] %vm407, %v429
      %479 = vst.msk [vmem:[%s457 + $0xa8] sm:$0xff] %vm404, %v430
      %480 = vst.msk [vmem:[%s457 + $0xb0] sm:$0xff] %vm404, %v431
      %481 = vst.msk [vmem:[%s457 + $0xb8] sm:$0x3] %vm407, %v432
      %482 = vst.msk [vmem:[%s457 + $0xc0] sm:$0xff] %vm404, %v433
      %483 = vst.msk [vmem:[%s457 + $0xc8] sm:$0xff] %vm404, %v434
      %484 = vst.msk [vmem:[%s457 + $0xd0] sm:$0x3] %vm407, %v435
      %485 = vst.msk [vmem:[%s457 + $0xd8] sm:$0xff] %vm404, %v436
      %486 = vst.msk [vmem:[%s457 + $0xe0] sm:$0xff] %vm404, %v437
      %487 = vst.msk [vmem:[%s457 + $0xe8] sm:$0x3] %vm407, %v438
      %488 = vst.msk [vmem:[%s457 + $0xf0] sm:$0xff] %vm404, %v439
      %489 = vst.msk [vmem:[%s457 + $0xf8] sm:$0xff] %vm404, %v440
      %490 = vst.msk [vmem:[%s457 + $0x100] sm:$0x3] %vm407, %v441
      %491 = vst.msk [vmem:[%s457 + $0x108] sm:$0xff] %vm404, %v442
      %492 = vst.msk [vmem:[%s457 + $0x110] sm:$0xff] %vm404, %v443
      %493 = vst.msk [vmem:[%s457 + $0x118] sm:$0x3] %vm407, %v444
      %494 = vst.msk [vmem:[%s457 + $0x120] sm:$0xff] %vm404, %v445
      %495 = vst.msk [vmem:[%s457 + $0x128] sm:$0xff] %vm404, %v446
      %496 = vst.msk [vmem:[%s457 + $0x130] sm:$0x3] %vm407, %v447
      %497 = vst.msk [vmem:[%s457 + $0x138] sm:$0xff] %vm404, %v448
      %498 = vst.msk [vmem:[%s457 + $0x140] sm:$0xff] %vm404, %v449
      %499 = vst.msk [vmem:[%s457 + $0x148] sm:$0x3] %vm407, %v450
      %500 = vst.msk [vmem:[%s457 + $0x150] sm:$0xff] %vm404, %v451
      %501 = vst.msk [vmem:[%s457 + $0x158] sm:$0xff] %vm404, %v452
      %502 = vst.msk [vmem:[%s457 + $0x160] sm:$0x3] %vm407, %v453
      %503 = vst.msk [vmem:[%s457 + $0x168] sm:$0xff] %vm404, %v454
      %504 = vst.msk [vmem:[%s457 + $0x170] sm:$0xff] %vm404, %v455
      %505 = vst.msk [vmem:[%s457 + $0x178] sm:$0x3] %vm407, %v456
      %v506 = vld [vmem:[%s377] sm:$0xff]
      %v507 = vld [vmem:[%s377 + $0x8] sm:$0xff]
      %v508 = vld [vmem:[%s377 + $0x10] sm:$0x3]
      %v509 = vstv %s396
      %v510 = vmul.f32 %v506, %v509
      %v511 = vmul.f32 %v507, %v509
      %v512 = vmul.f32 %v508, %v509
      %s513 = scalar_lea.vmem [#allocation2], 408
      %514 = vst.msk [vmem:[%s513] sm:$0xff] %vm404, %v510
      %515 = vst.msk [vmem:[%s513 + $0x8] sm:$0xff] %vm404, %v511
      %516 = vst.msk [vmem:[%s513 + $0x10] sm:$0x3] %vm407, %v512
      %v517 = vld [vmem:[%s4] sm:$0x1]
      %v518 = vld [vmem:[#allocation2] sm:$0xff]
      %v519 = vld [vmem:[#allocation2 + $0x8] sm:$0xff]
      %v520 = vld [vmem:[#allocation2 + $0x18] sm:$0xff]
      %v521 = vld [vmem:[#allocation2 + $0x20] sm:$0xff]
      %v522 = vld [vmem:[#allocation2 + $0x30] sm:$0xff]
      %v523 = vld [vmem:[#allocation2 + $0x38] sm:$0xff]
      %v524 = vld [vmem:[#allocation2 + $0x48] sm:$0xff]
      %v525 = vld [vmem:[#allocation2 + $0x50] sm:$0xff]
      %v526 = vld [vmem:[#allocation2 + $0x60] sm:$0xff]
      %v527 = vld [vmem:[#allocation2 + $0x68] sm:$0xff]
      %v528 = vld [vmem:[#allocation2 + $0x78] sm:$0xff]
      %v529 = vld [vmem:[#allocation2 + $0x80] sm:$0xff]
      %v530 = vld [vmem:[#allocation2 + $0x90] sm:$0xff]
      %v531 = vld [vmem:[#allocation2 + $0x98] sm:$0xff]
      %v532 = vld [vmem:[#allocation2 + $0xa8] sm:$0xff]
      %v533 = vld [vmem:[#allocation2 + $0xb0] sm:$0xff]
      %v534 = vld [vmem:[#allocation2 + $0xc0] sm:$0xff]
      %v535 = vld [vmem:[#allocation2 + $0xc8] sm:$0xff]
      %v536 = vld [vmem:[#allocation2 + $0xd8] sm:$0xff]
      %v537 = vld [vmem:[#allocation2 + $0xe0] sm:$0xff]
      %v538 = vld [vmem:[#allocation2 + $0xf0] sm:$0xff]
      %v539 = vld [vmem:[#allocation2 + $0xf8] sm:$0xff]
      %v540 = vld [vmem:[#allocation2 + $0x108] sm:$0xff]
      %v541 = vld [vmem:[#allocation2 + $0x110] sm:$0xff]
      %v542 = vld [vmem:[#allocation2 + $0x120] sm:$0xff]
      %v543 = vld [vmem:[#allocation2 + $0x128] sm:$0xff]
      %v544 = vld [vmem:[#allocation2 + $0x138] sm:$0xff]
      %v545 = vld [vmem:[#allocation2 + $0x140] sm:$0xff]
      %v546 = vld [vmem:[#allocation2 + $0x150] sm:$0xff]
      %v547 = vld [vmem:[#allocation2 + $0x158] sm:$0xff]
      %v548 = vld [vmem:[#allocation2 + $0x168] sm:$0xff]
      %v549 = vld [vmem:[#allocation2 + $0x170] sm:$0xff]
      %v550 = vld [vmem:[#allocation2 + $0x1] sm:$0xff]
      %v551 = vld [vmem:[#allocation2 + $0x9] sm:$0xff]
      %v552 = vld [vmem:[#allocation2 + $0x19] sm:$0xff]
      %v553 = vld [vmem:[#allocation2 + $0x21] sm:$0xff]
      %v554 = vld [vmem:[#allocation2 + $0x31] sm:$0xff]
      %v555 = vld [vmem:[#allocation2 + $0x39] sm:$0xff]
      %v556 = vld [vmem:[#allocation2 + $0x49] sm:$0xff]
      %v557 = vld [vmem:[#allocation2 + $0x51] sm:$0xff]
      %v558 = vld [vmem:[#allocation2 + $0x61] sm:$0xff]
      %v559 = vld [vmem:[#allocation2 + $0x69] sm:$0xff]
      %v560 = vld [vmem:[#allocation2 + $0x79] sm:$0xff]
      %v561 = vld [vmem:[#allocation2 + $0x81] sm:$0xff]
      %v562 = vld [vmem:[#allocation2 + $0x91] sm:$0xff]
      %v563 = vld [vmem:[#allocation2 + $0x99] sm:$0xff]
      %v564 = vld [vmem:[#allocation2 + $0xa9] sm:$0xff]
      %v565 = vld [vmem:[#allocation2 + $0xb1] sm:$0xff]
      %v566 = vld [vmem:[#allocation2 + $0xc1] sm:$0xff]
      %v567 = vld [vmem:[#allocation2 + $0xc9] sm:$0xff]
      %v568 = vld [vmem:[#allocation2 + $0xd9] sm:$0xff]
      %v569 = vld [vmem:[#allocation2 + $0xe1] sm:$0xff]
      %v570 = vld [vmem:[#allocation2 + $0xf1] sm:$0xff]
      %v571 = vld [vmem:[#allocation2 + $0xf9] sm:$0xff]
      %v572 = vld [vmem:[#allocation2 + $0x109] sm:$0xff]
      %v573 = vld [vmem:[#allocation2 + $0x111] sm:$0xff]
      %v574 = vld [vmem:[#allocation2 + $0x121] sm:$0xff]
      %v575 = vld [vmem:[#allocation2 + $0x129] sm:$0xff]
      %v576 = vld [vmem:[#allocation2 + $0x139] sm:$0xff]
      %v577 = vld [vmem:[#allocation2 + $0x141] sm:$0xff]
      %v578 = vld [vmem:[#allocation2 + $0x151] sm:$0xff]
      %v579 = vld [vmem:[#allocation2 + $0x159] sm:$0xff]
      %v580 = vld [vmem:[#allocation2 + $0x169] sm:$0xff]
      %v581 = vld [vmem:[#allocation2 + $0x171] sm:$0xff]
      %v582 = vld [vmem:[%s457] sm:$0xff]
      %v583 = vld [vmem:[%s457 + $0x8] sm:$0xff]
      %v584 = vld [vmem:[%s457 + $0x18] sm:$0xff]
      %v585 = vld [vmem:[%s457 + $0x20] sm:$0xff]
      %v586 = vld [vmem:[%s457 + $0x30] sm:$0xff]
      %v587 = vld [vmem:[%s457 + $0x38] sm:$0xff]
      %v588 = vld [vmem:[%s457 + $0x48] sm:$0xff]
      %v589 = vld [vmem:[%s457 + $0x50] sm:$0xff]
      %v590 = vld [vmem:[%s457 + $0x60] sm:$0xff]
      %v591 = vld [vmem:[%s457 + $0x68] sm:$0xff]
      %v592 = vld [vmem:[%s457 + $0x78] sm:$0xff]
      %v593 = vld [vmem:[%s457 + $0x80] sm:$0xff]
      %v594 = vld [vmem:[%s457 + $0x90] sm:$0xff]
      %v595 = vld [vmem:[%s457 + $0x98] sm:$0xff]
      %v596 = vld [vmem:[%s457 + $0xa8] sm:$0xff]
      %v597 = vld [vmem:[%s457 + $0xb0] sm:$0xff]
      %v598 = vld [vmem:[%s457 + $0xc0] sm:$0xff]
      %v599 = vld [vmem:[%s457 + $0xc8] sm:$0xff]
      %v600 = vld [vmem:[%s457 + $0xd8] sm:$0xff]
      %v601 = vld [vmem:[%s457 + $0xe0] sm:$0xff]
      %v602 = vld [vmem:[%s457 + $0xf0] sm:$0xff]
      %v603 = vld [vmem:[%s457 + $0xf8] sm:$0xff]
      %v604 = vld [vmem:[%s457 + $0x108] sm:$0xff]
      %v605 = vld [vmem:[%s457 + $0x110] sm:$0xff]
      %v606 = vld [vmem:[%s457 + $0x120] sm:$0xff]
      %v607 = vld [vmem:[%s457 + $0x128] sm:$0xff]
      %v608 = vld [vmem:[%s457 + $0x138] sm:$0xff]
      %v609 = vld [vmem:[%s457 + $0x140] sm:$0xff]
      %v610 = vld [vmem:[%s457 + $0x150] sm:$0xff]
      %v611 = vld [vmem:[%s457 + $0x158] sm:$0xff]
      %v612 = vld [vmem:[%s457 + $0x168] sm:$0xff]
      %v613 = vld [vmem:[%s457 + $0x170] sm:$0xff]
      %v614 = vld [vmem:[%s457 + $0x1] sm:$0xff]
      %v615 = vld [vmem:[%s457 + $0x9] sm:$0xff]
      %v616 = vld [vmem:[%s457 + $0x19] sm:$0xff]
      %v617 = vld [vmem:[%s457 + $0x21] sm:$0xff]
      %v618 = vld [vmem:[%s457 + $0x31] sm:$0xff]
      %v619 = vld [vmem:[%s457 + $0x39] sm:$0xff]
      %v620 = vld [vmem:[%s457 + $0x49] sm:$0xff]
      %v621 = vld [vmem:[%s457 + $0x51] sm:$0xff]
      %v622 = vld [vmem:[%s457 + $0x61] sm:$0xff]
      %v623 = vld [vmem:[%s457 + $0x69] sm:$0xff]
      %v624 = vld [vmem:[%s457 + $0x79] sm:$0xff]
      %v625 = vld [vmem:[%s457 + $0x81] sm:$0xff]
      %v626 = vld [vmem:[%s457 + $0x91] sm:$0xff]
      %v627 = vld [vmem:[%s457 + $0x99] sm:$0xff]
      %v628 = vld [vmem:[%s457 + $0xa9] sm:$0xff]
      %v629 = vld [vmem:[%s457 + $0xb1] sm:$0xff]
      %v630 = vld [vmem:[%s457 + $0xc1] sm:$0xff]
      %v631 = vld [vmem:[%s457 + $0xc9] sm:$0xff]
      %v632 = vld [vmem:[%s457 + $0xd9] sm:$0xff]
      %v633 = vld [vmem:[%s457 + $0xe1] sm:$0xff]
      %v634 = vld [vmem:[%s457 + $0xf1] sm:$0xff]
      %v635 = vld [vmem:[%s457 + $0xf9] sm:$0xff]
      %v636 = vld [vmem:[%s457 + $0x109] sm:$0xff]
      %v637 = vld [vmem:[%s457 + $0x111] sm:$0xff]
      %v638 = vld [vmem:[%s457 + $0x121] sm:$0xff]
      %v639 = vld [vmem:[%s457 + $0x129] sm:$0xff]
      %v640 = vld [vmem:[%s457 + $0x139] sm:$0xff]
      %v641 = vld [vmem:[%s457 + $0x141] sm:$0xff]
      %v642 = vld [vmem:[%s457 + $0x151] sm:$0xff]
      %v643 = vld [vmem:[%s457 + $0x159] sm:$0xff]
      %v644 = vld [vmem:[%s457 + $0x169] sm:$0xff]
      %v645 = vld [vmem:[%s457 + $0x171] sm:$0xff]
      %v646 = vld [vmem:[%s3] sm:$0xf]
      %s647 = scalar_lea.vmem %s3, 4
      %v648 = vld [vmem:[%s647] sm:$0xf]
      %v650 = vsel %vm404, %v550, 0
      %v653 = vsel %vm404, %v551, 0
      %v656 = vsel %vm404, %v552, 0
      %v659 = vsel %vm404, %v553, 0
      %v662 = vsel %vm404, %v554, 0
      %v665 = vsel %vm404, %v555, 0
      %v668 = vsel %vm404, %v556, 0
      %v671 = vsel %vm404, %v557, 0
      %v674 = vsel %vm404, %v558, 0
      %v677 = vsel %vm404, %v559, 0
      %v680 = vsel %vm404, %v560, 0
      %v683 = vsel %vm404, %v561, 0
      %v686 = vsel %vm404, %v562, 0
      %v689 = vsel %vm404, %v563, 0
      %v692 = vsel %vm404, %v564, 0
      %v695 = vsel %vm404, %v565, 0
      %v698 = vsel %vm404, %v566, 0
      %v701 = vsel %vm404, %v567, 0
      %v704 = vsel %vm404, %v568, 0
      %v707 = vsel %vm404, %v569, 0
      %v710 = vsel %vm404, %v570, 0
      %v713 = vsel %vm404, %v571, 0
      %v716 = vsel %vm404, %v572, 0
      %v719 = vsel %vm404, %v573, 0
      %v722 = vsel %vm404, %v574, 0
      %v725 = vsel %vm404, %v575, 0
      %v728 = vsel %vm404, %v576, 0
      %v731 = vsel %vm404, %v577, 0
      %v734 = vsel %vm404, %v578, 0
      %v737 = vsel %vm404, %v579, 0
      %v740 = vsel %vm404, %v580, 0
      %v743 = vsel %vm404, %v581, 0
      %vm745 = vcmask 1043456
      %v747 = vsel %vm745, %v648, 0
      %749 = vmatpush.msra.mxu0 0.0
      %750 = vmatpush.msra.mxu0 0.0
      %751 = vmatpush.msra.mxu0 0.0
      %752 = vmatpush.msra.mxu0 0.0
      %753 = vmatpush.msra.mxu0 0.0
      %754 = vmatpush.msra.mxu0 0.0
      %755 = vmatpush.msra.mxu0 0.0
      %756 = vmatpush.msra.mxu0 0.0
      %757 = vmatpush.msra.mxu0 0.0
      %758 = vmatpush.msra.mxu0 0.0
      %759 = vmatpush.msra.mxu0 0.0
      %760 = vmatpush.msra.mxu0 0.0
      %761 = vmatpush.msra.mxu0 0.0
      %762 = vmatpush.msra.mxu0 0.0
      %763 = vmatpush.msra.mxu0 0.0
      %764 = vmatpush.msra.mxu0 %v747
      %765 = vmatmul.f32.gmra.mxu0 %v650
      %v766 = vpop.f32.mrf.mxu0
      %v767 = vadd.f32 0.0, %v766
      %768 = vmatmul.f32.gmra.mxu0 %v653
      %v769 = vpop.f32.mrf.mxu0
      %v770 = vadd.f32 0.0, %v769
      %771 = vmatmul.f32.gmra.mxu0 %v656
      %v772 = vpop.f32.mrf.mxu0
      %v773 = vadd.f32 0.0, %v772
      %774 = vmatmul.f32.gmra.mxu0 %v659
      %v775 = vpop.f32.mrf.mxu0
      %v776 = vadd.f32 0.0, %v775
      %777 = vmatmul.f32.gmra.mxu0 %v662
      %v778 = vpop.f32.mrf.mxu0
      %v779 = vadd.f32 0.0, %v778
      %780 = vmatmul.f32.gmra.mxu0 %v665
      %v781 = vpop.f32.mrf.mxu0
      %v782 = vadd.f32 0.0, %v781
      %783 = vmatmul.f32.gmra.mxu0 %v668
      %v784 = vpop.f32.mrf.mxu0
      %v785 = vadd.f32 0.0, %v784
      %786 = vmatmul.f32.gmra.mxu0 %v671
      %v787 = vpop.f32.mrf.mxu0
      %v788 = vadd.f32 0.0, %v787
      %789 = vmatmul.f32.gmra.mxu0 %v674
      %v790 = vpop.f32.mrf.mxu0
      %v791 = vadd.f32 0.0, %v790
      %792 = vmatmul.f32.gmra.mxu0 %v677
      %v793 = vpop.f32.mrf.mxu0
      %v794 = vadd.f32 0.0, %v793
      %795 = vmatmul.f32.gmra.mxu0 %v680
      %v796 = vpop.f32.mrf.mxu0
      %v797 = vadd.f32 0.0, %v796
      %798 = vmatmul.f32.gmra.mxu0 %v683
      %v799 = vpop.f32.mrf.mxu0
      %v800 = vadd.f32 0.0, %v799
      %801 = vmatmul.f32.gmra.mxu0 %v686
      %v802 = vpop.f32.mrf.mxu0
      %v803 = vadd.f32 0.0, %v802
      %804 = vmatmul.f32.gmra.mxu0 %v689
      %v805 = vpop.f32.mrf.mxu0
      %v806 = vadd.f32 0.0, %v805
      %807 = vmatmul.f32.gmra.mxu0 %v692
      %v808 = vpop.f32.mrf.mxu0
      %v809 = vadd.f32 0.0, %v808
      %810 = vmatmul.f32.gmra.mxu0 %v695
      %v811 = vpop.f32.mrf.mxu0
      %v812 = vadd.f32 0.0, %v811
      %813 = vmatmul.f32.gmra.mxu0 %v698
      %v814 = vpop.f32.mrf.mxu0
      %v815 = vadd.f32 0.0, %v814
      %816 = vmatmul.f32.gmra.mxu0 %v701
      %v817 = vpop.f32.mrf.mxu0
      %v818 = vadd.f32 0.0, %v817
      %819 = vmatmul.f32.gmra.mxu0 %v704
      %v820 = vpop.f32.mrf.mxu0
      %v821 = vadd.f32 0.0, %v820
      %822 = vmatmul.f32.gmra.mxu0 %v707
      %v823 = vpop.f32.mrf.mxu0
      %v824 = vadd.f32 0.0, %v823
      %825 = vmatmul.f32.gmra.mxu0 %v710
      %v826 = vpop.f32.mrf.mxu0
      %v827 = vadd.f32 0.0, %v826
      %828 = vmatmul.f32.gmra.mxu0 %v713
      %v829 = vpop.f32.mrf.mxu0
      %v830 = vadd.f32 0.0, %v829
      %831 = vmatmul.f32.gmra.mxu0 %v716
      %v832 = vpop.f32.mrf.mxu0
      %v833 = vadd.f32 0.0, %v832
      %834 = vmatmul.f32.gmra.mxu0 %v719
      %v835 = vpop.f32.mrf.mxu0
      %v836 = vadd.f32 0.0, %v835
      %837 = vmatmul.f32.gmra.mxu0 %v722
      %v838 = vpop.f32.mrf.mxu0
      %v839 = vadd.f32 0.0, %v838
      %840 = vmatmul.f32.gmra.mxu0 %v725
      %v841 = vpop.f32.mrf.mxu0
      %v842 = vadd.f32 0.0, %v841
      %843 = vmatmul.f32.gmra.mxu0 %v728
      %v844 = vpop.f32.mrf.mxu0
      %v845 = vadd.f32 0.0, %v844
      %846 = vmatmul.f32.gmra.mxu0 %v731
      %v847 = vpop.f32.mrf.mxu0
      %v848 = vadd.f32 0.0, %v847
      %849 = vmatmul.f32.gmra.mxu0 %v734
      %v850 = vpop.f32.mrf.mxu0
      %v851 = vadd.f32 0.0, %v850
      %852 = vmatmul.f32.gmra.mxu0 %v737
      %v853 = vpop.f32.mrf.mxu0
      %v854 = vadd.f32 0.0, %v853
      %855 = vmatmul.f32.gmra.mxu0 %v740
      %v856 = vpop.f32.mrf.mxu0
      %v857 = vadd.f32 0.0, %v856
      %858 = vmatmul.f32.gmra.mxu0 %v743
      %v859 = vpop.f32.mrf.mxu0
      %v860 = vadd.f32 0.0, %v859
      %861 = vdwg.mxu0
      %v863 = vsel %vm404, %v518, 0
      %v866 = vsel %vm404, %v519, 0
      %v869 = vsel %vm404, %v520, 0
      %v872 = vsel %vm404, %v521, 0
      %v875 = vsel %vm404, %v522, 0
      %v878 = vsel %vm404, %v523, 0
      %v881 = vsel %vm404, %v524, 0
      %v884 = vsel %vm404, %v525, 0
      %v887 = vsel %vm404, %v526, 0
      %v890 = vsel %vm404, %v527, 0
      %v893 = vsel %vm404, %v528, 0
      %v896 = vsel %vm404, %v529, 0
      %v899 = vsel %vm404, %v530, 0
      %v902 = vsel %vm404, %v531, 0
      %v905 = vsel %vm404, %v532, 0
      %v908 = vsel %vm404, %v533, 0
      %v911 = vsel %vm404, %v534, 0
      %v914 = vsel %vm404, %v535, 0
      %v917 = vsel %vm404, %v536, 0
      %v920 = vsel %vm404, %v537, 0
      %v923 = vsel %vm404, %v538, 0
      %v926 = vsel %vm404, %v539, 0
      %v929 = vsel %vm404, %v540, 0
      %v932 = vsel %vm404, %v541, 0
      %v935 = vsel %vm404, %v542, 0
      %v938 = vsel %vm404, %v543, 0
      %v941 = vsel %vm404, %v544, 0
      %v944 = vsel %vm404, %v545, 0
      %v947 = vsel %vm404, %v546, 0
      %v950 = vsel %vm404, %v547, 0
      %v953 = vsel %vm404, %v548, 0
      %v956 = vsel %vm404, %v549, 0
      %v959 = vsel %vm745, %v646, 0
      %961 = vmatpush.msra.mxu0 0.0
      %962 = vmatpush.msra.mxu0 0.0
      %963 = vmatpush.msra.mxu0 0.0
      %964 = vmatpush.msra.mxu0 0.0
      %965 = vmatpush.msra.mxu0 0.0
      %966 = vmatpush.msra.mxu0 0.0
      %967 = vmatpush.msra.mxu0 0.0
      %968 = vmatpush.msra.mxu0 0.0
      %969 = vmatpush.msra.mxu0 0.0
      %970 = vmatpush.msra.mxu0 0.0
      %971 = vmatpush.msra.mxu0 0.0
      %972 = vmatpush.msra.mxu0 0.0
      %973 = vmatpush.msra.mxu0 0.0
      %974 = vmatpush.msra.mxu0 0.0
      %975 = vmatpush.msra.mxu0 0.0
      %976 = vmatpush.msra.mxu0 %v959
      %977 = vmatmul.f32.gmra.mxu0 %v863
      %v978 = vpop.f32.mrf.mxu0
      %v979 = vadd.f32 %v767, %v978
      %980 = vmatmul.f32.gmra.mxu0 %v866
      %v981 = vpop.f32.mrf.mxu0
      %v982 = vadd.f32 %v770, %v981
      %983 = vmatmul.f32.gmra.mxu0 %v869
      %v984 = vpop.f32.mrf.mxu0
      %v985 = vadd.f32 %v773, %v984
      %986 = vmatmul.f32.gmra.mxu0 %v872
      %v987 = vpop.f32.mrf.mxu0
      %v988 = vadd.f32 %v776, %v987
      %989 = vmatmul.f32.gmra.mxu0 %v875
      %v990 = vpop.f32.mrf.mxu0
      %v991 = vadd.f32 %v779, %v990
      %992 = vmatmul.f32.gmra.mxu0 %v878
      %v993 = vpop.f32.mrf.mxu0
      %v994 = vadd.f32 %v782, %v993
      %995 = vmatmul.f32.gmra.mxu0 %v881
      %v996 = vpop.f32.mrf.mxu0
      %v997 = vadd.f32 %v785, %v996
      %998 = vmatmul.f32.gmra.mxu0 %v884
      %v999 = vpop.f32.mrf.mxu0
      %v1000 = vadd.f32 %v788, %v999
      %1001 = vmatmul.f32.gmra.mxu0 %v887
      %v1002 = vpop.f32.mrf.mxu0
      %v1003 = vadd.f32 %v791, %v1002
      %1004 = vmatmul.f32.gmra.mxu0 %v890
      %v1005 = vpop.f32.mrf.mxu0
      %v1006 = vadd.f32 %v794, %v1005
      %1007 = vmatmul.f32.gmra.mxu0 %v893
      %v1008 = vpop.f32.mrf.mxu0
      %v1009 = vadd.f32 %v797, %v1008
      %1010 = vmatmul.f32.gmra.mxu0 %v896
      %v1011 = vpop.f32.mrf.mxu0
      %v1012 = vadd.f32 %v800, %v1011
      %1013 = vmatmul.f32.gmra.mxu0 %v899
      %v1014 = vpop.f32.mrf.mxu0
      %v1015 = vadd.f32 %v803, %v1014
      %1016 = vmatmul.f32.gmra.mxu0 %v902
      %v1017 = vpop.f32.mrf.mxu0
      %v1018 = vadd.f32 %v806, %v1017
      %1019 = vmatmul.f32.gmra.mxu0 %v905
      %v1020 = vpop.f32.mrf.mxu0
      %v1021 = vadd.f32 %v809, %v1020
      %1022 = vmatmul.f32.gmra.mxu0 %v908
      %v1023 = vpop.f32.mrf.mxu0
      %v1024 = vadd.f32 %v812, %v1023
      %1025 = vmatmul.f32.gmra.mxu0 %v911
      %v1026 = vpop.f32.mrf.mxu0
      %v1027 = vadd.f32 %v815, %v1026
      %1028 = vmatmul.f32.gmra.mxu0 %v914
      %v1029 = vpop.f32.mrf.mxu0
      %v1030 = vadd.f32 %v818, %v1029
      %1031 = vmatmul.f32.gmra.mxu0 %v917
      %v1032 = vpop.f32.mrf.mxu0
      %v1033 = vadd.f32 %v821, %v1032
      %1034 = vmatmul.f32.gmra.mxu0 %v920
      %v1035 = vpop.f32.mrf.mxu0
      %v1036 = vadd.f32 %v824, %v1035
      %1037 = vmatmul.f32.gmra.mxu0 %v923
      %v1038 = vpop.f32.mrf.mxu0
      %v1039 = vadd.f32 %v827, %v1038
      %1040 = vmatmul.f32.gmra.mxu0 %v926
      %v1041 = vpop.f32.mrf.mxu0
      %v1042 = vadd.f32 %v830, %v1041
      %1043 = vmatmul.f32.gmra.mxu0 %v929
      %v1044 = vpop.f32.mrf.mxu0
      %v1045 = vadd.f32 %v833, %v1044
      %1046 = vmatmul.f32.gmra.mxu0 %v932
      %v1047 = vpop.f32.mrf.mxu0
      %v1048 = vadd.f32 %v836, %v1047
      %1049 = vmatmul.f32.gmra.mxu0 %v935
      %v1050 = vpop.f32.mrf.mxu0
      %v1051 = vadd.f32 %v839, %v1050
      %1052 = vmatmul.f32.gmra.mxu0 %v938
      %v1053 = vpop.f32.mrf.mxu0
      %v1054 = vadd.f32 %v842, %v1053
      %1055 = vmatmul.f32.gmra.mxu0 %v941
      %v1056 = vpop.f32.mrf.mxu0
      %v1057 = vadd.f32 %v845, %v1056
      %1058 = vmatmul.f32.gmra.mxu0 %v944
      %v1059 = vpop.f32.mrf.mxu0
      %v1060 = vadd.f32 %v848, %v1059
      %1061 = vmatmul.f32.gmra.mxu0 %v947
      %v1062 = vpop.f32.mrf.mxu0
      %v1063 = vadd.f32 %v851, %v1062
      %1064 = vmatmul.f32.gmra.mxu0 %v950
      %v1065 = vpop.f32.mrf.mxu0
      %v1066 = vadd.f32 %v854, %v1065
      %1067 = vmatmul.f32.gmra.mxu0 %v953
      %v1068 = vpop.f32.mrf.mxu0
      %v1069 = vadd.f32 %v857, %v1068
      %1070 = vmatmul.f32.gmra.mxu0 %v956
      %v1071 = vpop.f32.mrf.mxu0
      %v1072 = vadd.f32 %v860, %v1071
      %1073 = vdwg.mxu0
      %s1074 = scalar_lea.vmem %s3, 8
      %v1075 = vld [vmem:[%s1074] sm:$0xf]
      %v1077 = vsel %vm404, %v582, 0
      %v1080 = vsel %vm404, %v583, 0
      %v1083 = vsel %vm404, %v584, 0
      %v1086 = vsel %vm404, %v585, 0
      %v1089 = vsel %vm404, %v586, 0
      %v1092 = vsel %vm404, %v587, 0
      %v1095 = vsel %vm404, %v588, 0
      %v1098 = vsel %vm404, %v589, 0
      %v1101 = vsel %vm404, %v590, 0
      %v1104 = vsel %vm404, %v591, 0
      %v1107 = vsel %vm404, %v592, 0
      %v1110 = vsel %vm404, %v593, 0
      %v1113 = vsel %vm404, %v594, 0
      %v1116 = vsel %vm404, %v595, 0
      %v1119 = vsel %vm404, %v596, 0
      %v1122 = vsel %vm404, %v597, 0
      %v1125 = vsel %vm404, %v598, 0
      %v1128 = vsel %vm404, %v599, 0
      %v1131 = vsel %vm404, %v600, 0
      %v1134 = vsel %vm404, %v601, 0
      %v1137 = vsel %vm404, %v602, 0
      %v1140 = vsel %vm404, %v603, 0
      %v1143 = vsel %vm404, %v604, 0
      %v1146 = vsel %vm404, %v605, 0
      %v1149 = vsel %vm404, %v606, 0
      %v1152 = vsel %vm404, %v607, 0
      %v1155 = vsel %vm404, %v608, 0
      %v1158 = vsel %vm404, %v609, 0
      %v1161 = vsel %vm404, %v610, 0
      %v1164 = vsel %vm404, %v611, 0
      %v1167 = vsel %vm404, %v612, 0
      %v1170 = vsel %vm404, %v613, 0
      %v1173 = vsel %vm745, %v1075, 0
      %1175 = vmatpush.msra.mxu0 0.0
      %1176 = vmatpush.msra.mxu0 0.0
      %1177 = vmatpush.msra.mxu0 0.0
      %1178 = vmatpush.msra.mxu0 0.0
      %1179 = vmatpush.msra.mxu0 0.0
      %1180 = vmatpush.msra.mxu0 0.0
      %1181 = vmatpush.msra.mxu0 0.0
      %1182 = vmatpush.msra.mxu0 0.0
      %1183 = vmatpush.msra.mxu0 0.0
      %1184 = vmatpush.msra.mxu0 0.0
      %1185 = vmatpush.msra.mxu0 0.0
      %1186 = vmatpush.msra.mxu0 0.0
      %1187 = vmatpush.msra.mxu0 0.0
      %1188 = vmatpush.msra.mxu0 0.0
      %1189 = vmatpush.msra.mxu0 0.0
      %1190 = vmatpush.msra.mxu0 %v1173
      %1191 = vmatmul.f32.gmra.mxu0 %v1077
      %v1192 = vpop.f32.mrf.mxu0
      %v1193 = vadd.f32 0.0, %v1192
      %1194 = vmatmul.f32.gmra.mxu0 %v1080
      %v1195 = vpop.f32.mrf.mxu0
      %v1196 = vadd.f32 0.0, %v1195
      %1197 = vmatmul.f32.gmra.mxu0 %v1083
      %v1198 = vpop.f32.mrf.mxu0
      %v1199 = vadd.f32 0.0, %v1198
      %1200 = vmatmul.f32.gmra.mxu0 %v1086
      %v1201 = vpop.f32.mrf.mxu0
      %v1202 = vadd.f32 0.0, %v1201
      %1203 = vmatmul.f32.gmra.mxu0 %v1089
      %v1204 = vpop.f32.mrf.mxu0
      %v1205 = vadd.f32 0.0, %v1204
      %1206 = vmatmul.f32.gmra.mxu0 %v1092
      %v1207 = vpop.f32.mrf.mxu0
      %v1208 = vadd.f32 0.0, %v1207
      %1209 = vmatmul.f32.gmra.mxu0 %v1095
      %v1210 = vpop.f32.mrf.mxu0
      %v1211 = vadd.f32 0.0, %v1210
      %1212 = vmatmul.f32.gmra.mxu0 %v1098
      %v1213 = vpop.f32.mrf.mxu0
      %v1214 = vadd.f32 0.0, %v1213
      %1215 = vmatmul.f32.gmra.mxu0 %v1101
      %v1216 = vpop.f32.mrf.mxu0
      %v1217 = vadd.f32 0.0, %v1216
      %1218 = vmatmul.f32.gmra.mxu0 %v1104
      %v1219 = vpop.f32.mrf.mxu0
      %v1220 = vadd.f32 0.0, %v1219
      %1221 = vmatmul.f32.gmra.mxu0 %v1107
      %v1222 = vpop.f32.mrf.mxu0
      %v1223 = vadd.f32 0.0, %v1222
      %1224 = vmatmul.f32.gmra.mxu0 %v1110
      %v1225 = vpop.f32.mrf.mxu0
      %v1226 = vadd.f32 0.0, %v1225
      %1227 = vmatmul.f32.gmra.mxu0 %v1113
      %v1228 = vpop.f32.mrf.mxu0
      %v1229 = vadd.f32 0.0, %v1228
      %1230 = vmatmul.f32.gmra.mxu0 %v1116
      %v1231 = vpop.f32.mrf.mxu0
      %v1232 = vadd.f32 0.0, %v1231
      %1233 = vmatmul.f32.gmra.mxu0 %v1119
      %v1234 = vpop.f32.mrf.mxu0
      %v1235 = vadd.f32 0.0, %v1234
      %1236 = vmatmul.f32.gmra.mxu0 %v1122
      %v1237 = vpop.f32.mrf.mxu0
      %v1238 = vadd.f32 0.0, %v1237
      %1239 = vmatmul.f32.gmra.mxu0 %v1125
      %v1240 = vpop.f32.mrf.mxu0
      %v1241 = vadd.f32 0.0, %v1240
      %1242 = vmatmul.f32.gmra.mxu0 %v1128
      %v1243 = vpop.f32.mrf.mxu0
      %v1244 = vadd.f32 0.0, %v1243
      %1245 = vmatmul.f32.gmra.mxu0 %v1131
      %v1246 = vpop.f32.mrf.mxu0
      %v1247 = vadd.f32 0.0, %v1246
      %1248 = vmatmul.f32.gmra.mxu0 %v1134
      %v1249 = vpop.f32.mrf.mxu0
      %v1250 = vadd.f32 0.0, %v1249
      %1251 = vmatmul.f32.gmra.mxu0 %v1137
      %v1252 = vpop.f32.mrf.mxu0
      %v1253 = vadd.f32 0.0, %v1252
      %1254 = vmatmul.f32.gmra.mxu0 %v1140
      %v1255 = vpop.f32.mrf.mxu0
      %v1256 = vadd.f32 0.0, %v1255
      %1257 = vmatmul.f32.gmra.mxu0 %v1143
      %v1258 = vpop.f32.mrf.mxu0
      %v1259 = vadd.f32 0.0, %v1258
      %1260 = vmatmul.f32.gmra.mxu0 %v1146
      %v1261 = vpop.f32.mrf.mxu0
      %v1262 = vadd.f32 0.0, %v1261
      %1263 = vmatmul.f32.gmra.mxu0 %v1149
      %v1264 = vpop.f32.mrf.mxu0
      %v1265 = vadd.f32 0.0, %v1264
      %1266 = vmatmul.f32.gmra.mxu0 %v1152
      %v1267 = vpop.f32.mrf.mxu0
      %v1268 = vadd.f32 0.0, %v1267
      %1269 = vmatmul.f32.gmra.mxu0 %v1155
      %v1270 = vpop.f32.mrf.mxu0
      %v1271 = vadd.f32 0.0, %v1270
      %1272 = vmatmul.f32.gmra.mxu0 %v1158
      %v1273 = vpop.f32.mrf.mxu0
      %v1274 = vadd.f32 0.0, %v1273
      %1275 = vmatmul.f32.gmra.mxu0 %v1161
      %v1276 = vpop.f32.mrf.mxu0
      %v1277 = vadd.f32 0.0, %v1276
      %1278 = vmatmul.f32.gmra.mxu0 %v1164
      %v1279 = vpop.f32.mrf.mxu0
      %v1280 = vadd.f32 0.0, %v1279
      %1281 = vmatmul.f32.gmra.mxu0 %v1167
      %v1282 = vpop.f32.mrf.mxu0
      %v1283 = vadd.f32 0.0, %v1282
      %1284 = vmatmul.f32.gmra.mxu0 %v1170
      %v1285 = vpop.f32.mrf.mxu0
      %v1286 = vadd.f32 0.0, %v1285
      %1287 = vdwg.mxu0
      %v1288 = vadd.f32 %v979, %v1193
      %v1289 = vadd.f32 %v982, %v1196
      %v1290 = vadd.f32 %v985, %v1199
      %v1291 = vadd.f32 %v988, %v1202
      %v1292 = vadd.f32 %v991, %v1205
      %v1293 = vadd.f32 %v994, %v1208
      %v1294 = vadd.f32 %v997, %v1211
      %v1295 = vadd.f32 %v1000, %v1214
      %v1296 = vadd.f32 %v1003, %v1217
      %v1297 = vadd.f32 %v1006, %v1220
      %v1298 = vadd.f32 %v1009, %v1223
      %v1299 = vadd.f32 %v1012, %v1226
      %v1300 = vadd.f32 %v1015, %v1229
      %v1301 = vadd.f32 %v1018, %v1232
      %v1302 = vadd.f32 %v1021, %v1235
      %v1303 = vadd.f32 %v1024, %v1238
      %v1304 = vadd.f32 %v1027, %v1241
      %v1305 = vadd.f32 %v1030, %v1244
      %v1306 = vadd.f32 %v1033, %v1247
      %v1307 = vadd.f32 %v1036, %v1250
      %v1308 = vadd.f32 %v1039, %v1253
      %v1309 = vadd.f32 %v1042, %v1256
      %v1310 = vadd.f32 %v1045, %v1259
      %v1311 = vadd.f32 %v1048, %v1262
      %v1312 = vadd.f32 %v1051, %v1265
      %v1313 = vadd.f32 %v1054, %v1268
      %v1314 = vadd.f32 %v1057, %v1271
      %v1315 = vadd.f32 %v1060, %v1274
      %v1316 = vadd.f32 %v1063, %v1277
      %v1317 = vadd.f32 %v1066, %v1280
      %v1318 = vadd.f32 %v1069, %v1283
      %v1319 = vadd.f32 %v1072, %v1286
      %s1320 = scalar_lea.vmem %s3, 12
      %v1321 = vld [vmem:[%s1320] sm:$0xf]
      %v1323 = vsel %vm404, %v614, 0
      %v1326 = vsel %vm404, %v615, 0
      %v1329 = vsel %vm404, %v616, 0
      %v1332 = vsel %vm404, %v617, 0
      %v1335 = vsel %vm404, %v618, 0
      %v1338 = vsel %vm404, %v619, 0
      %v1341 = vsel %vm404, %v620, 0
      %v1344 = vsel %vm404, %v621, 0
      %v1347 = vsel %vm404, %v622, 0
      %v1350 = vsel %vm404, %v623, 0
      %v1353 = vsel %vm404, %v624, 0
      %v1356 = vsel %vm404, %v625, 0
      %v1359 = vsel %vm404, %v626, 0
      %v1362 = vsel %vm404, %v627, 0
      %v1365 = vsel %vm404, %v628, 0
      %v1368 = vsel %vm404, %v629, 0
      %v1371 = vsel %vm404, %v630, 0
      %v1374 = vsel %vm404, %v631, 0
      %v1377 = vsel %vm404, %v632, 0
      %v1380 = vsel %vm404, %v633, 0
      %v1383 = vsel %vm404, %v634, 0
      %v1386 = vsel %vm404, %v635, 0
      %v1389 = vsel %vm404, %v636, 0
      %v1392 = vsel %vm404, %v637, 0
      %v1395 = vsel %vm404, %v638, 0
      %v1398 = vsel %vm404, %v639, 0
      %v1401 = vsel %vm404, %v640, 0
      %v1404 = vsel %vm404, %v641, 0
      %v1407 = vsel %vm404, %v642, 0
      %v1410 = vsel %vm404, %v643, 0
      %v1413 = vsel %vm404, %v644, 0
      %v1416 = vsel %vm404, %v645, 0
      %v1419 = vsel %vm745, %v1321, 0
      %1421 = vmatpush.msra.mxu0 0.0
      %1422 = vmatpush.msra.mxu0 0.0
      %1423 = vmatpush.msra.mxu0 0.0
      %1424 = vmatpush.msra.mxu0 0.0
      %1425 = vmatpush.msra.mxu0 0.0
      %1426 = vmatpush.msra.mxu0 0.0
      %1427 = vmatpush.msra.mxu0 0.0
      %1428 = vmatpush.msra.mxu0 0.0
      %1429 = vmatpush.msra.mxu0 0.0
      %1430 = vmatpush.msra.mxu0 0.0
      %1431 = vmatpush.msra.mxu0 0.0
      %1432 = vmatpush.msra.mxu0 0.0
      %1433 = vmatpush.msra.mxu0 0.0
      %1434 = vmatpush.msra.mxu0 0.0
      %1435 = vmatpush.msra.mxu0 0.0
      %1436 = vmatpush.msra.mxu0 %v1419
      %1437 = vmatmul.f32.gmra.mxu0 %v1323
      %v1438 = vpop.f32.mrf.mxu0
      %v1439 = vadd.f32 0.0, %v1438
      %1440 = vmatmul.f32.gmra.mxu0 %v1326
      %v1441 = vpop.f32.mrf.mxu0
      %v1442 = vadd.f32 0.0, %v1441
      %1443 = vmatmul.f32.gmra.mxu0 %v1329
      %v1444 = vpop.f32.mrf.mxu0
      %v1445 = vadd.f32 0.0, %v1444
      %1446 = vmatmul.f32.gmra.mxu0 %v1332
      %v1447 = vpop.f32.mrf.mxu0
      %v1448 = vadd.f32 0.0, %v1447
      %1449 = vmatmul.f32.gmra.mxu0 %v1335
      %v1450 = vpop.f32.mrf.mxu0
      %v1451 = vadd.f32 0.0, %v1450
      %1452 = vmatmul.f32.gmra.mxu0 %v1338
      %v1453 = vpop.f32.mrf.mxu0
      %v1454 = vadd.f32 0.0, %v1453
      %1455 = vmatmul.f32.gmra.mxu0 %v1341
      %v1456 = vpop.f32.mrf.mxu0
      %v1457 = vadd.f32 0.0, %v1456
      %1458 = vmatmul.f32.gmra.mxu0 %v1344
      %v1459 = vpop.f32.mrf.mxu0
      %v1460 = vadd.f32 0.0, %v1459
      %1461 = vmatmul.f32.gmra.mxu0 %v1347
      %v1462 = vpop.f32.mrf.mxu0
      %v1463 = vadd.f32 0.0, %v1462
      %1464 = vmatmul.f32.gmra.mxu0 %v1350
      %v1465 = vpop.f32.mrf.mxu0
      %v1466 = vadd.f32 0.0, %v1465
      %1467 = vmatmul.f32.gmra.mxu0 %v1353
      %v1468 = vpop.f32.mrf.mxu0
      %v1469 = vadd.f32 0.0, %v1468
      %1470 = vmatmul.f32.gmra.mxu0 %v1356
      %v1471 = vpop.f32.mrf.mxu0
      %v1472 = vadd.f32 0.0, %v1471
      %1473 = vmatmul.f32.gmra.mxu0 %v1359
      %v1474 = vpop.f32.mrf.mxu0
      %v1475 = vadd.f32 0.0, %v1474
      %1476 = vmatmul.f32.gmra.mxu0 %v1362
      %v1477 = vpop.f32.mrf.mxu0
      %v1478 = vadd.f32 0.0, %v1477
      %1479 = vmatmul.f32.gmra.mxu0 %v1365
      %v1480 = vpop.f32.mrf.mxu0
      %v1481 = vadd.f32 0.0, %v1480
      %1482 = vmatmul.f32.gmra.mxu0 %v1368
      %v1483 = vpop.f32.mrf.mxu0
      %v1484 = vadd.f32 0.0, %v1483
      %1485 = vmatmul.f32.gmra.mxu0 %v1371
      %v1486 = vpop.f32.mrf.mxu0
      %v1487 = vadd.f32 0.0, %v1486
      %1488 = vmatmul.f32.gmra.mxu0 %v1374
      %v1489 = vpop.f32.mrf.mxu0
      %v1490 = vadd.f32 0.0, %v1489
      %1491 = vmatmul.f32.gmra.mxu0 %v1377
      %v1492 = vpop.f32.mrf.mxu0
      %v1493 = vadd.f32 0.0, %v1492
      %1494 = vmatmul.f32.gmra.mxu0 %v1380
      %v1495 = vpop.f32.mrf.mxu0
      %v1496 = vadd.f32 0.0, %v1495
      %1497 = vmatmul.f32.gmra.mxu0 %v1383
      %v1498 = vpop.f32.mrf.mxu0
      %v1499 = vadd.f32 0.0, %v1498
      %1500 = vmatmul.f32.gmra.mxu0 %v1386
      %v1501 = vpop.f32.mrf.mxu0
      %v1502 = vadd.f32 0.0, %v1501
      %1503 = vmatmul.f32.gmra.mxu0 %v1389
      %v1504 = vpop.f32.mrf.mxu0
      %v1505 = vadd.f32 0.0, %v1504
      %1506 = vmatmul.f32.gmra.mxu0 %v1392
      %v1507 = vpop.f32.mrf.mxu0
      %v1508 = vadd.f32 0.0, %v1507
      %1509 = vmatmul.f32.gmra.mxu0 %v1395
      %v1510 = vpop.f32.mrf.mxu0
      %v1511 = vadd.f32 0.0, %v1510
      %1512 = vmatmul.f32.gmra.mxu0 %v1398
      %v1513 = vpop.f32.mrf.mxu0
      %v1514 = vadd.f32 0.0, %v1513
      %1515 = vmatmul.f32.gmra.mxu0 %v1401
      %v1516 = vpop.f32.mrf.mxu0
      %v1517 = vadd.f32 0.0, %v1516
      %1518 = vmatmul.f32.gmra.mxu0 %v1404
      %v1519 = vpop.f32.mrf.mxu0
      %v1520 = vadd.f32 0.0, %v1519
      %1521 = vmatmul.f32.gmra.mxu0 %v1407
      %v1522 = vpop.f32.mrf.mxu0
      %v1523 = vadd.f32 0.0, %v1522
      %1524 = vmatmul.f32.gmra.mxu0 %v1410
      %v1525 = vpop.f32.mrf.mxu0
      %v1526 = vadd.f32 0.0, %v1525
      %1527 = vmatmul.f32.gmra.mxu0 %v1413
      %v1528 = vpop.f32.mrf.mxu0
      %v1529 = vadd.f32 0.0, %v1528
      %1530 = vmatmul.f32.gmra.mxu0 %v1416
      %v1531 = vpop.f32.mrf.mxu0
      %v1532 = vadd.f32 0.0, %v1531
      %1533 = vdwg.mxu0
      %v1534 = vadd.f32 %v1288, %v1439
      %v1535 = vadd.f32 %v1289, %v1442
      %v1536 = vadd.f32 %v1290, %v1445
      %v1537 = vadd.f32 %v1291, %v1448
      %v1538 = vadd.f32 %v1292, %v1451
      %v1539 = vadd.f32 %v1293, %v1454
      %v1540 = vadd.f32 %v1294, %v1457
      %v1541 = vadd.f32 %v1295, %v1460
      %v1542 = vadd.f32 %v1296, %v1463
      %v1543 = vadd.f32 %v1297, %v1466
      %v1544 = vadd.f32 %v1298, %v1469
      %v1545 = vadd.f32 %v1299, %v1472
      %v1546 = vadd.f32 %v1300, %v1475
      %v1547 = vadd.f32 %v1301, %v1478
      %v1548 = vadd.f32 %v1302, %v1481
      %v1549 = vadd.f32 %v1303, %v1484
      %v1550 = vadd.f32 %v1304, %v1487
      %v1551 = vadd.f32 %v1305, %v1490
      %v1552 = vadd.f32 %v1306, %v1493
      %v1553 = vadd.f32 %v1307, %v1496
      %v1554 = vadd.f32 %v1308, %v1499
      %v1555 = vadd.f32 %v1309, %v1502
      %v1556 = vadd.f32 %v1310, %v1505
      %v1557 = vadd.f32 %v1311, %v1508
      %v1558 = vadd.f32 %v1312, %v1511
      %v1559 = vadd.f32 %v1313, %v1514
      %v1560 = vadd.f32 %v1314, %v1517
      %v1561 = vadd.f32 %v1315, %v1520
      %v1562 = vadd.f32 %v1316, %v1523
      %v1563 = vadd.f32 %v1317, %v1526
      %v1564 = vadd.f32 %v1318, %v1529
      %v1565 = vadd.f32 %v1319, %v1532
      %v1567 = vperm.slane %v517, 0
      %v1569 = vadd.f32 %v1534, %v1567
      %v1570 = vadd.f32 %v1535, %v1567
      %v1571 = vadd.f32 %v1536, %v1567
      %v1572 = vadd.f32 %v1537, %v1567
      %v1573 = vadd.f32 %v1538, %v1567
      %v1574 = vadd.f32 %v1539, %v1567
      %v1575 = vadd.f32 %v1540, %v1567
      %v1576 = vadd.f32 %v1541, %v1567
      %v1577 = vadd.f32 %v1542, %v1567
      %v1578 = vadd.f32 %v1543, %v1567
      %v1579 = vadd.f32 %v1544, %v1567
      %v1580 = vadd.f32 %v1545, %v1567
      %v1581 = vadd.f32 %v1546, %v1567
      %v1582 = vadd.f32 %v1547, %v1567
      %v1583 = vadd.f32 %v1548, %v1567
      %v1584 = vadd.f32 %v1549, %v1567
      %v1585 = vadd.f32 %v1550, %v1567
      %v1586 = vadd.f32 %v1551, %v1567
      %v1587 = vadd.f32 %v1552, %v1567
      %v1588 = vadd.f32 %v1553, %v1567
      %v1589 = vadd.f32 %v1554, %v1567
      %v1590 = vadd.f32 %v1555, %v1567
      %v1591 = vadd.f32 %v1556, %v1567
      %v1592 = vadd.f32 %v1557, %v1567
      %v1593 = vadd.f32 %v1558, %v1567
      %v1594 = vadd.f32 %v1559, %v1567
      %v1595 = vadd.f32 %v1560, %v1567
      %v1596 = vadd.f32 %v1561, %v1567
      %v1597 = vadd.f32 %v1562, %v1567
      %v1598 = vadd.f32 %v1563, %v1567
      %v1599 = vadd.f32 %v1564, %v1567
      %v1600 = vadd.f32 %v1565, %v1567
      %1601 = vst.msk [vmem:[%s391] sm:$0xff] %vm404, %v1569
      %1602 = vst.msk [vmem:[%s391 + $0x8] sm:$0xff] %vm404, %v1570
      %1603 = vst.msk [vmem:[%s391 + $0x10] sm:$0xff] %vm404, %v1571
      %1604 = vst.msk [vmem:[%s391 + $0x18] sm:$0xff] %vm404, %v1572
      %1605 = vst.msk [vmem:[%s391 + $0x20] sm:$0xff] %vm404, %v1573
      %1606 = vst.msk [vmem:[%s391 + $0x28] sm:$0xff] %vm404, %v1574
      %1607 = vst.msk [vmem:[%s391 + $0x30] sm:$0xff] %vm404, %v1575
      %1608 = vst.msk [vmem:[%s391 + $0x38] sm:$0xff] %vm404, %v1576
      %1609 = vst.msk [vmem:[%s391 + $0x40] sm:$0xff] %vm404, %v1577
      %1610 = vst.msk [vmem:[%s391 + $0x48] sm:$0xff] %vm404, %v1578
      %1611 = vst.msk [vmem:[%s391 + $0x50] sm:$0xff] %vm404, %v1579
      %1612 = vst.msk [vmem:[%s391 + $0x58] sm:$0xff] %vm404, %v1580
      %1613 = vst.msk [vmem:[%s391 + $0x60] sm:$0xff] %vm404, %v1581
      %1614 = vst.msk [vmem:[%s391 + $0x68] sm:$0xff] %vm404, %v1582
      %1615 = vst.msk [vmem:[%s391 + $0x70] sm:$0xff] %vm404, %v1583
      %1616 = vst.msk [vmem:[%s391 + $0x78] sm:$0xff] %vm404, %v1584
      %1617 = vst.msk [vmem:[%s391 + $0x80] sm:$0xff] %vm404, %v1585
      %1618 = vst.msk [vmem:[%s391 + $0x88] sm:$0xff] %vm404, %v1586
      %1619 = vst.msk [vmem:[%s391 + $0x90] sm:$0xff] %vm404, %v1587
      %1620 = vst.msk [vmem:[%s391 + $0x98] sm:$0xff] %vm404, %v1588
      %1621 = vst.msk [vmem:[%s391 + $0xa0] sm:$0xff] %vm404, %v1589
      %1622 = vst.msk [vmem:[%s391 + $0xa8] sm:$0xff] %vm404, %v1590
      %1623 = vst.msk [vmem:[%s391 + $0xb0] sm:$0xff] %vm404, %v1591
      %1624 = vst.msk [vmem:[%s391 + $0xb8] sm:$0xff] %vm404, %v1592
      %1625 = vst.msk [vmem:[%s391 + $0xc0] sm:$0xff] %vm404, %v1593
      %1626 = vst.msk [vmem:[%s391 + $0xc8] sm:$0xff] %vm404, %v1594
      %1627 = vst.msk [vmem:[%s391 + $0xd0] sm:$0xff] %vm404, %v1595
      %1628 = vst.msk [vmem:[%s391 + $0xd8] sm:$0xff] %vm404, %v1596
      %1629 = vst.msk [vmem:[%s391 + $0xe0] sm:$0xff] %vm404, %v1597
      %1630 = vst.msk [vmem:[%s391 + $0xe8] sm:$0xff] %vm404, %v1598
      %1631 = vst.msk [vmem:[%s391 + $0xf0] sm:$0xff] %vm404, %v1599
      %1632 = vst.msk [vmem:[%s391 + $0xf8] sm:$0xff] %vm404, %v1600
      %v1633 = vld [vmem:[#allocation2 + $0x1] sm:$0xff]
      %v1634 = vld [vmem:[#allocation2 + $0x9] sm:$0xff]
      %v1635 = vld [vmem:[#allocation2 + $0x19] sm:$0xff]
      %v1636 = vld [vmem:[#allocation2 + $0x21] sm:$0xff]
      %v1637 = vld [vmem:[#allocation2 + $0x31] sm:$0xff]
      %v1638 = vld [vmem:[#allocation2 + $0x39] sm:$0xff]
      %v1639 = vld [vmem:[#allocation2 + $0x49] sm:$0xff]
      %v1640 = vld [vmem:[#allocation2 + $0x51] sm:$0xff]
      %v1641 = vld [vmem:[#allocation2 + $0x61] sm:$0xff]
      %v1642 = vld [vmem:[#allocation2 + $0x69] sm:$0xff]
      %v1643 = vld [vmem:[#allocation2 + $0x79] sm:$0xff]
      %v1644 = vld [vmem:[#allocation2 + $0x81] sm:$0xff]
      %v1645 = vld [vmem:[#allocation2 + $0x91] sm:$0xff]
      %v1646 = vld [vmem:[#allocation2 + $0x99] sm:$0xff]
      %v1647 = vld [vmem:[#allocation2 + $0xa9] sm:$0xff]
      %v1648 = vld [vmem:[#allocation2 + $0xb1] sm:$0xff]
      %v1649 = vld [vmem:[#allocation2 + $0xc1] sm:$0xff]
      %v1650 = vld [vmem:[#allocation2 + $0xc9] sm:$0xff]
      %v1651 = vld [vmem:[#allocation2 + $0xd9] sm:$0xff]
      %v1652 = vld [vmem:[#allocation2 + $0xe1] sm:$0xff]
      %v1653 = vld [vmem:[#allocation2 + $0xf1] sm:$0xff]
      %v1654 = vld [vmem:[#allocation2 + $0xf9] sm:$0xff]
      %v1655 = vld [vmem:[#allocation2 + $0x109] sm:$0xff]
      %v1656 = vld [vmem:[#allocation2 + $0x111] sm:$0xff]
      %v1657 = vld [vmem:[#allocation2 + $0x121] sm:$0xff]
      %v1658 = vld [vmem:[#allocation2 + $0x129] sm:$0xff]
      %v1659 = vld [vmem:[#allocation2 + $0x139] sm:$0xff]
      %v1660 = vld [vmem:[#allocation2 + $0x141] sm:$0xff]
      %v1661 = vld [vmem:[#allocation2 + $0x151] sm:$0xff]
      %v1662 = vld [vmem:[#allocation2 + $0x159] sm:$0xff]
      %v1663 = vld [vmem:[#allocation2 + $0x169] sm:$0xff]
      %v1664 = vld [vmem:[#allocation2 + $0x171] sm:$0xff]
      %v1665 = vld [vmem:[#allocation2 + $0x2] sm:$0xff]
      %v1666 = vld [vmem:[#allocation2 + $0xa] sm:$0xff]
      %v1667 = vld [vmem:[#allocation2 + $0x1a] sm:$0xff]
      %v1668 = vld [vmem:[#allocation2 + $0x22] sm:$0xff]
      %v1669 = vld [vmem:[#allocation2 + $0x32] sm:$0xff]
      %v1670 = vld [vmem:[#allocation2 + $0x3a] sm:$0xff]
      %v1671 = vld [vmem:[#allocation2 + $0x4a] sm:$0xff]
      %v1672 = vld [vmem:[#allocation2 + $0x52] sm:$0xff]
      %v1673 = vld [vmem:[#allocation2 + $0x62] sm:$0xff]
      %v1674 = vld [vmem:[#allocation2 + $0x6a] sm:$0xff]
      %v1675 = vld [vmem:[#allocation2 + $0x7a] sm:$0xff]
      %v1676 = vld [vmem:[#allocation2 + $0x82] sm:$0xff]
      %v1677 = vld [vmem:[#allocation2 + $0x92] sm:$0xff]
      %v1678 = vld [vmem:[#allocation2 + $0x9a] sm:$0xff]
      %v1679 = vld [vmem:[#allocation2 + $0xaa] sm:$0xff]
      %v1680 = vld [vmem:[#allocation2 + $0xb2] sm:$0xff]
      %v1681 = vld [vmem:[#allocation2 + $0xc2] sm:$0xff]
      %v1682 = vld [vmem:[#allocation2 + $0xca] sm:$0xff]
      %v1683 = vld [vmem:[#allocation2 + $0xda] sm:$0xff]
      %v1684 = vld [vmem:[#allocation2 + $0xe2] sm:$0xff]
      %v1685 = vld [vmem:[#allocation2 + $0xf2] sm:$0xff]
      %v1686 = vld [vmem:[#allocation2 + $0xfa] sm:$0xff]
      %v1687 = vld [vmem:[#allocation2 + $0x10a] sm:$0xff]
      %v1688 = vld [vmem:[#allocation2 + $0x112] sm:$0xff]
      %v1689 = vld [vmem:[#allocation2 + $0x122] sm:$0xff]
      %v1690 = vld [vmem:[#allocation2 + $0x12a] sm:$0xff]
      %v1691 = vld [vmem:[#allocation2 + $0x13a] sm:$0xff]
      %v1692 = vld [vmem:[#allocation2 + $0x142] sm:$0xff]
      %v1693 = vld [vmem:[#allocation2 + $0x152] sm:$0xff]
      %v1694 = vld [vmem:[#allocation2 + $0x15a] sm:$0xff]
      %v1695 = vld [vmem:[#allocation2 + $0x16a] sm:$0xff]
      %v1696 = vld [vmem:[#allocation2 + $0x172] sm:$0xff]
      %v1697 = vld [vmem:[%s457 + $0x1] sm:$0xff]
      %v1698 = vld [vmem:[%s457 + $0x9] sm:$0xff]
      %v1699 = vld [vmem:[%s457 + $0x19] sm:$0xff]
      %v1700 = vld [vmem:[%s457 + $0x21] sm:$0xff]
      %v1701 = vld [vmem:[%s457 + $0x31] sm:$0xff]
      %v1702 = vld [vmem:[%s457 + $0x39] sm:$0xff]
      %v1703 = vld [vmem:[%s457 + $0x49] sm:$0xff]
      %v1704 = vld [vmem:[%s457 + $0x51] sm:$0xff]
      %v1705 = vld [vmem:[%s457 + $0x61] sm:$0xff]
      %v1706 = vld [vmem:[%s457 + $0x69] sm:$0xff]
      %v1707 = vld [vmem:[%s457 + $0x79] sm:$0xff]
      %v1708 = vld [vmem:[%s457 + $0x81] sm:$0xff]
      %v1709 = vld [vmem:[%s457 + $0x91] sm:$0xff]
      %v1710 = vld [vmem:[%s457 + $0x99] sm:$0xff]
      %v1711 = vld [vmem:[%s457 + $0xa9] sm:$0xff]
      %v1712 = vld [vmem:[%s457 + $0xb1] sm:$0xff]
      %v1713 = vld [vmem:[%s457 + $0xc1] sm:$0xff]
      %v1714 = vld [vmem:[%s457 + $0xc9] sm:$0xff]
      %v1715 = vld [vmem:[%s457 + $0xd9] sm:$0xff]
      %v1716 = vld [vmem:[%s457 + $0xe1] sm:$0xff]
      %v1717 = vld [vmem:[%s457 + $0xf1] sm:$0xff]
      %v1718 = vld [vmem:[%s457 + $0xf9] sm:$0xff]
      %v1719 = vld [vmem:[%s457 + $0x109] sm:$0xff]
      %v1720 = vld [vmem:[%s457 + $0x111] sm:$0xff]
      %v1721 = vld [vmem:[%s457 + $0x121] sm:$0xff]
      %v1722 = vld [vmem:[%s457 + $0x129] sm:$0xff]
      %v1723 = vld [vmem:[%s457 + $0x139] sm:$0xff]
      %v1724 = vld [vmem:[%s457 + $0x141] sm:$0xff]
      %v1725 = vld [vmem:[%s457 + $0x151] sm:$0xff]
      %v1726 = vld [vmem:[%s457 + $0x159] sm:$0xff]
      %v1727 = vld [vmem:[%s457 + $0x169] sm:$0xff]
      %v1728 = vld [vmem:[%s457 + $0x171] sm:$0xff]
      %v1729 = vld [vmem:[%s457 + $0x2] sm:$0xff]
      %v1730 = vld [vmem:[%s457 + $0xa] sm:$0xff]
      %v1731 = vld [vmem:[%s457 + $0x1a] sm:$0xff]
      %v1732 = vld [vmem:[%s457 + $0x22] sm:$0xff]
      %v1733 = vld [vmem:[%s457 + $0x32] sm:$0xff]
      %v1734 = vld [vmem:[%s457 + $0x3a] sm:$0xff]
      %v1735 = vld [vmem:[%s457 + $0x4a] sm:$0xff]
      %v1736 = vld [vmem:[%s457 + $0x52] sm:$0xff]
      %v1737 = vld [vmem:[%s457 + $0x62] sm:$0xff]
      %v1738 = vld [vmem:[%s457 + $0x6a] sm:$0xff]
      %v1739 = vld [vmem:[%s457 + $0x7a] sm:$0xff]
      %v1740 = vld [vmem:[%s457 + $0x82] sm:$0xff]
      %v1741 = vld [vmem:[%s457 + $0x92] sm:$0xff]
      %v1742 = vld [vmem:[%s457 + $0x9a] sm:$0xff]
      %v1743 = vld [vmem:[%s457 + $0xaa] sm:$0xff]
      %v1744 = vld [vmem:[%s457 + $0xb2] sm:$0xff]
      %v1745 = vld [vmem:[%s457 + $0xc2] sm:$0xff]
      %v1746 = vld [vmem:[%s457 + $0xca] sm:$0xff]
      %v1747 = vld [vmem:[%s457 + $0xda] sm:$0xff]
      %v1748 = vld [vmem:[%s457 + $0xe2] sm:$0xff]
      %v1749 = vld [vmem:[%s457 + $0xf2] sm:$0xff]
      %v1750 = vld [vmem:[%s457 + $0xfa] sm:$0xff]
      %v1751 = vld [vmem:[%s457 + $0x10a] sm:$0xff]
      %v1752 = vld [vmem:[%s457 + $0x112] sm:$0xff]
      %v1753 = vld [vmem:[%s457 + $0x122] sm:$0xff]
      %v1754 = vld [vmem:[%s457 + $0x12a] sm:$0xff]
      %v1755 = vld [vmem:[%s457 + $0x13a] sm:$0xff]
      %v1756 = vld [vmem:[%s457 + $0x142] sm:$0xff]
      %v1757 = vld [vmem:[%s457 + $0x152] sm:$0xff]
      %v1758 = vld [vmem:[%s457 + $0x15a] sm:$0xff]
      %v1759 = vld [vmem:[%s457 + $0x16a] sm:$0xff]
      %v1760 = vld [vmem:[%s457 + $0x172] sm:$0xff]
      %s1761 = scalar_lea.vmem %s3, 16
      %v1762 = vld [vmem:[%s1761] sm:$0xf]
      %s1763 = scalar_lea.vmem %s3, 20
      %v1764 = vld [vmem:[%s1763] sm:$0xf]
      %v1766 = vsel %vm404, %v1665, 0
      %v1769 = vsel %vm404, %v1666, 0
      %v1772 = vsel %vm404, %v1667, 0
      %v1775 = vsel %vm404, %v1668, 0
      %v1778 = vsel %vm404, %v1669, 0
      %v1781 = vsel %vm404, %v1670, 0
      %v1784 = vsel %vm404, %v1671, 0
      %v1787 = vsel %vm404, %v1672, 0
      %v1790 = vsel %vm404, %v1673, 0
      %v1793 = vsel %vm404, %v1674, 0
      %v1796 = vsel %vm404, %v1675, 0
      %v1799 = vsel %vm404, %v1676, 0
      %v1802 = vsel %vm404, %v1677, 0
      %v1805 = vsel %vm404, %v1678, 0
      %v1808 = vsel %vm404, %v1679, 0
      %v1811 = vsel %vm404, %v1680, 0
      %v1814 = vsel %vm404, %v1681, 0
      %v1817 = vsel %vm404, %v1682, 0
      %v1820 = vsel %vm404, %v1683, 0
      %v1823 = vsel %vm404, %v1684, 0
      %v1826 = vsel %vm404, %v1685, 0
      %v1829 = vsel %vm404, %v1686, 0
      %v1832 = vsel %vm404, %v1687, 0
      %v1835 = vsel %vm404, %v1688, 0
      %v1838 = vsel %vm404, %v1689, 0
      %v1841 = vsel %vm404, %v1690, 0
      %v1844 = vsel %vm404, %v1691, 0
      %v1847 = vsel %vm404, %v1692, 0
      %v1850 = vsel %vm404, %v1693, 0
      %v1853 = vsel %vm404, %v1694, 0
      %v1856 = vsel %vm404, %v1695, 0
      %v1859 = vsel %vm404, %v1696, 0
      %v1862 = vsel %vm745, %v1764, 0
      %1864 = vmatpush.msra.mxu0 0.0
      %1865 = vmatpush.msra.mxu0 0.0
      %1866 = vmatpush.msra.mxu0 0.0
      %1867 = vmatpush.msra.mxu0 0.0
      %1868 = vmatpush.msra.mxu0 0.0
      %1869 = vmatpush.msra.mxu0 0.0
      %1870 = vmatpush.msra.mxu0 0.0
      %1871 = vmatpush.msra.mxu0 0.0
      %1872 = vmatpush.msra.mxu0 0.0
      %1873 = vmatpush.msra.mxu0 0.0
      %1874 = vmatpush.msra.mxu0 0.0
      %1875 = vmatpush.msra.mxu0 0.0
      %1876 = vmatpush.msra.mxu0 0.0
      %1877 = vmatpush.msra.mxu0 0.0
      %1878 = vmatpush.msra.mxu0 0.0
      %1879 = vmatpush.msra.mxu0 %v1862
      %1880 = vmatmul.f32.gmra.mxu0 %v1766
      %v1881 = vpop.f32.mrf.mxu0
      %v1882 = vadd.f32 0.0, %v1881
      %1883 = vmatmul.f32.gmra.mxu0 %v1769
      %v1884 = vpop.f32.mrf.mxu0
      %v1885 = vadd.f32 0.0, %v1884
      %1886 = vmatmul.f32.gmra.mxu0 %v1772
      %v1887 = vpop.f32.mrf.mxu0
      %v1888 = vadd.f32 0.0, %v1887
      %1889 = vmatmul.f32.gmra.mxu0 %v1775
      %v1890 = vpop.f32.mrf.mxu0
      %v1891 = vadd.f32 0.0, %v1890
      %1892 = vmatmul.f32.gmra.mxu0 %v1778
      %v1893 = vpop.f32.mrf.mxu0
      %v1894 = vadd.f32 0.0, %v1893
      %1895 = vmatmul.f32.gmra.mxu0 %v1781
      %v1896 = vpop.f32.mrf.mxu0
      %v1897 = vadd.f32 0.0, %v1896
      %1898 = vmatmul.f32.gmra.mxu0 %v1784
      %v1899 = vpop.f32.mrf.mxu0
      %v1900 = vadd.f32 0.0, %v1899
      %1901 = vmatmul.f32.gmra.mxu0 %v1787
      %v1902 = vpop.f32.mrf.mxu0
      %v1903 = vadd.f32 0.0, %v1902
      %1904 = vmatmul.f32.gmra.mxu0 %v1790
      %v1905 = vpop.f32.mrf.mxu0
      %v1906 = vadd.f32 0.0, %v1905
      %1907 = vmatmul.f32.gmra.mxu0 %v1793
      %v1908 = vpop.f32.mrf.mxu0
      %v1909 = vadd.f32 0.0, %v1908
      %1910 = vmatmul.f32.gmra.mxu0 %v1796
      %v1911 = vpop.f32.mrf.mxu0
      %v1912 = vadd.f32 0.0, %v1911
      %1913 = vmatmul.f32.gmra.mxu0 %v1799
      %v1914 = vpop.f32.mrf.mxu0
      %v1915 = vadd.f32 0.0, %v1914
      %1916 = vmatmul.f32.gmra.mxu0 %v1802
      %v1917 = vpop.f32.mrf.mxu0
      %v1918 = vadd.f32 0.0, %v1917
      %1919 = vmatmul.f32.gmra.mxu0 %v1805
      %v1920 = vpop.f32.mrf.mxu0
      %v1921 = vadd.f32 0.0, %v1920
      %1922 = vmatmul.f32.gmra.mxu0 %v1808
      %v1923 = vpop.f32.mrf.mxu0
      %v1924 = vadd.f32 0.0, %v1923
      %1925 = vmatmul.f32.gmra.mxu0 %v1811
      %v1926 = vpop.f32.mrf.mxu0
      %v1927 = vadd.f32 0.0, %v1926
      %1928 = vmatmul.f32.gmra.mxu0 %v1814
      %v1929 = vpop.f32.mrf.mxu0
      %v1930 = vadd.f32 0.0, %v1929
      %1931 = vmatmul.f32.gmra.mxu0 %v1817
      %v1932 = vpop.f32.mrf.mxu0
      %v1933 = vadd.f32 0.0, %v1932
      %1934 = vmatmul.f32.gmra.mxu0 %v1820
      %v1935 = vpop.f32.mrf.mxu0
      %v1936 = vadd.f32 0.0, %v1935
      %1937 = vmatmul.f32.gmra.mxu0 %v1823
      %v1938 = vpop.f32.mrf.mxu0
      %v1939 = vadd.f32 0.0, %v1938
      %1940 = vmatmul.f32.gmra.mxu0 %v1826
      %v1941 = vpop.f32.mrf.mxu0
      %v1942 = vadd.f32 0.0, %v1941
      %1943 = vmatmul.f32.gmra.mxu0 %v1829
      %v1944 = vpop.f32.mrf.mxu0
      %v1945 = vadd.f32 0.0, %v1944
      %1946 = vmatmul.f32.gmra.mxu0 %v1832
      %v1947 = vpop.f32.mrf.mxu0
      %v1948 = vadd.f32 0.0, %v1947
      %1949 = vmatmul.f32.gmra.mxu0 %v1835
      %v1950 = vpop.f32.mrf.mxu0
      %v1951 = vadd.f32 0.0, %v1950
      %1952 = vmatmul.f32.gmra.mxu0 %v1838
      %v1953 = vpop.f32.mrf.mxu0
      %v1954 = vadd.f32 0.0, %v1953
      %1955 = vmatmul.f32.gmra.mxu0 %v1841
      %v1956 = vpop.f32.mrf.mxu0
      %v1957 = vadd.f32 0.0, %v1956
      %1958 = vmatmul.f32.gmra.mxu0 %v1844
      %v1959 = vpop.f32.mrf.mxu0
      %v1960 = vadd.f32 0.0, %v1959
      %1961 = vmatmul.f32.gmra.mxu0 %v1847
      %v1962 = vpop.f32.mrf.mxu0
      %v1963 = vadd.f32 0.0, %v1962
      %1964 = vmatmul.f32.gmra.mxu0 %v1850
      %v1965 = vpop.f32.mrf.mxu0
      %v1966 = vadd.f32 0.0, %v1965
      %1967 = vmatmul.f32.gmra.mxu0 %v1853
      %v1968 = vpop.f32.mrf.mxu0
      %v1969 = vadd.f32 0.0, %v1968
      %1970 = vmatmul.f32.gmra.mxu0 %v1856
      %v1971 = vpop.f32.mrf.mxu0
      %v1972 = vadd.f32 0.0, %v1971
      %1973 = vmatmul.f32.gmra.mxu0 %v1859
      %v1974 = vpop.f32.mrf.mxu0
      %v1975 = vadd.f32 0.0, %v1974
      %1976 = vdwg.mxu0
      %v1978 = vsel %vm404, %v1633, 0
      %v1981 = vsel %vm404, %v1634, 0
      %v1984 = vsel %vm404, %v1635, 0
      %v1987 = vsel %vm404, %v1636, 0
      %v1990 = vsel %vm404, %v1637, 0
      %v1993 = vsel %vm404, %v1638, 0
      %v1996 = vsel %vm404, %v1639, 0
      %v1999 = vsel %vm404, %v1640, 0
      %v2002 = vsel %vm404, %v1641, 0
      %v2005 = vsel %vm404, %v1642, 0
      %v2008 = vsel %vm404, %v1643, 0
      %v2011 = vsel %vm404, %v1644, 0
      %v2014 = vsel %vm404, %v1645, 0
      %v2017 = vsel %vm404, %v1646, 0
      %v2020 = vsel %vm404, %v1647, 0
      %v2023 = vsel %vm404, %v1648, 0
      %v2026 = vsel %vm404, %v1649, 0
      %v2029 = vsel %vm404, %v1650, 0
      %v2032 = vsel %vm404, %v1651, 0
      %v2035 = vsel %vm404, %v1652, 0
      %v2038 = vsel %vm404, %v1653, 0
      %v2041 = vsel %vm404, %v1654, 0
      %v2044 = vsel %vm404, %v1655, 0
      %v2047 = vsel %vm404, %v1656, 0
      %v2050 = vsel %vm404, %v1657, 0
      %v2053 = vsel %vm404, %v1658, 0
      %v2056 = vsel %vm404, %v1659, 0
      %v2059 = vsel %vm404, %v1660, 0
      %v2062 = vsel %vm404, %v1661, 0
      %v2065 = vsel %vm404, %v1662, 0
      %v2068 = vsel %vm404, %v1663, 0
      %v2071 = vsel %vm404, %v1664, 0
      %v2074 = vsel %vm745, %v1762, 0
      %2076 = vmatpush.msra.mxu0 0.0
      %2077 = vmatpush.msra.mxu0 0.0
      %2078 = vmatpush.msra.mxu0 0.0
      %2079 = vmatpush.msra.mxu0 0.0
      %2080 = vmatpush.msra.mxu0 0.0
      %2081 = vmatpush.msra.mxu0 0.0
      %2082 = vmatpush.msra.mxu0 0.0
      %2083 = vmatpush.msra.mxu0 0.0
      %2084 = vmatpush.msra.mxu0 0.0
      %2085 = vmatpush.msra.mxu0 0.0
      %2086 = vmatpush.msra.mxu0 0.0
      %2087 = vmatpush.msra.mxu0 0.0
      %2088 = vmatpush.msra.mxu0 0.0
      %2089 = vmatpush.msra.mxu0 0.0
      %2090 = vmatpush.msra.mxu0 0.0
      %2091 = vmatpush.msra.mxu0 %v2074
      %2092 = vmatmul.f32.gmra.mxu0 %v1978
      %v2093 = vpop.f32.mrf.mxu0
      %v2094 = vadd.f32 %v1882, %v2093
      %2095 = vmatmul.f32.gmra.mxu0 %v1981
      %v2096 = vpop.f32.mrf.mxu0
      %v2097 = vadd.f32 %v1885, %v2096
      %2098 = vmatmul.f32.gmra.mxu0 %v1984
      %v2099 = vpop.f32.mrf.mxu0
      %v2100 = vadd.f32 %v1888, %v2099
      %2101 = vmatmul.f32.gmra.mxu0 %v1987
      %v2102 = vpop.f32.mrf.mxu0
      %v2103 = vadd.f32 %v1891, %v2102
      %2104 = vmatmul.f32.gmra.mxu0 %v1990
      %v2105 = vpop.f32.mrf.mxu0
      %v2106 = vadd.f32 %v1894, %v2105
      %2107 = vmatmul.f32.gmra.mxu0 %v1993
      %v2108 = vpop.f32.mrf.mxu0
      %v2109 = vadd.f32 %v1897, %v2108
      %2110 = vmatmul.f32.gmra.mxu0 %v1996
      %v2111 = vpop.f32.mrf.mxu0
      %v2112 = vadd.f32 %v1900, %v2111
      %2113 = vmatmul.f32.gmra.mxu0 %v1999
      %v2114 = vpop.f32.mrf.mxu0
      %v2115 = vadd.f32 %v1903, %v2114
      %2116 = vmatmul.f32.gmra.mxu0 %v2002
      %v2117 = vpop.f32.mrf.mxu0
      %v2118 = vadd.f32 %v1906, %v2117
      %2119 = vmatmul.f32.gmra.mxu0 %v2005
      %v2120 = vpop.f32.mrf.mxu0
      %v2121 = vadd.f32 %v1909, %v2120
      %2122 = vmatmul.f32.gmra.mxu0 %v2008
      %v2123 = vpop.f32.mrf.mxu0
      %v2124 = vadd.f32 %v1912, %v2123
      %2125 = vmatmul.f32.gmra.mxu0 %v2011
      %v2126 = vpop.f32.mrf.mxu0
      %v2127 = vadd.f32 %v1915, %v2126
      %2128 = vmatmul.f32.gmra.mxu0 %v2014
      %v2129 = vpop.f32.mrf.mxu0
      %v2130 = vadd.f32 %v1918, %v2129
      %2131 = vmatmul.f32.gmra.mxu0 %v2017
      %v2132 = vpop.f32.mrf.mxu0
      %v2133 = vadd.f32 %v1921, %v2132
      %2134 = vmatmul.f32.gmra.mxu0 %v2020
      %v2135 = vpop.f32.mrf.mxu0
      %v2136 = vadd.f32 %v1924, %v2135
      %2137 = vmatmul.f32.gmra.mxu0 %v2023
      %v2138 = vpop.f32.mrf.mxu0
      %v2139 = vadd.f32 %v1927, %v2138
      %2140 = vmatmul.f32.gmra.mxu0 %v2026
      %v2141 = vpop.f32.mrf.mxu0
      %v2142 = vadd.f32 %v1930, %v2141
      %2143 = vmatmul.f32.gmra.mxu0 %v2029
      %v2144 = vpop.f32.mrf.mxu0
      %v2145 = vadd.f32 %v1933, %v2144
      %2146 = vmatmul.f32.gmra.mxu0 %v2032
      %v2147 = vpop.f32.mrf.mxu0
      %v2148 = vadd.f32 %v1936, %v2147
      %2149 = vmatmul.f32.gmra.mxu0 %v2035
      %v2150 = vpop.f32.mrf.mxu0
      %v2151 = vadd.f32 %v1939, %v2150
      %2152 = vmatmul.f32.gmra.mxu0 %v2038
      %v2153 = vpop.f32.mrf.mxu0
      %v2154 = vadd.f32 %v1942, %v2153
      %2155 = vmatmul.f32.gmra.mxu0 %v2041
      %v2156 = vpop.f32.mrf.mxu0
      %v2157 = vadd.f32 %v1945, %v2156
      %2158 = vmatmul.f32.gmra.mxu0 %v2044
      %v2159 = vpop.f32.mrf.mxu0
      %v2160 = vadd.f32 %v1948, %v2159
      %2161 = vmatmul.f32.gmra.mxu0 %v2047
      %v2162 = vpop.f32.mrf.mxu0
      %v2163 = vadd.f32 %v1951, %v2162
      %2164 = vmatmul.f32.gmra.mxu0 %v2050
      %v2165 = vpop.f32.mrf.mxu0
      %v2166 = vadd.f32 %v1954, %v2165
      %2167 = vmatmul.f32.gmra.mxu0 %v2053
      %v2168 = vpop.f32.mrf.mxu0
      %v2169 = vadd.f32 %v1957, %v2168
      %2170 = vmatmul.f32.gmra.mxu0 %v2056
      %v2171 = vpop.f32.mrf.mxu0
      %v2172 = vadd.f32 %v1960, %v2171
      %2173 = vmatmul.f32.gmra.mxu0 %v2059
      %v2174 = vpop.f32.mrf.mxu0
      %v2175 = vadd.f32 %v1963, %v2174
      %2176 = vmatmul.f32.gmra.mxu0 %v2062
      %v2177 = vpop.f32.mrf.mxu0
      %v2178 = vadd.f32 %v1966, %v2177
      %2179 = vmatmul.f32.gmra.mxu0 %v2065
      %v2180 = vpop.f32.mrf.mxu0
      %v2181 = vadd.f32 %v1969, %v2180
      %2182 = vmatmul.f32.gmra.mxu0 %v2068
      %v2183 = vpop.f32.mrf.mxu0
      %v2184 = vadd.f32 %v1972, %v2183
      %2185 = vmatmul.f32.gmra.mxu0 %v2071
      %v2186 = vpop.f32.mrf.mxu0
      %v2187 = vadd.f32 %v1975, %v2186
      %2188 = vdwg.mxu0
      %s2189 = scalar_lea.vmem %s3, 24
      %v2190 = vld [vmem:[%s2189] sm:$0xf]
      %v2192 = vsel %vm404, %v1697, 0
      %v2195 = vsel %vm404, %v1698, 0
      %v2198 = vsel %vm404, %v1699, 0
      %v2201 = vsel %vm404, %v1700, 0
      %v2204 = vsel %vm404, %v1701, 0
      %v2207 = vsel %vm404, %v1702, 0
      %v2210 = vsel %vm404, %v1703, 0
      %v2213 = vsel %vm404, %v1704, 0
      %v2216 = vsel %vm404, %v1705, 0
      %v2219 = vsel %vm404, %v1706, 0
      %v2222 = vsel %vm404, %v1707, 0
      %v2225 = vsel %vm404, %v1708, 0
      %v2228 = vsel %vm404, %v1709, 0
      %v2231 = vsel %vm404, %v1710, 0
      %v2234 = vsel %vm404, %v1711, 0
      %v2237 = vsel %vm404, %v1712, 0
      %v2240 = vsel %vm404, %v1713, 0
      %v2243 = vsel %vm404, %v1714, 0
      %v2246 = vsel %vm404, %v1715, 0
      %v2249 = vsel %vm404, %v1716, 0
      %v2252 = vsel %vm404, %v1717, 0
      %v2255 = vsel %vm404, %v1718, 0
      %v2258 = vsel %vm404, %v1719, 0
      %v2261 = vsel %vm404, %v1720, 0
      %v2264 = vsel %vm404, %v1721, 0
      %v2267 = vsel %vm404, %v1722, 0
      %v2270 = vsel %vm404, %v1723, 0
      %v2273 = vsel %vm404, %v1724, 0
      %v2276 = vsel %vm404, %v1725, 0
      %v2279 = vsel %vm404, %v1726, 0
      %v2282 = vsel %vm404, %v1727, 0
      %v2285 = vsel %vm404, %v1728, 0
      %v2288 = vsel %vm745, %v2190, 0
      %2290 = vmatpush.msra.mxu0 0.0
      %2291 = vmatpush.msra.mxu0 0.0
      %2292 = vmatpush.msra.mxu0 0.0
      %2293 = vmatpush.msra.mxu0 0.0
      %2294 = vmatpush.msra.mxu0 0.0
      %2295 = vmatpush.msra.mxu0 0.0
      %2296 = vmatpush.msra.mxu0 0.0
      %2297 = vmatpush.msra.mxu0 0.0
      %2298 = vmatpush.msra.mxu0 0.0
      %2299 = vmatpush.msra.mxu0 0.0
      %2300 = vmatpush.msra.mxu0 0.0
      %2301 = vmatpush.msra.mxu0 0.0
      %2302 = vmatpush.msra.mxu0 0.0
      %2303 = vmatpush.msra.mxu0 0.0
      %2304 = vmatpush.msra.mxu0 0.0
      %2305 = vmatpush.msra.mxu0 %v2288
      %2306 = vmatmul.f32.gmra.mxu0 %v2192
      %v2307 = vpop.f32.mrf.mxu0
      %v2308 = vadd.f32 0.0, %v2307
      %2309 = vmatmul.f32.gmra.mxu0 %v2195
      %v2310 = vpop.f32.mrf.mxu0
      %v2311 = vadd.f32 0.0, %v2310
      %2312 = vmatmul.f32.gmra.mxu0 %v2198
      %v2313 = vpop.f32.mrf.mxu0
      %v2314 = vadd.f32 0.0, %v2313
      %2315 = vmatmul.f32.gmra.mxu0 %v2201
      %v2316 = vpop.f32.mrf.mxu0
      %v2317 = vadd.f32 0.0, %v2316
      %2318 = vmatmul.f32.gmra.mxu0 %v2204
      %v2319 = vpop.f32.mrf.mxu0
      %v2320 = vadd.f32 0.0, %v2319
      %2321 = vmatmul.f32.gmra.mxu0 %v2207
      %v2322 = vpop.f32.mrf.mxu0
      %v2323 = vadd.f32 0.0, %v2322
      %2324 = vmatmul.f32.gmra.mxu0 %v2210
      %v2325 = vpop.f32.mrf.mxu0
      %v2326 = vadd.f32 0.0, %v2325
      %2327 = vmatmul.f32.gmra.mxu0 %v2213
      %v2328 = vpop.f32.mrf.mxu0
      %v2329 = vadd.f32 0.0, %v2328
      %2330 = vmatmul.f32.gmra.mxu0 %v2216
      %v2331 = vpop.f32.mrf.mxu0
      %v2332 = vadd.f32 0.0, %v2331
      %2333 = vmatmul.f32.gmra.mxu0 %v2219
      %v2334 = vpop.f32.mrf.mxu0
      %v2335 = vadd.f32 0.0, %v2334
      %2336 = vmatmul.f32.gmra.mxu0 %v2222
      %v2337 = vpop.f32.mrf.mxu0
      %v2338 = vadd.f32 0.0, %v2337
      %2339 = vmatmul.f32.gmra.mxu0 %v2225
      %v2340 = vpop.f32.mrf.mxu0
      %v2341 = vadd.f32 0.0, %v2340
      %2342 = vmatmul.f32.gmra.mxu0 %v2228
      %v2343 = vpop.f32.mrf.mxu0
      %v2344 = vadd.f32 0.0, %v2343
      %2345 = vmatmul.f32.gmra.mxu0 %v2231
      %v2346 = vpop.f32.mrf.mxu0
      %v2347 = vadd.f32 0.0, %v2346
      %2348 = vmatmul.f32.gmra.mxu0 %v2234
      %v2349 = vpop.f32.mrf.mxu0
      %v2350 = vadd.f32 0.0, %v2349
      %2351 = vmatmul.f32.gmra.mxu0 %v2237
      %v2352 = vpop.f32.mrf.mxu0
      %v2353 = vadd.f32 0.0, %v2352
      %2354 = vmatmul.f32.gmra.mxu0 %v2240
      %v2355 = vpop.f32.mrf.mxu0
      %v2356 = vadd.f32 0.0, %v2355
      %2357 = vmatmul.f32.gmra.mxu0 %v2243
      %v2358 = vpop.f32.mrf.mxu0
      %v2359 = vadd.f32 0.0, %v2358
      %2360 = vmatmul.f32.gmra.mxu0 %v2246
      %v2361 = vpop.f32.mrf.mxu0
      %v2362 = vadd.f32 0.0, %v2361
      %2363 = vmatmul.f32.gmra.mxu0 %v2249
      %v2364 = vpop.f32.mrf.mxu0
      %v2365 = vadd.f32 0.0, %v2364
      %2366 = vmatmul.f32.gmra.mxu0 %v2252
      %v2367 = vpop.f32.mrf.mxu0
      %v2368 = vadd.f32 0.0, %v2367
      %2369 = vmatmul.f32.gmra.mxu0 %v2255
      %v2370 = vpop.f32.mrf.mxu0
      %v2371 = vadd.f32 0.0, %v2370
      %2372 = vmatmul.f32.gmra.mxu0 %v2258
      %v2373 = vpop.f32.mrf.mxu0
      %v2374 = vadd.f32 0.0, %v2373
      %2375 = vmatmul.f32.gmra.mxu0 %v2261
      %v2376 = vpop.f32.mrf.mxu0
      %v2377 = vadd.f32 0.0, %v2376
      %2378 = vmatmul.f32.gmra.mxu0 %v2264
      %v2379 = vpop.f32.mrf.mxu0
      %v2380 = vadd.f32 0.0, %v2379
      %2381 = vmatmul.f32.gmra.mxu0 %v2267
      %v2382 = vpop.f32.mrf.mxu0
      %v2383 = vadd.f32 0.0, %v2382
      %2384 = vmatmul.f32.gmra.mxu0 %v2270
      %v2385 = vpop.f32.mrf.mxu0
      %v2386 = vadd.f32 0.0, %v2385
      %2387 = vmatmul.f32.gmra.mxu0 %v2273
      %v2388 = vpop.f32.mrf.mxu0
      %v2389 = vadd.f32 0.0, %v2388
      %2390 = vmatmul.f32.gmra.mxu0 %v2276
      %v2391 = vpop.f32.mrf.mxu0
      %v2392 = vadd.f32 0.0, %v2391
      %2393 = vmatmul.f32.gmra.mxu0 %v2279
      %v2394 = vpop.f32.mrf.mxu0
      %v2395 = vadd.f32 0.0, %v2394
      %2396 = vmatmul.f32.gmra.mxu0 %v2282
      %v2397 = vpop.f32.mrf.mxu0
      %v2398 = vadd.f32 0.0, %v2397
      %2399 = vmatmul.f32.gmra.mxu0 %v2285
      %v2400 = vpop.f32.mrf.mxu0
      %v2401 = vadd.f32 0.0, %v2400
      %2402 = vdwg.mxu0
      %v2403 = vadd.f32 %v2094, %v2308
      %v2404 = vadd.f32 %v2097, %v2311
      %v2405 = vadd.f32 %v2100, %v2314
      %v2406 = vadd.f32 %v2103, %v2317
      %v2407 = vadd.f32 %v2106, %v2320
      %v2408 = vadd.f32 %v2109, %v2323
      %v2409 = vadd.f32 %v2112, %v2326
      %v2410 = vadd.f32 %v2115, %v2329
      %v2411 = vadd.f32 %v2118, %v2332
      %v2412 = vadd.f32 %v2121, %v2335
      %v2413 = vadd.f32 %v2124, %v2338
      %v2414 = vadd.f32 %v2127, %v2341
      %v2415 = vadd.f32 %v2130, %v2344
      %v2416 = vadd.f32 %v2133, %v2347
      %v2417 = vadd.f32 %v2136, %v2350
      %v2418 = vadd.f32 %v2139, %v2353
      %v2419 = vadd.f32 %v2142, %v2356
      %v2420 = vadd.f32 %v2145, %v2359
      %v2421 = vadd.f32 %v2148, %v2362
      %v2422 = vadd.f32 %v2151, %v2365
      %v2423 = vadd.f32 %v2154, %v2368
      %v2424 = vadd.f32 %v2157, %v2371
      %v2425 = vadd.f32 %v2160, %v2374
      %v2426 = vadd.f32 %v2163, %v2377
      %v2427 = vadd.f32 %v2166, %v2380
      %v2428 = vadd.f32 %v2169, %v2383
      %v2429 = vadd.f32 %v2172, %v2386
      %v2430 = vadd.f32 %v2175, %v2389
      %v2431 = vadd.f32 %v2178, %v2392
      %v2432 = vadd.f32 %v2181, %v2395
      %v2433 = vadd.f32 %v2184, %v2398
      %v2434 = vadd.f32 %v2187, %v2401
      %s2435 = scalar_lea.vmem %s3, 28
      %v2436 = vld [vmem:[%s2435] sm:$0xf]
      %v2438 = vsel %vm404, %v1729, 0
      %v2441 = vsel %vm404, %v1730, 0
      %v2444 = vsel %vm404, %v1731, 0
      %v2447 = vsel %vm404, %v1732, 0
      %v2450 = vsel %vm404, %v1733, 0
      %v2453 = vsel %vm404, %v1734, 0
      %v2456 = vsel %vm404, %v1735, 0
      %v2459 = vsel %vm404, %v1736, 0
      %v2462 = vsel %vm404, %v1737, 0
      %v2465 = vsel %vm404, %v1738, 0
      %v2468 = vsel %vm404, %v1739, 0
      %v2471 = vsel %vm404, %v1740, 0
      %v2474 = vsel %vm404, %v1741, 0
      %v2477 = vsel %vm404, %v1742, 0
      %v2480 = vsel %vm404, %v1743, 0
      %v2483 = vsel %vm404, %v1744, 0
      %v2486 = vsel %vm404, %v1745, 0
      %v2489 = vsel %vm404, %v1746, 0
      %v2492 = vsel %vm404, %v1747, 0
      %v2495 = vsel %vm404, %v1748, 0
      %v2498 = vsel %vm404, %v1749, 0
      %v2501 = vsel %vm404, %v1750, 0
      %v2504 = vsel %vm404, %v1751, 0
      %v2507 = vsel %vm404, %v1752, 0
      %v2510 = vsel %vm404, %v1753, 0
      %v2513 = vsel %vm404, %v1754, 0
      %v2516 = vsel %vm404, %v1755, 0
      %v2519 = vsel %vm404, %v1756, 0
      %v2522 = vsel %vm404, %v1757, 0
      %v2525 = vsel %vm404, %v1758, 0
      %v2528 = vsel %vm404, %v1759, 0
      %v2531 = vsel %vm404, %v1760, 0
      %v2534 = vsel %vm745, %v2436, 0
      %2536 = vmatpush.msra.mxu0 0.0
      %2537 = vmatpush.msra.mxu0 0.0
      %2538 = vmatpush.msra.mxu0 0.0
      %2539 = vmatpush.msra.mxu0 0.0
      %2540 = vmatpush.msra.mxu0 0.0
      %2541 = vmatpush.msra.mxu0 0.0
      %2542 = vmatpush.msra.mxu0 0.0
      %2543 = vmatpush.msra.mxu0 0.0
      %2544 = vmatpush.msra.mxu0 0.0
      %2545 = vmatpush.msra.mxu0 0.0
      %2546 = vmatpush.msra.mxu0 0.0
      %2547 = vmatpush.msra.mxu0 0.0
      %2548 = vmatpush.msra.mxu0 0.0
      %2549 = vmatpush.msra.mxu0 0.0
      %2550 = vmatpush.msra.mxu0 0.0
      %2551 = vmatpush.msra.mxu0 %v2534
      %2552 = vmatmul.f32.gmra.mxu0 %v2438
      %v2553 = vpop.f32.mrf.mxu0
      %v2554 = vadd.f32 0.0, %v2553
      %2555 = vmatmul.f32.gmra.mxu0 %v2441
      %v2556 = vpop.f32.mrf.mxu0
      %v2557 = vadd.f32 0.0, %v2556
      %2558 = vmatmul.f32.gmra.mxu0 %v2444
      %v2559 = vpop.f32.mrf.mxu0
      %v2560 = vadd.f32 0.0, %v2559
      %2561 = vmatmul.f32.gmra.mxu0 %v2447
      %v2562 = vpop.f32.mrf.mxu0
      %v2563 = vadd.f32 0.0, %v2562
      %2564 = vmatmul.f32.gmra.mxu0 %v2450
      %v2565 = vpop.f32.mrf.mxu0
      %v2566 = vadd.f32 0.0, %v2565
      %2567 = vmatmul.f32.gmra.mxu0 %v2453
      %v2568 = vpop.f32.mrf.mxu0
      %v2569 = vadd.f32 0.0, %v2568
      %2570 = vmatmul.f32.gmra.mxu0 %v2456
      %v2571 = vpop.f32.mrf.mxu0
      %v2572 = vadd.f32 0.0, %v2571
      %2573 = vmatmul.f32.gmra.mxu0 %v2459
      %v2574 = vpop.f32.mrf.mxu0
      %v2575 = vadd.f32 0.0, %v2574
      %2576 = vmatmul.f32.gmra.mxu0 %v2462
      %v2577 = vpop.f32.mrf.mxu0
      %v2578 = vadd.f32 0.0, %v2577
      %2579 = vmatmul.f32.gmra.mxu0 %v2465
      %v2580 = vpop.f32.mrf.mxu0
      %v2581 = vadd.f32 0.0, %v2580
      %2582 = vmatmul.f32.gmra.mxu0 %v2468
      %v2583 = vpop.f32.mrf.mxu0
      %v2584 = vadd.f32 0.0, %v2583
      %2585 = vmatmul.f32.gmra.mxu0 %v2471
      %v2586 = vpop.f32.mrf.mxu0
      %v2587 = vadd.f32 0.0, %v2586
      %2588 = vmatmul.f32.gmra.mxu0 %v2474
      %v2589 = vpop.f32.mrf.mxu0
      %v2590 = vadd.f32 0.0, %v2589
      %2591 = vmatmul.f32.gmra.mxu0 %v2477
      %v2592 = vpop.f32.mrf.mxu0
      %v2593 = vadd.f32 0.0, %v2592
      %2594 = vmatmul.f32.gmra.mxu0 %v2480
      %v2595 = vpop.f32.mrf.mxu0
      %v2596 = vadd.f32 0.0, %v2595
      %2597 = vmatmul.f32.gmra.mxu0 %v2483
      %v2598 = vpop.f32.mrf.mxu0
      %v2599 = vadd.f32 0.0, %v2598
      %2600 = vmatmul.f32.gmra.mxu0 %v2486
      %v2601 = vpop.f32.mrf.mxu0
      %v2602 = vadd.f32 0.0, %v2601
      %2603 = vmatmul.f32.gmra.mxu0 %v2489
      %v2604 = vpop.f32.mrf.mxu0
      %v2605 = vadd.f32 0.0, %v2604
      %2606 = vmatmul.f32.gmra.mxu0 %v2492
      %v2607 = vpop.f32.mrf.mxu0
      %v2608 = vadd.f32 0.0, %v2607
      %2609 = vmatmul.f32.gmra.mxu0 %v2495
      %v2610 = vpop.f32.mrf.mxu0
      %v2611 = vadd.f32 0.0, %v2610
      %2612 = vmatmul.f32.gmra.mxu0 %v2498
      %v2613 = vpop.f32.mrf.mxu0
      %v2614 = vadd.f32 0.0, %v2613
      %2615 = vmatmul.f32.gmra.mxu0 %v2501
      %v2616 = vpop.f32.mrf.mxu0
      %v2617 = vadd.f32 0.0, %v2616
      %2618 = vmatmul.f32.gmra.mxu0 %v2504
      %v2619 = vpop.f32.mrf.mxu0
      %v2620 = vadd.f32 0.0, %v2619
      %2621 = vmatmul.f32.gmra.mxu0 %v2507
      %v2622 = vpop.f32.mrf.mxu0
      %v2623 = vadd.f32 0.0, %v2622
      %2624 = vmatmul.f32.gmra.mxu0 %v2510
      %v2625 = vpop.f32.mrf.mxu0
      %v2626 = vadd.f32 0.0, %v2625
      %2627 = vmatmul.f32.gmra.mxu0 %v2513
      %v2628 = vpop.f32.mrf.mxu0
      %v2629 = vadd.f32 0.0, %v2628
      %2630 = vmatmul.f32.gmra.mxu0 %v2516
      %v2631 = vpop.f32.mrf.mxu0
      %v2632 = vadd.f32 0.0, %v2631
      %2633 = vmatmul.f32.gmra.mxu0 %v2519
      %v2634 = vpop.f32.mrf.mxu0
      %v2635 = vadd.f32 0.0, %v2634
      %2636 = vmatmul.f32.gmra.mxu0 %v2522
      %v2637 = vpop.f32.mrf.mxu0
      %v2638 = vadd.f32 0.0, %v2637
      %2639 = vmatmul.f32.gmra.mxu0 %v2525
      %v2640 = vpop.f32.mrf.mxu0
      %v2641 = vadd.f32 0.0, %v2640
      %2642 = vmatmul.f32.gmra.mxu0 %v2528
      %v2643 = vpop.f32.mrf.mxu0
      %v2644 = vadd.f32 0.0, %v2643
      %2645 = vmatmul.f32.gmra.mxu0 %v2531
      %v2646 = vpop.f32.mrf.mxu0
      %v2647 = vadd.f32 0.0, %v2646
      %2648 = vdwg.mxu0
      %v2649 = vadd.f32 %v2403, %v2554
      %v2650 = vadd.f32 %v2404, %v2557
      %v2651 = vadd.f32 %v2405, %v2560
      %v2652 = vadd.f32 %v2406, %v2563
      %v2653 = vadd.f32 %v2407, %v2566
      %v2654 = vadd.f32 %v2408, %v2569
      %v2655 = vadd.f32 %v2409, %v2572
      %v2656 = vadd.f32 %v2410, %v2575
      %v2657 = vadd.f32 %v2411, %v2578
      %v2658 = vadd.f32 %v2412, %v2581
      %v2659 = vadd.f32 %v2413, %v2584
      %v2660 = vadd.f32 %v2414, %v2587
      %v2661 = vadd.f32 %v2415, %v2590
      %v2662 = vadd.f32 %v2416, %v2593
      %v2663 = vadd.f32 %v2417, %v2596
      %v2664 = vadd.f32 %v2418, %v2599
      %v2665 = vadd.f32 %v2419, %v2602
      %v2666 = vadd.f32 %v2420, %v2605
      %v2667 = vadd.f32 %v2421, %v2608
      %v2668 = vadd.f32 %v2422, %v2611
      %v2669 = vadd.f32 %v2423, %v2614
      %v2670 = vadd.f32 %v2424, %v2617
      %v2671 = vadd.f32 %v2425, %v2620
      %v2672 = vadd.f32 %v2426, %v2623
      %v2673 = vadd.f32 %v2427, %v2626
      %v2674 = vadd.f32 %v2428, %v2629
      %v2675 = vadd.f32 %v2429, %v2632
      %v2676 = vadd.f32 %v2430, %v2635
      %v2677 = vadd.f32 %v2431, %v2638
      %v2678 = vadd.f32 %v2432, %v2641
      %v2679 = vadd.f32 %v2433, %v2644
      %v2680 = vadd.f32 %v2434, %v2647
      %v2681 = vadd.f32 %v2649, %v1567
      %v2682 = vadd.f32 %v2650, %v1567
      %v2683 = vadd.f32 %v2651, %v1567
      %v2684 = vadd.f32 %v2652, %v1567
      %v2685 = vadd.f32 %v2653, %v1567
      %v2686 = vadd.f32 %v2654, %v1567
      %v2687 = vadd.f32 %v2655, %v1567
      %v2688 = vadd.f32 %v2656, %v1567
      %v2689 = vadd.f32 %v2657, %v1567
      %v2690 = vadd.f32 %v2658, %v1567
      %v2691 = vadd.f32 %v2659, %v1567
      %v2692 = vadd.f32 %v2660, %v1567
      %v2693 = vadd.f32 %v2661, %v1567
      %v2694 = vadd.f32 %v2662, %v1567
      %v2695 = vadd.f32 %v2663, %v1567
      %v2696 = vadd.f32 %v2664, %v1567
      %v2697 = vadd.f32 %v2665, %v1567
      %v2698 = vadd.f32 %v2666, %v1567
      %v2699 = vadd.f32 %v2667, %v1567
      %v2700 = vadd.f32 %v2668, %v1567
      %v2701 = vadd.f32 %v2669, %v1567
      %v2702 = vadd.f32 %v2670, %v1567
      %v2703 = vadd.f32 %v2671, %v1567
      %v2704 = vadd.f32 %v2672, %v1567
      %v2705 = vadd.f32 %v2673, %v1567
      %v2706 = vadd.f32 %v2674, %v1567
      %v2707 = vadd.f32 %v2675, %v1567
      %v2708 = vadd.f32 %v2676, %v1567
      %v2709 = vadd.f32 %v2677, %v1567
      %v2710 = vadd.f32 %v2678, %v1567
      %v2711 = vadd.f32 %v2679, %v1567
      %v2712 = vadd.f32 %v2680, %v1567
      %s2713 = scalar_lea.vmem %s391, 256
      %2714 = vst.msk [vmem:[%s2713] sm:$0xff] %vm404, %v2681
      %2715 = vst.msk [vmem:[%s2713 + $0x8] sm:$0xff] %vm404, %v2682
      %2716 = vst.msk [vmem:[%s2713 + $0x10] sm:$0xff] %vm404, %v2683
      %2717 = vst.msk [vmem:[%s2713 + $0x18] sm:$0xff] %vm404, %v2684
      %2718 = vst.msk [vmem:[%s2713 + $0x20] sm:$0xff] %vm404, %v2685
      %2719 = vst.msk [vmem:[%s2713 + $0x28] sm:$0xff] %vm404, %v2686
      %2720 = vst.msk [vmem:[%s2713 + $0x30] sm:$0xff] %vm404, %v2687
      %2721 = vst.msk [vmem:[%s2713 + $0x38] sm:$0xff] %vm404, %v2688
      %2722 = vst.msk [vmem:[%s2713 + $0x40] sm:$0xff] %vm404, %v2689
      %2723 = vst.msk [vmem:[%s2713 + $0x48] sm:$0xff] %vm404, %v2690
      %2724 = vst.msk [vmem:[%s2713 + $0x50] sm:$0xff] %vm404, %v2691
      %2725 = vst.msk [vmem:[%s2713 + $0x58] sm:$0xff] %vm404, %v2692
      %2726 = vst.msk [vmem:[%s2713 + $0x60] sm:$0xff] %vm404, %v2693
      %2727 = vst.msk [vmem:[%s2713 + $0x68] sm:$0xff] %vm404, %v2694
      %2728 = vst.msk [vmem:[%s2713 + $0x70] sm:$0xff] %vm404, %v2695
      %2729 = vst.msk [vmem:[%s2713 + $0x78] sm:$0xff] %vm404, %v2696
      %2730 = vst.msk [vmem:[%s2713 + $0x80] sm:$0xff] %vm404, %v2697
      %2731 = vst.msk [vmem:[%s2713 + $0x88] sm:$0xff] %vm404, %v2698
      %2732 = vst.msk [vmem:[%s2713 + $0x90] sm:$0xff] %vm404, %v2699
      %2733 = vst.msk [vmem:[%s2713 + $0x98] sm:$0xff] %vm404, %v2700
      %2734 = vst.msk [vmem:[%s2713 + $0xa0] sm:$0xff] %vm404, %v2701
      %2735 = vst.msk [vmem:[%s2713 + $0xa8] sm:$0xff] %vm404, %v2702
      %2736 = vst.msk [vmem:[%s2713 + $0xb0] sm:$0xff] %vm404, %v2703
      %2737 = vst.msk [vmem:[%s2713 + $0xb8] sm:$0xff] %vm404, %v2704
      %2738 = vst.msk [vmem:[%s2713 + $0xc0] sm:$0xff] %vm404, %v2705
      %2739 = vst.msk [vmem:[%s2713 + $0xc8] sm:$0xff] %vm404, %v2706
      %2740 = vst.msk [vmem:[%s2713 + $0xd0] sm:$0xff] %vm404, %v2707
      %2741 = vst.msk [vmem:[%s2713 + $0xd8] sm:$0xff] %vm404, %v2708
      %2742 = vst.msk [vmem:[%s2713 + $0xe0] sm:$0xff] %vm404, %v2709
      %2743 = vst.msk [vmem:[%s2713 + $0xe8] sm:$0xff] %vm404, %v2710
      %2744 = vst.msk [vmem:[%s2713 + $0xf0] sm:$0xff] %vm404, %v2711
      %2745 = vst.msk [vmem:[%s2713 + $0xf8] sm:$0xff] %vm404, %v2712
      %v2746 = vld [vmem:[%s457] sm:$0xff]
      %v2747 = vld [vmem:[%s457 + $0x8] sm:$0xff]
      %v2748 = vld [vmem:[%s457 + $0x18] sm:$0xff]
      %v2749 = vld [vmem:[%s457 + $0x20] sm:$0xff]
      %v2750 = vld [vmem:[%s457 + $0x30] sm:$0xff]
      %v2751 = vld [vmem:[%s457 + $0x38] sm:$0xff]
      %v2752 = vld [vmem:[%s457 + $0x48] sm:$0xff]
      %v2753 = vld [vmem:[%s457 + $0x50] sm:$0xff]
      %v2754 = vld [vmem:[%s457 + $0x60] sm:$0xff]
      %v2755 = vld [vmem:[%s457 + $0x68] sm:$0xff]
      %v2756 = vld [vmem:[%s457 + $0x78] sm:$0xff]
      %v2757 = vld [vmem:[%s457 + $0x80] sm:$0xff]
      %v2758 = vld [vmem:[%s457 + $0x90] sm:$0xff]
      %v2759 = vld [vmem:[%s457 + $0x98] sm:$0xff]
      %v2760 = vld [vmem:[%s457 + $0xa8] sm:$0xff]
      %v2761 = vld [vmem:[%s457 + $0xb0] sm:$0xff]
      %v2762 = vld [vmem:[%s457 + $0xc0] sm:$0xff]
      %v2763 = vld [vmem:[%s457 + $0xc8] sm:$0xff]
      %v2764 = vld [vmem:[%s457 + $0xd8] sm:$0xff]
      %v2765 = vld [vmem:[%s457 + $0xe0] sm:$0xff]
      %v2766 = vld [vmem:[%s457 + $0xf0] sm:$0xff]
      %v2767 = vld [vmem:[%s457 + $0xf8] sm:$0xff]
      %v2768 = vld [vmem:[%s457 + $0x108] sm:$0xff]
      %v2769 = vld [vmem:[%s457 + $0x110] sm:$0xff]
      %v2770 = vld [vmem:[%s457 + $0x120] sm:$0xff]
      %v2771 = vld [vmem:[%s457 + $0x128] sm:$0xff]
      %v2772 = vld [vmem:[%s457 + $0x138] sm:$0xff]
      %v2773 = vld [vmem:[%s457 + $0x140] sm:$0xff]
      %v2774 = vld [vmem:[%s457 + $0x150] sm:$0xff]
      %v2775 = vld [vmem:[%s457 + $0x158] sm:$0xff]
      %v2776 = vld [vmem:[%s457 + $0x168] sm:$0xff]
      %v2777 = vld [vmem:[%s457 + $0x170] sm:$0xff]
      %v2778 = vld [vmem:[%s457 + $0x1] sm:$0xff]
      %v2779 = vld [vmem:[%s457 + $0x9] sm:$0xff]
      %v2780 = vld [vmem:[%s457 + $0x19] sm:$0xff]
      %v2781 = vld [vmem:[%s457 + $0x21] sm:$0xff]
      %v2782 = vld [vmem:[%s457 + $0x31] sm:$0xff]
      %v2783 = vld [vmem:[%s457 + $0x39] sm:$0xff]
      %v2784 = vld [vmem:[%s457 + $0x49] sm:$0xff]
      %v2785 = vld [vmem:[%s457 + $0x51] sm:$0xff]
      %v2786 = vld [vmem:[%s457 + $0x61] sm:$0xff]
      %v2787 = vld [vmem:[%s457 + $0x69] sm:$0xff]
      %v2788 = vld [vmem:[%s457 + $0x79] sm:$0xff]
      %v2789 = vld [vmem:[%s457 + $0x81] sm:$0xff]
      %v2790 = vld [vmem:[%s457 + $0x91] sm:$0xff]
      %v2791 = vld [vmem:[%s457 + $0x99] sm:$0xff]
      %v2792 = vld [vmem:[%s457 + $0xa9] sm:$0xff]
      %v2793 = vld [vmem:[%s457 + $0xb1] sm:$0xff]
      %v2794 = vld [vmem:[%s457 + $0xc1] sm:$0xff]
      %v2795 = vld [vmem:[%s457 + $0xc9] sm:$0xff]
      %v2796 = vld [vmem:[%s457 + $0xd9] sm:$0xff]
      %v2797 = vld [vmem:[%s457 + $0xe1] sm:$0xff]
      %v2798 = vld [vmem:[%s457 + $0xf1] sm:$0xff]
      %v2799 = vld [vmem:[%s457 + $0xf9] sm:$0xff]
      %v2800 = vld [vmem:[%s457 + $0x109] sm:$0xff]
      %v2801 = vld [vmem:[%s457 + $0x111] sm:$0xff]
      %v2802 = vld [vmem:[%s457 + $0x121] sm:$0xff]
      %v2803 = vld [vmem:[%s457 + $0x129] sm:$0xff]
      %v2804 = vld [vmem:[%s457 + $0x139] sm:$0xff]
      %v2805 = vld [vmem:[%s457 + $0x141] sm:$0xff]
      %v2806 = vld [vmem:[%s457 + $0x151] sm:$0xff]
      %v2807 = vld [vmem:[%s457 + $0x159] sm:$0xff]
      %v2808 = vld [vmem:[%s457 + $0x169] sm:$0xff]
      %v2809 = vld [vmem:[%s457 + $0x171] sm:$0xff]
      %s2810 = scalar_lea.vmem [#allocation2], 48
      %v2811 = vld [vmem:[%s2810] sm:$0xff]
      %v2812 = vld [vmem:[%s2810 + $0x8] sm:$0xff]
      %v2813 = vld [vmem:[%s2810 + $0x18] sm:$0xff]
      %v2814 = vld [vmem:[%s2810 + $0x20] sm:$0xff]
      %v2815 = vld [vmem:[%s2810 + $0x30] sm:$0xff]
      %v2816 = vld [vmem:[%s2810 + $0x38] sm:$0xff]
      %v2817 = vld [vmem:[%s2810 + $0x48] sm:$0xff]
      %v2818 = vld [vmem:[%s2810 + $0x50] sm:$0xff]
      %v2819 = vld [vmem:[%s2810 + $0x60] sm:$0xff]
      %v2820 = vld [vmem:[%s2810 + $0x68] sm:$0xff]
      %v2821 = vld [vmem:[%s2810 + $0x78] sm:$0xff]
      %v2822 = vld [vmem:[%s2810 + $0x80] sm:$0xff]
      %v2823 = vld [vmem:[%s2810 + $0x90] sm:$0xff]
      %v2824 = vld [vmem:[%s2810 + $0x98] sm:$0xff]
      %v2825 = vld [vmem:[%s2810 + $0xa8] sm:$0xff]
      %v2826 = vld [vmem:[%s2810 + $0xb0] sm:$0xff]
      %v2827 = vld [vmem:[%s2810 + $0xc0] sm:$0xff]
      %v2828 = vld [vmem:[%s2810 + $0xc8] sm:$0xff]
      %v2829 = vld [vmem:[%s2810 + $0xd8] sm:$0xff]
      %v2830 = vld [vmem:[%s2810 + $0xe0] sm:$0xff]
      %v2831 = vld [vmem:[%s2810 + $0xf0] sm:$0xff]
      %v2832 = vld [vmem:[%s2810 + $0xf8] sm:$0xff]
      %v2833 = vld [vmem:[%s2810 + $0x108] sm:$0xff]
      %v2834 = vld [vmem:[%s2810 + $0x110] sm:$0xff]
      %v2835 = vld [vmem:[%s2810 + $0x120] sm:$0xff]
      %v2836 = vld [vmem:[%s2810 + $0x128] sm:$0xff]
      %v2837 = vld [vmem:[%s2810 + $0x138] sm:$0xff]
      %v2838 = vld [vmem:[%s2810 + $0x140] sm:$0xff]
      %v2839 = vld [vmem:[%s2810 + $0x150] sm:$0xff]
      %v2840 = vld [vmem:[%s2810 + $0x158] sm:$0xff]
      %v2841 = vld [vmem:[%s2810 + $0x168] sm:$0xff]
      %v2842 = vld [vmem:[%s2810 + $0x170] sm:$0xff]
      %v2843 = vld [vmem:[%s2810 + $0x1] sm:$0xff]
      %v2844 = vld [vmem:[%s2810 + $0x9] sm:$0xff]
      %v2845 = vld [vmem:[%s2810 + $0x19] sm:$0xff]
      %v2846 = vld [vmem:[%s2810 + $0x21] sm:$0xff]
      %v2847 = vld [vmem:[%s2810 + $0x31] sm:$0xff]
      %v2848 = vld [vmem:[%s2810 + $0x39] sm:$0xff]
      %v2849 = vld [vmem:[%s2810 + $0x49] sm:$0xff]
      %v2850 = vld [vmem:[%s2810 + $0x51] sm:$0xff]
      %v2851 = vld [vmem:[%s2810 + $0x61] sm:$0xff]
      %v2852 = vld [vmem:[%s2810 + $0x69] sm:$0xff]
      %v2853 = vld [vmem:[%s2810 + $0x79] sm:$0xff]
      %v2854 = vld [vmem:[%s2810 + $0x81] sm:$0xff]
      %v2855 = vld [vmem:[%s2810 + $0x91] sm:$0xff]
      %v2856 = vld [vmem:[%s2810 + $0x99] sm:$0xff]
      %v2857 = vld [vmem:[%s2810 + $0xa9] sm:$0xff]
      %v2858 = vld [vmem:[%s2810 + $0xb1] sm:$0xff]
      %v2859 = vld [vmem:[%s2810 + $0xc1] sm:$0xff]
      %v2860 = vld [vmem:[%s2810 + $0xc9] sm:$0xff]
      %v2861 = vld [vmem:[%s2810 + $0xd9] sm:$0xff]
      %v2862 = vld [vmem:[%s2810 + $0xe1] sm:$0xff]
      %v2863 = vld [vmem:[%s2810 + $0xf1] sm:$0xff]
      %v2864 = vld [vmem:[%s2810 + $0xf9] sm:$0xff]
      %v2865 = vld [vmem:[%s2810 + $0x109] sm:$0xff]
      %v2866 = vld [vmem:[%s2810 + $0x111] sm:$0xff]
      %v2867 = vld [vmem:[%s2810 + $0x121] sm:$0xff]
      %v2868 = vld [vmem:[%s2810 + $0x129] sm:$0xff]
      %v2869 = vld [vmem:[%s2810 + $0x139] sm:$0xff]
      %v2870 = vld [vmem:[%s2810 + $0x141] sm:$0xff]
      %v2871 = vld [vmem:[%s2810 + $0x151] sm:$0xff]
      %v2872 = vld [vmem:[%s2810 + $0x159] sm:$0xff]
      %v2873 = vld [vmem:[%s2810 + $0x169] sm:$0xff]
      %v2874 = vld [vmem:[%s2810 + $0x171] sm:$0xff]
      %s2875 = scalar_lea.vmem %s3, 32
      %v2876 = vld [vmem:[%s2875] sm:$0xf]
      %s2877 = scalar_lea.vmem %s3, 36
      %v2878 = vld [vmem:[%s2877] sm:$0xf]
      %v2880 = vsel %vm404, %v2778, 0
      %v2883 = vsel %vm404, %v2779, 0
      %v2886 = vsel %vm404, %v2780, 0
      %v2889 = vsel %vm404, %v2781, 0
      %v2892 = vsel %vm404, %v2782, 0
      %v2895 = vsel %vm404, %v2783, 0
      %v2898 = vsel %vm404, %v2784, 0
      %v2901 = vsel %vm404, %v2785, 0
      %v2904 = vsel %vm404, %v2786, 0
      %v2907 = vsel %vm404, %v2787, 0
      %v2910 = vsel %vm404, %v2788, 0
      %v2913 = vsel %vm404, %v2789, 0
      %v2916 = vsel %vm404, %v2790, 0
      %v2919 = vsel %vm404, %v2791, 0
      %v2922 = vsel %vm404, %v2792, 0
      %v2925 = vsel %vm404, %v2793, 0
      %v2928 = vsel %vm404, %v2794, 0
      %v2931 = vsel %vm404, %v2795, 0
      %v2934 = vsel %vm404, %v2796, 0
      %v2937 = vsel %vm404, %v2797, 0
      %v2940 = vsel %vm404, %v2798, 0
      %v2943 = vsel %vm404, %v2799, 0
      %v2946 = vsel %vm404, %v2800, 0
      %v2949 = vsel %vm404, %v2801, 0
      %v2952 = vsel %vm404, %v2802, 0
      %v2955 = vsel %vm404, %v2803, 0
      %v2958 = vsel %vm404, %v2804, 0
      %v2961 = vsel %vm404, %v2805, 0
      %v2964 = vsel %vm404, %v2806, 0
      %v2967 = vsel %vm404, %v2807, 0
      %v2970 = vsel %vm404, %v2808, 0
      %v2973 = vsel %vm404, %v2809, 0
      %v2976 = vsel %vm745, %v2878, 0
      %2978 = vmatpush.msra.mxu0 0.0
      %2979 = vmatpush.msra.mxu0 0.0
      %2980 = vmatpush.msra.mxu0 0.0
      %2981 = vmatpush.msra.mxu0 0.0
      %2982 = vmatpush.msra.mxu0 0.0
      %2983 = vmatpush.msra.mxu0 0.0
      %2984 = vmatpush.msra.mxu0 0.0
      %2985 = vmatpush.msra.mxu0 0.0
      %2986 = vmatpush.msra.mxu0 0.0
      %2987 = vmatpush.msra.mxu0 0.0
      %2988 = vmatpush.msra.mxu0 0.0
      %2989 = vmatpush.msra.mxu0 0.0
      %2990 = vmatpush.msra.mxu0 0.0
      %2991 = vmatpush.msra.mxu0 0.0
      %2992 = vmatpush.msra.mxu0 0.0
      %2993 = vmatpush.msra.mxu0 %v2976
      %2994 = vmatmul.f32.gmra.mxu0 %v2880
      %v2995 = vpop.f32.mrf.mxu0
      %v2996 = vadd.f32 0.0, %v2995
      %2997 = vmatmul.f32.gmra.mxu0 %v2883
      %v2998 = vpop.f32.mrf.mxu0
      %v2999 = vadd.f32 0.0, %v2998
      %3000 = vmatmul.f32.gmra.mxu0 %v2886
      %v3001 = vpop.f32.mrf.mxu0
      %v3002 = vadd.f32 0.0, %v3001
      %3003 = vmatmul.f32.gmra.mxu0 %v2889
      %v3004 = vpop.f32.mrf.mxu0
      %v3005 = vadd.f32 0.0, %v3004
      %3006 = vmatmul.f32.gmra.mxu0 %v2892
      %v3007 = vpop.f32.mrf.mxu0
      %v3008 = vadd.f32 0.0, %v3007
      %3009 = vmatmul.f32.gmra.mxu0 %v2895
      %v3010 = vpop.f32.mrf.mxu0
      %v3011 = vadd.f32 0.0, %v3010
      %3012 = vmatmul.f32.gmra.mxu0 %v2898
      %v3013 = vpop.f32.mrf.mxu0
      %v3014 = vadd.f32 0.0, %v3013
      %3015 = vmatmul.f32.gmra.mxu0 %v2901
      %v3016 = vpop.f32.mrf.mxu0
      %v3017 = vadd.f32 0.0, %v3016
      %3018 = vmatmul.f32.gmra.mxu0 %v2904
      %v3019 = vpop.f32.mrf.mxu0
      %v3020 = vadd.f32 0.0, %v3019
      %3021 = vmatmul.f32.gmra.mxu0 %v2907
      %v3022 = vpop.f32.mrf.mxu0
      %v3023 = vadd.f32 0.0, %v3022
      %3024 = vmatmul.f32.gmra.mxu0 %v2910
      %v3025 = vpop.f32.mrf.mxu0
      %v3026 = vadd.f32 0.0, %v3025
      %3027 = vmatmul.f32.gmra.mxu0 %v2913
      %v3028 = vpop.f32.mrf.mxu0
      %v3029 = vadd.f32 0.0, %v3028
      %3030 = vmatmul.f32.gmra.mxu0 %v2916
      %v3031 = vpop.f32.mrf.mxu0
      %v3032 = vadd.f32 0.0, %v3031
      %3033 = vmatmul.f32.gmra.mxu0 %v2919
      %v3034 = vpop.f32.mrf.mxu0
      %v3035 = vadd.f32 0.0, %v3034
      %3036 = vmatmul.f32.gmra.mxu0 %v2922
      %v3037 = vpop.f32.mrf.mxu0
      %v3038 = vadd.f32 0.0, %v3037
      %3039 = vmatmul.f32.gmra.mxu0 %v2925
      %v3040 = vpop.f32.mrf.mxu0
      %v3041 = vadd.f32 0.0, %v3040
      %3042 = vmatmul.f32.gmra.mxu0 %v2928
      %v3043 = vpop.f32.mrf.mxu0
      %v3044 = vadd.f32 0.0, %v3043
      %3045 = vmatmul.f32.gmra.mxu0 %v2931
      %v3046 = vpop.f32.mrf.mxu0
      %v3047 = vadd.f32 0.0, %v3046
      %3048 = vmatmul.f32.gmra.mxu0 %v2934
      %v3049 = vpop.f32.mrf.mxu0
      %v3050 = vadd.f32 0.0, %v3049
      %3051 = vmatmul.f32.gmra.mxu0 %v2937
      %v3052 = vpop.f32.mrf.mxu0
      %v3053 = vadd.f32 0.0, %v3052
      %3054 = vmatmul.f32.gmra.mxu0 %v2940
      %v3055 = vpop.f32.mrf.mxu0
      %v3056 = vadd.f32 0.0, %v3055
      %3057 = vmatmul.f32.gmra.mxu0 %v2943
      %v3058 = vpop.f32.mrf.mxu0
      %v3059 = vadd.f32 0.0, %v3058
      %3060 = vmatmul.f32.gmra.mxu0 %v2946
      %v3061 = vpop.f32.mrf.mxu0
      %v3062 = vadd.f32 0.0, %v3061
      %3063 = vmatmul.f32.gmra.mxu0 %v2949
      %v3064 = vpop.f32.mrf.mxu0
      %v3065 = vadd.f32 0.0, %v3064
      %3066 = vmatmul.f32.gmra.mxu0 %v2952
      %v3067 = vpop.f32.mrf.mxu0
      %v3068 = vadd.f32 0.0, %v3067
      %3069 = vmatmul.f32.gmra.mxu0 %v2955
      %v3070 = vpop.f32.mrf.mxu0
      %v3071 = vadd.f32 0.0, %v3070
      %3072 = vmatmul.f32.gmra.mxu0 %v2958
      %v3073 = vpop.f32.mrf.mxu0
      %v3074 = vadd.f32 0.0, %v3073
      %3075 = vmatmul.f32.gmra.mxu0 %v2961
      %v3076 = vpop.f32.mrf.mxu0
      %v3077 = vadd.f32 0.0, %v3076
      %3078 = vmatmul.f32.gmra.mxu0 %v2964
      %v3079 = vpop.f32.mrf.mxu0
      %v3080 = vadd.f32 0.0, %v3079
      %3081 = vmatmul.f32.gmra.mxu0 %v2967
      %v3082 = vpop.f32.mrf.mxu0
      %v3083 = vadd.f32 0.0, %v3082
      %3084 = vmatmul.f32.gmra.mxu0 %v2970
      %v3085 = vpop.f32.mrf.mxu0
      %v3086 = vadd.f32 0.0, %v3085
      %3087 = vmatmul.f32.gmra.mxu0 %v2973
      %v3088 = vpop.f32.mrf.mxu0
      %v3089 = vadd.f32 0.0, %v3088
      %3090 = vdwg.mxu0
      %v3092 = vsel %vm404, %v2746, 0
      %v3095 = vsel %vm404, %v2747, 0
      %v3098 = vsel %vm404, %v2748, 0
      %v3101 = vsel %vm404, %v2749, 0
      %v3104 = vsel %vm404, %v2750, 0
      %v3107 = vsel %vm404, %v2751, 0
      %v3110 = vsel %vm404, %v2752, 0
      %v3113 = vsel %vm404, %v2753, 0
      %v3116 = vsel %vm404, %v2754, 0
      %v3119 = vsel %vm404, %v2755, 0
      %v3122 = vsel %vm404, %v2756, 0
      %v3125 = vsel %vm404, %v2757, 0
      %v3128 = vsel %vm404, %v2758, 0
      %v3131 = vsel %vm404, %v2759, 0
      %v3134 = vsel %vm404, %v2760, 0
      %v3137 = vsel %vm404, %v2761, 0
      %v3140 = vsel %vm404, %v2762, 0
      %v3143 = vsel %vm404, %v2763, 0
      %v3146 = vsel %vm404, %v2764, 0
      %v3149 = vsel %vm404, %v2765, 0
      %v3152 = vsel %vm404, %v2766, 0
      %v3155 = vsel %vm404, %v2767, 0
      %v3158 = vsel %vm404, %v2768, 0
      %v3161 = vsel %vm404, %v2769, 0
      %v3164 = vsel %vm404, %v2770, 0
      %v3167 = vsel %vm404, %v2771, 0
      %v3170 = vsel %vm404, %v2772, 0
      %v3173 = vsel %vm404, %v2773, 0
      %v3176 = vsel %vm404, %v2774, 0
      %v3179 = vsel %vm404, %v2775, 0
      %v3182 = vsel %vm404, %v2776, 0
      %v3185 = vsel %vm404, %v2777, 0
      %v3188 = vsel %vm745, %v2876, 0
      %3190 = vmatpush.msra.mxu0 0.0
      %3191 = vmatpush.msra.mxu0 0.0
      %3192 = vmatpush.msra.mxu0 0.0
      %3193 = vmatpush.msra.mxu0 0.0
      %3194 = vmatpush.msra.mxu0 0.0
      %3195 = vmatpush.msra.mxu0 0.0
      %3196 = vmatpush.msra.mxu0 0.0
      %3197 = vmatpush.msra.mxu0 0.0
      %3198 = vmatpush.msra.mxu0 0.0
      %3199 = vmatpush.msra.mxu0 0.0
      %3200 = vmatpush.msra.mxu0 0.0
      %3201 = vmatpush.msra.mxu0 0.0
      %3202 = vmatpush.msra.mxu0 0.0
      %3203 = vmatpush.msra.mxu0 0.0
      %3204 = vmatpush.msra.mxu0 0.0
      %3205 = vmatpush.msra.mxu0 %v3188
      %3206 = vmatmul.f32.gmra.mxu0 %v3092
      %v3207 = vpop.f32.mrf.mxu0
      %v3208 = vadd.f32 %v2996, %v3207
      %3209 = vmatmul.f32.gmra.mxu0 %v3095
      %v3210 = vpop.f32.mrf.mxu0
      %v3211 = vadd.f32 %v2999, %v3210
      %3212 = vmatmul.f32.gmra.mxu0 %v3098
      %v3213 = vpop.f32.mrf.mxu0
      %v3214 = vadd.f32 %v3002, %v3213
      %3215 = vmatmul.f32.gmra.mxu0 %v3101
      %v3216 = vpop.f32.mrf.mxu0
      %v3217 = vadd.f32 %v3005, %v3216
      %3218 = vmatmul.f32.gmra.mxu0 %v3104
      %v3219 = vpop.f32.mrf.mxu0
      %v3220 = vadd.f32 %v3008, %v3219
      %3221 = vmatmul.f32.gmra.mxu0 %v3107
      %v3222 = vpop.f32.mrf.mxu0
      %v3223 = vadd.f32 %v3011, %v3222
      %3224 = vmatmul.f32.gmra.mxu0 %v3110
      %v3225 = vpop.f32.mrf.mxu0
      %v3226 = vadd.f32 %v3014, %v3225
      %3227 = vmatmul.f32.gmra.mxu0 %v3113
      %v3228 = vpop.f32.mrf.mxu0
      %v3229 = vadd.f32 %v3017, %v3228
      %3230 = vmatmul.f32.gmra.mxu0 %v3116
      %v3231 = vpop.f32.mrf.mxu0
      %v3232 = vadd.f32 %v3020, %v3231
      %3233 = vmatmul.f32.gmra.mxu0 %v3119
      %v3234 = vpop.f32.mrf.mxu0
      %v3235 = vadd.f32 %v3023, %v3234
      %3236 = vmatmul.f32.gmra.mxu0 %v3122
      %v3237 = vpop.f32.mrf.mxu0
      %v3238 = vadd.f32 %v3026, %v3237
      %3239 = vmatmul.f32.gmra.mxu0 %v3125
      %v3240 = vpop.f32.mrf.mxu0
      %v3241 = vadd.f32 %v3029, %v3240
      %3242 = vmatmul.f32.gmra.mxu0 %v3128
      %v3243 = vpop.f32.mrf.mxu0
      %v3244 = vadd.f32 %v3032, %v3243
      %3245 = vmatmul.f32.gmra.mxu0 %v3131
      %v3246 = vpop.f32.mrf.mxu0
      %v3247 = vadd.f32 %v3035, %v3246
      %3248 = vmatmul.f32.gmra.mxu0 %v3134
      %v3249 = vpop.f32.mrf.mxu0
      %v3250 = vadd.f32 %v3038, %v3249
      %3251 = vmatmul.f32.gmra.mxu0 %v3137
      %v3252 = vpop.f32.mrf.mxu0
      %v3253 = vadd.f32 %v3041, %v3252
      %3254 = vmatmul.f32.gmra.mxu0 %v3140
      %v3255 = vpop.f32.mrf.mxu0
      %v3256 = vadd.f32 %v3044, %v3255
      %3257 = vmatmul.f32.gmra.mxu0 %v3143
      %v3258 = vpop.f32.mrf.mxu0
      %v3259 = vadd.f32 %v3047, %v3258
      %3260 = vmatmul.f32.gmra.mxu0 %v3146
      %v3261 = vpop.f32.mrf.mxu0
      %v3262 = vadd.f32 %v3050, %v3261
      %3263 = vmatmul.f32.gmra.mxu0 %v3149
      %v3264 = vpop.f32.mrf.mxu0
      %v3265 = vadd.f32 %v3053, %v3264
      %3266 = vmatmul.f32.gmra.mxu0 %v3152
      %v3267 = vpop.f32.mrf.mxu0
      %v3268 = vadd.f32 %v3056, %v3267
      %3269 = vmatmul.f32.gmra.mxu0 %v3155
      %v3270 = vpop.f32.mrf.mxu0
      %v3271 = vadd.f32 %v3059, %v3270
      %3272 = vmatmul.f32.gmra.mxu0 %v3158
      %v3273 = vpop.f32.mrf.mxu0
      %v3274 = vadd.f32 %v3062, %v3273
      %3275 = vmatmul.f32.gmra.mxu0 %v3161
      %v3276 = vpop.f32.mrf.mxu0
      %v3277 = vadd.f32 %v3065, %v3276
      %3278 = vmatmul.f32.gmra.mxu0 %v3164
      %v3279 = vpop.f32.mrf.mxu0
      %v3280 = vadd.f32 %v3068, %v3279
      %3281 = vmatmul.f32.gmra.mxu0 %v3167
      %v3282 = vpop.f32.mrf.mxu0
      %v3283 = vadd.f32 %v3071, %v3282
      %3284 = vmatmul.f32.gmra.mxu0 %v3170
      %v3285 = vpop.f32.mrf.mxu0
      %v3286 = vadd.f32 %v3074, %v3285
      %3287 = vmatmul.f32.gmra.mxu0 %v3173
      %v3288 = vpop.f32.mrf.mxu0
      %v3289 = vadd.f32 %v3077, %v3288
      %3290 = vmatmul.f32.gmra.mxu0 %v3176
      %v3291 = vpop.f32.mrf.mxu0
      %v3292 = vadd.f32 %v3080, %v3291
      %3293 = vmatmul.f32.gmra.mxu0 %v3179
      %v3294 = vpop.f32.mrf.mxu0
      %v3295 = vadd.f32 %v3083, %v3294
      %3296 = vmatmul.f32.gmra.mxu0 %v3182
      %v3297 = vpop.f32.mrf.mxu0
      %v3298 = vadd.f32 %v3086, %v3297
      %3299 = vmatmul.f32.gmra.mxu0 %v3185
      %v3300 = vpop.f32.mrf.mxu0
      %v3301 = vadd.f32 %v3089, %v3300
      %3302 = vdwg.mxu0
      %s3303 = scalar_lea.vmem %s3, 40
      %v3304 = vld [vmem:[%s3303] sm:$0xf]
      %v3306 = vsel %vm404, %v2811, 0
      %v3309 = vsel %vm404, %v2812, 0
      %v3312 = vsel %vm404, %v2813, 0
      %v3315 = vsel %vm404, %v2814, 0
      %v3318 = vsel %vm404, %v2815, 0
      %v3321 = vsel %vm404, %v2816, 0
      %v3324 = vsel %vm404, %v2817, 0
      %v3327 = vsel %vm404, %v2818, 0
      %v3330 = vsel %vm404, %v2819, 0
      %v3333 = vsel %vm404, %v2820, 0
      %v3336 = vsel %vm404, %v2821, 0
      %v3339 = vsel %vm404, %v2822, 0
      %v3342 = vsel %vm404, %v2823, 0
      %v3345 = vsel %vm404, %v2824, 0
      %v3348 = vsel %vm404, %v2825, 0
      %v3351 = vsel %vm404, %v2826, 0
      %v3354 = vsel %vm404, %v2827, 0
      %v3357 = vsel %vm404, %v2828, 0
      %v3360 = vsel %vm404, %v2829, 0
      %v3363 = vsel %vm404, %v2830, 0
      %v3366 = vsel %vm404, %v2831, 0
      %v3369 = vsel %vm404, %v2832, 0
      %v3372 = vsel %vm404, %v2833, 0
      %v3375 = vsel %vm404, %v2834, 0
      %v3378 = vsel %vm404, %v2835, 0
      %v3381 = vsel %vm404, %v2836, 0
      %v3384 = vsel %vm404, %v2837, 0
      %v3387 = vsel %vm404, %v2838, 0
      %v3390 = vsel %vm404, %v2839, 0
      %v3393 = vsel %vm404, %v2840, 0
      %v3396 = vsel %vm404, %v2841, 0
      %v3399 = vsel %vm404, %v2842, 0
      %v3402 = vsel %vm745, %v3304, 0
      %3404 = vmatpush.msra.mxu0 0.0
      %3405 = vmatpush.msra.mxu0 0.0
      %3406 = vmatpush.msra.mxu0 0.0
      %3407 = vmatpush.msra.mxu0 0.0
      %3408 = vmatpush.msra.mxu0 0.0
      %3409 = vmatpush.msra.mxu0 0.0
      %3410 = vmatpush.msra.mxu0 0.0
      %3411 = vmatpush.msra.mxu0 0.0
      %3412 = vmatpush.msra.mxu0 0.0
      %3413 = vmatpush.msra.mxu0 0.0
      %3414 = vmatpush.msra.mxu0 0.0
      %3415 = vmatpush.msra.mxu0 0.0
      %3416 = vmatpush.msra.mxu0 0.0
      %3417 = vmatpush.msra.mxu0 0.0
      %3418 = vmatpush.msra.mxu0 0.0
      %3419 = vmatpush.msra.mxu0 %v3402
      %3420 = vmatmul.f32.gmra.mxu0 %v3306
      %v3421 = vpop.f32.mrf.mxu0
      %v3422 = vadd.f32 0.0, %v3421
      %3423 = vmatmul.f32.gmra.mxu0 %v3309
      %v3424 = vpop.f32.mrf.mxu0
      %v3425 = vadd.f32 0.0, %v3424
      %3426 = vmatmul.f32.gmra.mxu0 %v3312
      %v3427 = vpop.f32.mrf.mxu0
      %v3428 = vadd.f32 0.0, %v3427
      %3429 = vmatmul.f32.gmra.mxu0 %v3315
      %v3430 = vpop.f32.mrf.mxu0
      %v3431 = vadd.f32 0.0, %v3430
      %3432 = vmatmul.f32.gmra.mxu0 %v3318
      %v3433 = vpop.f32.mrf.mxu0
      %v3434 = vadd.f32 0.0, %v3433
      %3435 = vmatmul.f32.gmra.mxu0 %v3321
      %v3436 = vpop.f32.mrf.mxu0
      %v3437 = vadd.f32 0.0, %v3436
      %3438 = vmatmul.f32.gmra.mxu0 %v3324
      %v3439 = vpop.f32.mrf.mxu0
      %v3440 = vadd.f32 0.0, %v3439
      %3441 = vmatmul.f32.gmra.mxu0 %v3327
      %v3442 = vpop.f32.mrf.mxu0
      %v3443 = vadd.f32 0.0, %v3442
      %3444 = vmatmul.f32.gmra.mxu0 %v3330
      %v3445 = vpop.f32.mrf.mxu0
      %v3446 = vadd.f32 0.0, %v3445
      %3447 = vmatmul.f32.gmra.mxu0 %v3333
      %v3448 = vpop.f32.mrf.mxu0
      %v3449 = vadd.f32 0.0, %v3448
      %3450 = vmatmul.f32.gmra.mxu0 %v3336
      %v3451 = vpop.f32.mrf.mxu0
      %v3452 = vadd.f32 0.0, %v3451
      %3453 = vmatmul.f32.gmra.mxu0 %v3339
      %v3454 = vpop.f32.mrf.mxu0
      %v3455 = vadd.f32 0.0, %v3454
      %3456 = vmatmul.f32.gmra.mxu0 %v3342
      %v3457 = vpop.f32.mrf.mxu0
      %v3458 = vadd.f32 0.0, %v3457
      %3459 = vmatmul.f32.gmra.mxu0 %v3345
      %v3460 = vpop.f32.mrf.mxu0
      %v3461 = vadd.f32 0.0, %v3460
      %3462 = vmatmul.f32.gmra.mxu0 %v3348
      %v3463 = vpop.f32.mrf.mxu0
      %v3464 = vadd.f32 0.0, %v3463
      %3465 = vmatmul.f32.gmra.mxu0 %v3351
      %v3466 = vpop.f32.mrf.mxu0
      %v3467 = vadd.f32 0.0, %v3466
      %3468 = vmatmul.f32.gmra.mxu0 %v3354
      %v3469 = vpop.f32.mrf.mxu0
      %v3470 = vadd.f32 0.0, %v3469
      %3471 = vmatmul.f32.gmra.mxu0 %v3357
      %v3472 = vpop.f32.mrf.mxu0
      %v3473 = vadd.f32 0.0, %v3472
      %3474 = vmatmul.f32.gmra.mxu0 %v3360
      %v3475 = vpop.f32.mrf.mxu0
      %v3476 = vadd.f32 0.0, %v3475
      %3477 = vmatmul.f32.gmra.mxu0 %v3363
      %v3478 = vpop.f32.mrf.mxu0
      %v3479 = vadd.f32 0.0, %v3478
      %3480 = vmatmul.f32.gmra.mxu0 %v3366
      %v3481 = vpop.f32.mrf.mxu0
      %v3482 = vadd.f32 0.0, %v3481
      %3483 = vmatmul.f32.gmra.mxu0 %v3369
      %v3484 = vpop.f32.mrf.mxu0
      %v3485 = vadd.f32 0.0, %v3484
      %3486 = vmatmul.f32.gmra.mxu0 %v3372
      %v3487 = vpop.f32.mrf.mxu0
      %v3488 = vadd.f32 0.0, %v3487
      %3489 = vmatmul.f32.gmra.mxu0 %v3375
      %v3490 = vpop.f32.mrf.mxu0
      %v3491 = vadd.f32 0.0, %v3490
      %3492 = vmatmul.f32.gmra.mxu0 %v3378
      %v3493 = vpop.f32.mrf.mxu0
      %v3494 = vadd.f32 0.0, %v3493
      %3495 = vmatmul.f32.gmra.mxu0 %v3381
      %v3496 = vpop.f32.mrf.mxu0
      %v3497 = vadd.f32 0.0, %v3496
      %3498 = vmatmul.f32.gmra.mxu0 %v3384
      %v3499 = vpop.f32.mrf.mxu0
      %v3500 = vadd.f32 0.0, %v3499
      %3501 = vmatmul.f32.gmra.mxu0 %v3387
      %v3502 = vpop.f32.mrf.mxu0
      %v3503 = vadd.f32 0.0, %v3502
      %3504 = vmatmul.f32.gmra.mxu0 %v3390
      %v3505 = vpop.f32.mrf.mxu0
      %v3506 = vadd.f32 0.0, %v3505
      %3507 = vmatmul.f32.gmra.mxu0 %v3393
      %v3508 = vpop.f32.mrf.mxu0
      %v3509 = vadd.f32 0.0, %v3508
      %3510 = vmatmul.f32.gmra.mxu0 %v3396
      %v3511 = vpop.f32.mrf.mxu0
      %v3512 = vadd.f32 0.0, %v3511
      %3513 = vmatmul.f32.gmra.mxu0 %v3399
      %v3514 = vpop.f32.mrf.mxu0
      %v3515 = vadd.f32 0.0, %v3514
      %3516 = vdwg.mxu0
      %v3517 = vadd.f32 %v3208, %v3422
      %v3518 = vadd.f32 %v3211, %v3425
      %v3519 = vadd.f32 %v3214, %v3428
      %v3520 = vadd.f32 %v3217, %v3431
      %v3521 = vadd.f32 %v3220, %v3434
      %v3522 = vadd.f32 %v3223, %v3437
      %v3523 = vadd.f32 %v3226, %v3440
      %v3524 = vadd.f32 %v3229, %v3443
      %v3525 = vadd.f32 %v3232, %v3446
      %v3526 = vadd.f32 %v3235, %v3449
      %v3527 = vadd.f32 %v3238, %v3452
      %v3528 = vadd.f32 %v3241, %v3455
      %v3529 = vadd.f32 %v3244, %v3458
      %v3530 = vadd.f32 %v3247, %v3461
      %v3531 = vadd.f32 %v3250, %v3464
      %v3532 = vadd.f32 %v3253, %v3467
      %v3533 = vadd.f32 %v3256, %v3470
      %v3534 = vadd.f32 %v3259, %v3473
      %v3535 = vadd.f32 %v3262, %v3476
      %v3536 = vadd.f32 %v3265, %v3479
      %v3537 = vadd.f32 %v3268, %v3482
      %v3538 = vadd.f32 %v3271, %v3485
      %v3539 = vadd.f32 %v3274, %v3488
      %v3540 = vadd.f32 %v3277, %v3491
      %v3541 = vadd.f32 %v3280, %v3494
      %v3542 = vadd.f32 %v3283, %v3497
      %v3543 = vadd.f32 %v3286, %v3500
      %v3544 = vadd.f32 %v3289, %v3503
      %v3545 = vadd.f32 %v3292, %v3506
      %v3546 = vadd.f32 %v3295, %v3509
      %v3547 = vadd.f32 %v3298, %v3512
      %v3548 = vadd.f32 %v3301, %v3515
      %s3549 = scalar_lea.vmem %s3, 44
      %v3550 = vld [vmem:[%s3549] sm:$0xf]
      %v3552 = vsel %vm404, %v2843, 0
      %v3555 = vsel %vm404, %v2844, 0
      %v3558 = vsel %vm404, %v2845, 0
      %v3561 = vsel %vm404, %v2846, 0
      %v3564 = vsel %vm404, %v2847, 0
      %v3567 = vsel %vm404, %v2848, 0
      %v3570 = vsel %vm404, %v2849, 0
      %v3573 = vsel %vm404, %v2850, 0
      %v3576 = vsel %vm404, %v2851, 0
      %v3579 = vsel %vm404, %v2852, 0
      %v3582 = vsel %vm404, %v2853, 0
      %v3585 = vsel %vm404, %v2854, 0
      %v3588 = vsel %vm404, %v2855, 0
      %v3591 = vsel %vm404, %v2856, 0
      %v3594 = vsel %vm404, %v2857, 0
      %v3597 = vsel %vm404, %v2858, 0
      %v3600 = vsel %vm404, %v2859, 0
      %v3603 = vsel %vm404, %v2860, 0
      %v3606 = vsel %vm404, %v2861, 0
      %v3609 = vsel %vm404, %v2862, 0
      %v3612 = vsel %vm404, %v2863, 0
      %v3615 = vsel %vm404, %v2864, 0
      %v3618 = vsel %vm404, %v2865, 0
      %v3621 = vsel %vm404, %v2866, 0
      %v3624 = vsel %vm404, %v2867, 0
      %v3627 = vsel %vm404, %v2868, 0
      %v3630 = vsel %vm404, %v2869, 0
      %v3633 = vsel %vm404, %v2870, 0
      %v3636 = vsel %vm404, %v2871, 0
      %v3639 = vsel %vm404, %v2872, 0
      %v3642 = vsel %vm404, %v2873, 0
      %v3645 = vsel %vm404, %v2874, 0
      %v3648 = vsel %vm745, %v3550, 0
      %3650 = vmatpush.msra.mxu0 0.0
      %3651 = vmatpush.msra.mxu0 0.0
      %3652 = vmatpush.msra.mxu0 0.0
      %3653 = vmatpush.msra.mxu0 0.0
      %3654 = vmatpush.msra.mxu0 0.0
      %3655 = vmatpush.msra.mxu0 0.0
      %3656 = vmatpush.msra.mxu0 0.0
      %3657 = vmatpush.msra.mxu0 0.0
      %3658 = vmatpush.msra.mxu0 0.0
      %3659 = vmatpush.msra.mxu0 0.0
      %3660 = vmatpush.msra.mxu0 0.0
      %3661 = vmatpush.msra.mxu0 0.0
      %3662 = vmatpush.msra.mxu0 0.0
      %3663 = vmatpush.msra.mxu0 0.0
      %3664 = vmatpush.msra.mxu0 0.0
      %3665 = vmatpush.msra.mxu0 %v3648
      %3666 = vmatmul.f32.gmra.mxu0 %v3552
      %v3667 = vpop.f32.mrf.mxu0
      %v3668 = vadd.f32 0.0, %v3667
      %3669 = vmatmul.f32.gmra.mxu0 %v3555
      %v3670 = vpop.f32.mrf.mxu0
      %v3671 = vadd.f32 0.0, %v3670
      %3672 = vmatmul.f32.gmra.mxu0 %v3558
      %v3673 = vpop.f32.mrf.mxu0
      %v3674 = vadd.f32 0.0, %v3673
      %3675 = vmatmul.f32.gmra.mxu0 %v3561
      %v3676 = vpop.f32.mrf.mxu0
      %v3677 = vadd.f32 0.0, %v3676
      %3678 = vmatmul.f32.gmra.mxu0 %v3564
      %v3679 = vpop.f32.mrf.mxu0
      %v3680 = vadd.f32 0.0, %v3679
      %3681 = vmatmul.f32.gmra.mxu0 %v3567
      %v3682 = vpop.f32.mrf.mxu0
      %v3683 = vadd.f32 0.0, %v3682
      %3684 = vmatmul.f32.gmra.mxu0 %v3570
      %v3685 = vpop.f32.mrf.mxu0
      %v3686 = vadd.f32 0.0, %v3685
      %3687 = vmatmul.f32.gmra.mxu0 %v3573
      %v3688 = vpop.f32.mrf.mxu0
      %v3689 = vadd.f32 0.0, %v3688
      %3690 = vmatmul.f32.gmra.mxu0 %v3576
      %v3691 = vpop.f32.mrf.mxu0
      %v3692 = vadd.f32 0.0, %v3691
      %3693 = vmatmul.f32.gmra.mxu0 %v3579
      %v3694 = vpop.f32.mrf.mxu0
      %v3695 = vadd.f32 0.0, %v3694
      %3696 = vmatmul.f32.gmra.mxu0 %v3582
      %v3697 = vpop.f32.mrf.mxu0
      %v3698 = vadd.f32 0.0, %v3697
      %3699 = vmatmul.f32.gmra.mxu0 %v3585
      %v3700 = vpop.f32.mrf.mxu0
      %v3701 = vadd.f32 0.0, %v3700
      %3702 = vmatmul.f32.gmra.mxu0 %v3588
      %v3703 = vpop.f32.mrf.mxu0
      %v3704 = vadd.f32 0.0, %v3703
      %3705 = vmatmul.f32.gmra.mxu0 %v3591
      %v3706 = vpop.f32.mrf.mxu0
      %v3707 = vadd.f32 0.0, %v3706
      %3708 = vmatmul.f32.gmra.mxu0 %v3594
      %v3709 = vpop.f32.mrf.mxu0
      %v3710 = vadd.f32 0.0, %v3709
      %3711 = vmatmul.f32.gmra.mxu0 %v3597
      %v3712 = vpop.f32.mrf.mxu0
      %v3713 = vadd.f32 0.0, %v3712
      %3714 = vmatmul.f32.gmra.mxu0 %v3600
      %v3715 = vpop.f32.mrf.mxu0
      %v3716 = vadd.f32 0.0, %v3715
      %3717 = vmatmul.f32.gmra.mxu0 %v3603
      %v3718 = vpop.f32.mrf.mxu0
      %v3719 = vadd.f32 0.0, %v3718
      %3720 = vmatmul.f32.gmra.mxu0 %v3606
      %v3721 = vpop.f32.mrf.mxu0
      %v3722 = vadd.f32 0.0, %v3721
      %3723 = vmatmul.f32.gmra.mxu0 %v3609
      %v3724 = vpop.f32.mrf.mxu0
      %v3725 = vadd.f32 0.0, %v3724
      %3726 = vmatmul.f32.gmra.mxu0 %v3612
      %v3727 = vpop.f32.mrf.mxu0
      %v3728 = vadd.f32 0.0, %v3727
      %3729 = vmatmul.f32.gmra.mxu0 %v3615
      %v3730 = vpop.f32.mrf.mxu0
      %v3731 = vadd.f32 0.0, %v3730
      %3732 = vmatmul.f32.gmra.mxu0 %v3618
      %v3733 = vpop.f32.mrf.mxu0
      %v3734 = vadd.f32 0.0, %v3733
      %3735 = vmatmul.f32.gmra.mxu0 %v3621
      %v3736 = vpop.f32.mrf.mxu0
      %v3737 = vadd.f32 0.0, %v3736
      %3738 = vmatmul.f32.gmra.mxu0 %v3624
      %v3739 = vpop.f32.mrf.mxu0
      %v3740 = vadd.f32 0.0, %v3739
      %3741 = vmatmul.f32.gmra.mxu0 %v3627
      %v3742 = vpop.f32.mrf.mxu0
      %v3743 = vadd.f32 0.0, %v3742
      %3744 = vmatmul.f32.gmra.mxu0 %v3630
      %v3745 = vpop.f32.mrf.mxu0
      %v3746 = vadd.f32 0.0, %v3745
      %3747 = vmatmul.f32.gmra.mxu0 %v3633
      %v3748 = vpop.f32.mrf.mxu0
      %v3749 = vadd.f32 0.0, %v3748
      %3750 = vmatmul.f32.gmra.mxu0 %v3636
      %v3751 = vpop.f32.mrf.mxu0
      %v3752 = vadd.f32 0.0, %v3751
      %3753 = vmatmul.f32.gmra.mxu0 %v3639
      %v3754 = vpop.f32.mrf.mxu0
      %v3755 = vadd.f32 0.0, %v3754
      %3756 = vmatmul.f32.gmra.mxu0 %v3642
      %v3757 = vpop.f32.mrf.mxu0
      %v3758 = vadd.f32 0.0, %v3757
      %3759 = vmatmul.f32.gmra.mxu0 %v3645
      %v3760 = vpop.f32.mrf.mxu0
      %v3761 = vadd.f32 0.0, %v3760
      %3762 = vdwg.mxu0
      %v3763 = vadd.f32 %v3517, %v3668
      %v3764 = vadd.f32 %v3518, %v3671
      %v3765 = vadd.f32 %v3519, %v3674
      %v3766 = vadd.f32 %v3520, %v3677
      %v3767 = vadd.f32 %v3521, %v3680
      %v3768 = vadd.f32 %v3522, %v3683
      %v3769 = vadd.f32 %v3523, %v3686
      %v3770 = vadd.f32 %v3524, %v3689
      %v3771 = vadd.f32 %v3525, %v3692
      %v3772 = vadd.f32 %v3526, %v3695
      %v3773 = vadd.f32 %v3527, %v3698
      %v3774 = vadd.f32 %v3528, %v3701
      %v3775 = vadd.f32 %v3529, %v3704
      %v3776 = vadd.f32 %v3530, %v3707
      %v3777 = vadd.f32 %v3531, %v3710
      %v3778 = vadd.f32 %v3532, %v3713
      %v3779 = vadd.f32 %v3533, %v3716
      %v3780 = vadd.f32 %v3534, %v3719
      %v3781 = vadd.f32 %v3535, %v3722
      %v3782 = vadd.f32 %v3536, %v3725
      %v3783 = vadd.f32 %v3537, %v3728
      %v3784 = vadd.f32 %v3538, %v3731
      %v3785 = vadd.f32 %v3539, %v3734
      %v3786 = vadd.f32 %v3540, %v3737
      %v3787 = vadd.f32 %v3541, %v3740
      %v3788 = vadd.f32 %v3542, %v3743
      %v3789 = vadd.f32 %v3543, %v3746
      %v3790 = vadd.f32 %v3544, %v3749
      %v3791 = vadd.f32 %v3545, %v3752
      %v3792 = vadd.f32 %v3546, %v3755
      %v3793 = vadd.f32 %v3547, %v3758
      %v3794 = vadd.f32 %v3548, %v3761
      %v3795 = vadd.f32 %v3763, %v1567
      %v3796 = vadd.f32 %v3764, %v1567
      %v3797 = vadd.f32 %v3765, %v1567
      %v3798 = vadd.f32 %v3766, %v1567
      %v3799 = vadd.f32 %v3767, %v1567
      %v3800 = vadd.f32 %v3768, %v1567
      %v3801 = vadd.f32 %v3769, %v1567
      %v3802 = vadd.f32 %v3770, %v1567
      %v3803 = vadd.f32 %v3771, %v1567
      %v3804 = vadd.f32 %v3772, %v1567
      %v3805 = vadd.f32 %v3773, %v1567
      %v3806 = vadd.f32 %v3774, %v1567
      %v3807 = vadd.f32 %v3775, %v1567
      %v3808 = vadd.f32 %v3776, %v1567
      %v3809 = vadd.f32 %v3777, %v1567
      %v3810 = vadd.f32 %v3778, %v1567
      %v3811 = vadd.f32 %v3779, %v1567
      %v3812 = vadd.f32 %v3780, %v1567
      %v3813 = vadd.f32 %v3781, %v1567
      %v3814 = vadd.f32 %v3782, %v1567
      %v3815 = vadd.f32 %v3783, %v1567
      %v3816 = vadd.f32 %v3784, %v1567
      %v3817 = vadd.f32 %v3785, %v1567
      %v3818 = vadd.f32 %v3786, %v1567
      %v3819 = vadd.f32 %v3787, %v1567
      %v3820 = vadd.f32 %v3788, %v1567
      %v3821 = vadd.f32 %v3789, %v1567
      %v3822 = vadd.f32 %v3790, %v1567
      %v3823 = vadd.f32 %v3791, %v1567
      %v3824 = vadd.f32 %v3792, %v1567
      %v3825 = vadd.f32 %v3793, %v1567
      %v3826 = vadd.f32 %v3794, %v1567
      %s3827 = scalar_lea.vmem %s391, 512
      %3828 = vst.msk [vmem:[%s3827] sm:$0xff] %vm404, %v3795
      %3829 = vst.msk [vmem:[%s3827 + $0x8] sm:$0xff] %vm404, %v3796
      %3830 = vst.msk [vmem:[%s3827 + $0x10] sm:$0xff] %vm404, %v3797
      %3831 = vst.msk [vmem:[%s3827 + $0x18] sm:$0xff] %vm404, %v3798
      %3832 = vst.msk [vmem:[%s3827 + $0x20] sm:$0xff] %vm404, %v3799
      %3833 = vst.msk [vmem:[%s3827 + $0x28] sm:$0xff] %vm404, %v3800
      %3834 = vst.msk [vmem:[%s3827 + $0x30] sm:$0xff] %vm404, %v3801
      %3835 = vst.msk [vmem:[%s3827 + $0x38] sm:$0xff] %vm404, %v3802
      %3836 = vst.msk [vmem:[%s3827 + $0x40] sm:$0xff] %vm404, %v3803
      %3837 = vst.msk [vmem:[%s3827 + $0x48] sm:$0xff] %vm404, %v3804
      %3838 = vst.msk [vmem:[%s3827 + $0x50] sm:$0xff] %vm404, %v3805
      %3839 = vst.msk [vmem:[%s3827 + $0x58] sm:$0xff] %vm404, %v3806
      %3840 = vst.msk [vmem:[%s3827 + $0x60] sm:$0xff] %vm404, %v3807
      %3841 = vst.msk [vmem:[%s3827 + $0x68] sm:$0xff] %vm404, %v3808
      %3842 = vst.msk [vmem:[%s3827 + $0x70] sm:$0xff] %vm404, %v3809
      %3843 = vst.msk [vmem:[%s3827 + $0x78] sm:$0xff] %vm404, %v3810
      %3844 = vst.msk [vmem:[%s3827 + $0x80] sm:$0xff] %vm404, %v3811
      %3845 = vst.msk [vmem:[%s3827 + $0x88] sm:$0xff] %vm404, %v3812
      %3846 = vst.msk [vmem:[%s3827 + $0x90] sm:$0xff] %vm404, %v3813
      %3847 = vst.msk [vmem:[%s3827 + $0x98] sm:$0xff] %vm404, %v3814
      %3848 = vst.msk [vmem:[%s3827 + $0xa0] sm:$0xff] %vm404, %v3815
      %3849 = vst.msk [vmem:[%s3827 + $0xa8] sm:$0xff] %vm404, %v3816
      %3850 = vst.msk [vmem:[%s3827 + $0xb0] sm:$0xff] %vm404, %v3817
      %3851 = vst.msk [vmem:[%s3827 + $0xb8] sm:$0xff] %vm404, %v3818
      %3852 = vst.msk [vmem:[%s3827 + $0xc0] sm:$0xff] %vm404, %v3819
      %3853 = vst.msk [vmem:[%s3827 + $0xc8] sm:$0xff] %vm404, %v3820
      %3854 = vst.msk [vmem:[%s3827 + $0xd0] sm:$0xff] %vm404, %v3821
      %3855 = vst.msk [vmem:[%s3827 + $0xd8] sm:$0xff] %vm404, %v3822
      %3856 = vst.msk [vmem:[%s3827 + $0xe0] sm:$0xff] %vm404, %v3823
      %3857 = vst.msk [vmem:[%s3827 + $0xe8] sm:$0xff] %vm404, %v3824
      %3858 = vst.msk [vmem:[%s3827 + $0xf0] sm:$0xff] %vm404, %v3825
      %3859 = vst.msk [vmem:[%s3827 + $0xf8] sm:$0xff] %vm404, %v3826
      %v3860 = vld [vmem:[%s457 + $0x1] sm:$0xff]
      %v3861 = vld [vmem:[%s457 + $0x9] sm:$0xff]
      %v3862 = vld [vmem:[%s457 + $0x19] sm:$0xff]
      %v3863 = vld [vmem:[%s457 + $0x21] sm:$0xff]
      %v3864 = vld [vmem:[%s457 + $0x31] sm:$0xff]
      %v3865 = vld [vmem:[%s457 + $0x39] sm:$0xff]
      %v3866 = vld [vmem:[%s457 + $0x49] sm:$0xff]
      %v3867 = vld [vmem:[%s457 + $0x51] sm:$0xff]
      %v3868 = vld [vmem:[%s457 + $0x61] sm:$0xff]
      %v3869 = vld [vmem:[%s457 + $0x69] sm:$0xff]
      %v3870 = vld [vmem:[%s457 + $0x79] sm:$0xff]
      %v3871 = vld [vmem:[%s457 + $0x81] sm:$0xff]
      %v3872 = vld [vmem:[%s457 + $0x91] sm:$0xff]
      %v3873 = vld [vmem:[%s457 + $0x99] sm:$0xff]
      %v3874 = vld [vmem:[%s457 + $0xa9] sm:$0xff]
      %v3875 = vld [vmem:[%s457 + $0xb1] sm:$0xff]
      %v3876 = vld [vmem:[%s457 + $0xc1] sm:$0xff]
      %v3877 = vld [vmem:[%s457 + $0xc9] sm:$0xff]
      %v3878 = vld [vmem:[%s457 + $0xd9] sm:$0xff]
      %v3879 = vld [vmem:[%s457 + $0xe1] sm:$0xff]
      %v3880 = vld [vmem:[%s457 + $0xf1] sm:$0xff]
      %v3881 = vld [vmem:[%s457 + $0xf9] sm:$0xff]
      %v3882 = vld [vmem:[%s457 + $0x109] sm:$0xff]
      %v3883 = vld [vmem:[%s457 + $0x111] sm:$0xff]
      %v3884 = vld [vmem:[%s457 + $0x121] sm:$0xff]
      %v3885 = vld [vmem:[%s457 + $0x129] sm:$0xff]
      %v3886 = vld [vmem:[%s457 + $0x139] sm:$0xff]
      %v3887 = vld [vmem:[%s457 + $0x141] sm:$0xff]
      %v3888 = vld [vmem:[%s457 + $0x151] sm:$0xff]
      %v3889 = vld [vmem:[%s457 + $0x159] sm:$0xff]
      %v3890 = vld [vmem:[%s457 + $0x169] sm:$0xff]
      %v3891 = vld [vmem:[%s457 + $0x171] sm:$0xff]
      %v3892 = vld [vmem:[%s457 + $0x2] sm:$0xff]
      %v3893 = vld [vmem:[%s457 + $0xa] sm:$0xff]
      %v3894 = vld [vmem:[%s457 + $0x1a] sm:$0xff]
      %v3895 = vld [vmem:[%s457 + $0x22] sm:$0xff]
      %v3896 = vld [vmem:[%s457 + $0x32] sm:$0xff]
      %v3897 = vld [vmem:[%s457 + $0x3a] sm:$0xff]
      %v3898 = vld [vmem:[%s457 + $0x4a] sm:$0xff]
      %v3899 = vld [vmem:[%s457 + $0x52] sm:$0xff]
      %v3900 = vld [vmem:[%s457 + $0x62] sm:$0xff]
      %v3901 = vld [vmem:[%s457 + $0x6a] sm:$0xff]
      %v3902 = vld [vmem:[%s457 + $0x7a] sm:$0xff]
      %v3903 = vld [vmem:[%s457 + $0x82] sm:$0xff]
      %v3904 = vld [vmem:[%s457 + $0x92] sm:$0xff]
      %v3905 = vld [vmem:[%s457 + $0x9a] sm:$0xff]
      %v3906 = vld [vmem:[%s457 + $0xaa] sm:$0xff]
      %v3907 = vld [vmem:[%s457 + $0xb2] sm:$0xff]
      %v3908 = vld [vmem:[%s457 + $0xc2] sm:$0xff]
      %v3909 = vld [vmem:[%s457 + $0xca] sm:$0xff]
      %v3910 = vld [vmem:[%s457 + $0xda] sm:$0xff]
      %v3911 = vld [vmem:[%s457 + $0xe2] sm:$0xff]
      %v3912 = vld [vmem:[%s457 + $0xf2] sm:$0xff]
      %v3913 = vld [vmem:[%s457 + $0xfa] sm:$0xff]
      %v3914 = vld [vmem:[%s457 + $0x10a] sm:$0xff]
      %v3915 = vld [vmem:[%s457 + $0x112] sm:$0xff]
      %v3916 = vld [vmem:[%s457 + $0x122] sm:$0xff]
      %v3917 = vld [vmem:[%s457 + $0x12a] sm:$0xff]
      %v3918 = vld [vmem:[%s457 + $0x13a] sm:$0xff]
      %v3919 = vld [vmem:[%s457 + $0x142] sm:$0xff]
      %v3920 = vld [vmem:[%s457 + $0x152] sm:$0xff]
      %v3921 = vld [vmem:[%s457 + $0x15a] sm:$0xff]
      %v3922 = vld [vmem:[%s457 + $0x16a] sm:$0xff]
      %v3923 = vld [vmem:[%s457 + $0x172] sm:$0xff]
      %v3924 = vld [vmem:[%s2810 + $0x1] sm:$0xff]
      %v3925 = vld [vmem:[%s2810 + $0x9] sm:$0xff]
      %v3926 = vld [vmem:[%s2810 + $0x19] sm:$0xff]
      %v3927 = vld [vmem:[%s2810 + $0x21] sm:$0xff]
      %v3928 = vld [vmem:[%s2810 + $0x31] sm:$0xff]
      %v3929 = vld [vmem:[%s2810 + $0x39] sm:$0xff]
      %v3930 = vld [vmem:[%s2810 + $0x49] sm:$0xff]
      %v3931 = vld [vmem:[%s2810 + $0x51] sm:$0xff]
      %v3932 = vld [vmem:[%s2810 + $0x61] sm:$0xff]
      %v3933 = vld [vmem:[%s2810 + $0x69] sm:$0xff]
      %v3934 = vld [vmem:[%s2810 + $0x79] sm:$0xff]
      %v3935 = vld [vmem:[%s2810 + $0x81] sm:$0xff]
      %v3936 = vld [vmem:[%s2810 + $0x91] sm:$0xff]
      %v3937 = vld [vmem:[%s2810 + $0x99] sm:$0xff]
      %v3938 = vld [vmem:[%s2810 + $0xa9] sm:$0xff]
      %v3939 = vld [vmem:[%s2810 + $0xb1] sm:$0xff]
      %v3940 = vld [vmem:[%s2810 + $0xc1] sm:$0xff]
      %v3941 = vld [vmem:[%s2810 + $0xc9] sm:$0xff]
      %v3942 = vld [vmem:[%s2810 + $0xd9] sm:$0xff]
      %v3943 = vld [vmem:[%s2810 + $0xe1] sm:$0xff]
      %v3944 = vld [vmem:[%s2810 + $0xf1] sm:$0xff]
      %v3945 = vld [vmem:[%s2810 + $0xf9] sm:$0xff]
      %v3946 = vld [vmem:[%s2810 + $0x109] sm:$0xff]
      %v3947 = vld [vmem:[%s2810 + $0x111] sm:$0xff]
      %v3948 = vld [vmem:[%s2810 + $0x121] sm:$0xff]
      %v3949 = vld [vmem:[%s2810 + $0x129] sm:$0xff]
      %v3950 = vld [vmem:[%s2810 + $0x139] sm:$0xff]
      %v3951 = vld [vmem:[%s2810 + $0x141] sm:$0xff]
      %v3952 = vld [vmem:[%s2810 + $0x151] sm:$0xff]
      %v3953 = vld [vmem:[%s2810 + $0x159] sm:$0xff]
      %v3954 = vld [vmem:[%s2810 + $0x169] sm:$0xff]
      %v3955 = vld [vmem:[%s2810 + $0x171] sm:$0xff]
      %v3956 = vld [vmem:[%s2810 + $0x2] sm:$0xff]
      %v3957 = vld [vmem:[%s2810 + $0xa] sm:$0xff]
      %v3958 = vld [vmem:[%s2810 + $0x1a] sm:$0xff]
      %v3959 = vld [vmem:[%s2810 + $0x22] sm:$0xff]
      %v3960 = vld [vmem:[%s2810 + $0x32] sm:$0xff]
      %v3961 = vld [vmem:[%s2810 + $0x3a] sm:$0xff]
      %v3962 = vld [vmem:[%s2810 + $0x4a] sm:$0xff]
      %v3963 = vld [vmem:[%s2810 + $0x52] sm:$0xff]
      %v3964 = vld [vmem:[%s2810 + $0x62] sm:$0xff]
      %v3965 = vld [vmem:[%s2810 + $0x6a] sm:$0xff]
      %v3966 = vld [vmem:[%s2810 + $0x7a] sm:$0xff]
      %v3967 = vld [vmem:[%s2810 + $0x82] sm:$0xff]
      %v3968 = vld [vmem:[%s2810 + $0x92] sm:$0xff]
      %v3969 = vld [vmem:[%s2810 + $0x9a] sm:$0xff]
      %v3970 = vld [vmem:[%s2810 + $0xaa] sm:$0xff]
      %v3971 = vld [vmem:[%s2810 + $0xb2] sm:$0xff]
      %v3972 = vld [vmem:[%s2810 + $0xc2] sm:$0xff]
      %v3973 = vld [vmem:[%s2810 + $0xca] sm:$0xff]
      %v3974 = vld [vmem:[%s2810 + $0xda] sm:$0xff]
      %v3975 = vld [vmem:[%s2810 + $0xe2] sm:$0xff]
      %v3976 = vld [vmem:[%s2810 + $0xf2] sm:$0xff]
      %v3977 = vld [vmem:[%s2810 + $0xfa] sm:$0xff]
      %v3978 = vld [vmem:[%s2810 + $0x10a] sm:$0xff]
      %v3979 = vld [vmem:[%s2810 + $0x112] sm:$0xff]
      %v3980 = vld [vmem:[%s2810 + $0x122] sm:$0xff]
      %v3981 = vld [vmem:[%s2810 + $0x12a] sm:$0xff]
      %v3982 = vld [vmem:[%s2810 + $0x13a] sm:$0xff]
      %v3983 = vld [vmem:[%s2810 + $0x142] sm:$0xff]
      %v3984 = vld [vmem:[%s2810 + $0x152] sm:$0xff]
      %v3985 = vld [vmem:[%s2810 + $0x15a] sm:$0xff]
      %v3986 = vld [vmem:[%s2810 + $0x16a] sm:$0xff]
      %v3987 = vld [vmem:[%s2810 + $0x172] sm:$0xff]
      %s3988 = scalar_lea.vmem %s3, 48
      %v3989 = vld [vmem:[%s3988] sm:$0xf]
      %s3990 = scalar_lea.vmem %s3, 52
      %v3991 = vld [vmem:[%s3990] sm:$0xf]
      %v3993 = vsel %vm404, %v3892, 0
      %v3996 = vsel %vm404, %v3893, 0
      %v3999 = vsel %vm404, %v3894, 0
      %v4002 = vsel %vm404, %v3895, 0
      %v4005 = vsel %vm404, %v3896, 0
      %v4008 = vsel %vm404, %v3897, 0
      %v4011 = vsel %vm404, %v3898, 0
      %v4014 = vsel %vm404, %v3899, 0
      %v4017 = vsel %vm404, %v3900, 0
      %v4020 = vsel %vm404, %v3901, 0
      %v4023 = vsel %vm404, %v3902, 0
      %v4026 = vsel %vm404, %v3903, 0
      %v4029 = vsel %vm404, %v3904, 0
      %v4032 = vsel %vm404, %v3905, 0
      %v4035 = vsel %vm404, %v3906, 0
      %v4038 = vsel %vm404, %v3907, 0
      %v4041 = vsel %vm404, %v3908, 0
      %v4044 = vsel %vm404, %v3909, 0
      %v4047 = vsel %vm404, %v3910, 0
      %v4050 = vsel %vm404, %v3911, 0
      %v4053 = vsel %vm404, %v3912, 0
      %v4056 = vsel %vm404, %v3913, 0
      %v4059 = vsel %vm404, %v3914, 0
      %v4062 = vsel %vm404, %v3915, 0
      %v4065 = vsel %vm404, %v3916, 0
      %v4068 = vsel %vm404, %v3917, 0
      %v4071 = vsel %vm404, %v3918, 0
      %v4074 = vsel %vm404, %v3919, 0
      %v4077 = vsel %vm404, %v3920, 0
      %v4080 = vsel %vm404, %v3921, 0
      %v4083 = vsel %vm404, %v3922, 0
      %v4086 = vsel %vm404, %v3923, 0
      %v4089 = vsel %vm745, %v3991, 0
      %4091 = vmatpush.msra.mxu0 0.0
      %4092 = vmatpush.msra.mxu0 0.0
      %4093 = vmatpush.msra.mxu0 0.0
      %4094 = vmatpush.msra.mxu0 0.0
      %4095 = vmatpush.msra.mxu0 0.0
      %4096 = vmatpush.msra.mxu0 0.0
      %4097 = vmatpush.msra.mxu0 0.0
      %4098 = vmatpush.msra.mxu0 0.0
      %4099 = vmatpush.msra.mxu0 0.0
      %4100 = vmatpush.msra.mxu0 0.0
      %4101 = vmatpush.msra.mxu0 0.0
      %4102 = vmatpush.msra.mxu0 0.0
      %4103 = vmatpush.msra.mxu0 0.0
      %4104 = vmatpush.msra.mxu0 0.0
      %4105 = vmatpush.msra.mxu0 0.0
      %4106 = vmatpush.msra.mxu0 %v4089
      %4107 = vmatmul.f32.gmra.mxu0 %v3993
      %v4108 = vpop.f32.mrf.mxu0
      %v4109 = vadd.f32 0.0, %v4108
      %4110 = vmatmul.f32.gmra.mxu0 %v3996
      %v4111 = vpop.f32.mrf.mxu0
      %v4112 = vadd.f32 0.0, %v4111
      %4113 = vmatmul.f32.gmra.mxu0 %v3999
      %v4114 = vpop.f32.mrf.mxu0
      %v4115 = vadd.f32 0.0, %v4114
      %4116 = vmatmul.f32.gmra.mxu0 %v4002
      %v4117 = vpop.f32.mrf.mxu0
      %v4118 = vadd.f32 0.0, %v4117
      %4119 = vmatmul.f32.gmra.mxu0 %v4005
      %v4120 = vpop.f32.mrf.mxu0
      %v4121 = vadd.f32 0.0, %v4120
      %4122 = vmatmul.f32.gmra.mxu0 %v4008
      %v4123 = vpop.f32.mrf.mxu0
      %v4124 = vadd.f32 0.0, %v4123
      %4125 = vmatmul.f32.gmra.mxu0 %v4011
      %v4126 = vpop.f32.mrf.mxu0
      %v4127 = vadd.f32 0.0, %v4126
      %4128 = vmatmul.f32.gmra.mxu0 %v4014
      %v4129 = vpop.f32.mrf.mxu0
      %v4130 = vadd.f32 0.0, %v4129
      %4131 = vmatmul.f32.gmra.mxu0 %v4017
      %v4132 = vpop.f32.mrf.mxu0
      %v4133 = vadd.f32 0.0, %v4132
      %4134 = vmatmul.f32.gmra.mxu0 %v4020
      %v4135 = vpop.f32.mrf.mxu0
      %v4136 = vadd.f32 0.0, %v4135
      %4137 = vmatmul.f32.gmra.mxu0 %v4023
      %v4138 = vpop.f32.mrf.mxu0
      %v4139 = vadd.f32 0.0, %v4138
      %4140 = vmatmul.f32.gmra.mxu0 %v4026
      %v4141 = vpop.f32.mrf.mxu0
      %v4142 = vadd.f32 0.0, %v4141
      %4143 = vmatmul.f32.gmra.mxu0 %v4029
      %v4144 = vpop.f32.mrf.mxu0
      %v4145 = vadd.f32 0.0, %v4144
      %4146 = vmatmul.f32.gmra.mxu0 %v4032
      %v4147 = vpop.f32.mrf.mxu0
      %v4148 = vadd.f32 0.0, %v4147
      %4149 = vmatmul.f32.gmra.mxu0 %v4035
      %v4150 = vpop.f32.mrf.mxu0
      %v4151 = vadd.f32 0.0, %v4150
      %4152 = vmatmul.f32.gmra.mxu0 %v4038
      %v4153 = vpop.f32.mrf.mxu0
      %v4154 = vadd.f32 0.0, %v4153
      %4155 = vmatmul.f32.gmra.mxu0 %v4041
      %v4156 = vpop.f32.mrf.mxu0
      %v4157 = vadd.f32 0.0, %v4156
      %4158 = vmatmul.f32.gmra.mxu0 %v4044
      %v4159 = vpop.f32.mrf.mxu0
      %v4160 = vadd.f32 0.0, %v4159
      %4161 = vmatmul.f32.gmra.mxu0 %v4047
      %v4162 = vpop.f32.mrf.mxu0
      %v4163 = vadd.f32 0.0, %v4162
      %4164 = vmatmul.f32.gmra.mxu0 %v4050
      %v4165 = vpop.f32.mrf.mxu0
      %v4166 = vadd.f32 0.0, %v4165
      %4167 = vmatmul.f32.gmra.mxu0 %v4053
      %v4168 = vpop.f32.mrf.mxu0
      %v4169 = vadd.f32 0.0, %v4168
      %4170 = vmatmul.f32.gmra.mxu0 %v4056
      %v4171 = vpop.f32.mrf.mxu0
      %v4172 = vadd.f32 0.0, %v4171
      %4173 = vmatmul.f32.gmra.mxu0 %v4059
      %v4174 = vpop.f32.mrf.mxu0
      %v4175 = vadd.f32 0.0, %v4174
      %4176 = vmatmul.f32.gmra.mxu0 %v4062
      %v4177 = vpop.f32.mrf.mxu0
      %v4178 = vadd.f32 0.0, %v4177
      %4179 = vmatmul.f32.gmra.mxu0 %v4065
      %v4180 = vpop.f32.mrf.mxu0
      %v4181 = vadd.f32 0.0, %v4180
      %4182 = vmatmul.f32.gmra.mxu0 %v4068
      %v4183 = vpop.f32.mrf.mxu0
      %v4184 = vadd.f32 0.0, %v4183
      %4185 = vmatmul.f32.gmra.mxu0 %v4071
      %v4186 = vpop.f32.mrf.mxu0
      %v4187 = vadd.f32 0.0, %v4186
      %4188 = vmatmul.f32.gmra.mxu0 %v4074
      %v4189 = vpop.f32.mrf.mxu0
      %v4190 = vadd.f32 0.0, %v4189
      %4191 = vmatmul.f32.gmra.mxu0 %v4077
      %v4192 = vpop.f32.mrf.mxu0
      %v4193 = vadd.f32 0.0, %v4192
      %4194 = vmatmul.f32.gmra.mxu0 %v4080
      %v4195 = vpop.f32.mrf.mxu0
      %v4196 = vadd.f32 0.0, %v4195
      %4197 = vmatmul.f32.gmra.mxu0 %v4083
      %v4198 = vpop.f32.mrf.mxu0
      %v4199 = vadd.f32 0.0, %v4198
      %4200 = vmatmul.f32.gmra.mxu0 %v4086
      %v4201 = vpop.f32.mrf.mxu0
      %v4202 = vadd.f32 0.0, %v4201
      %4203 = vdwg.mxu0
      %v4205 = vsel %vm404, %v3860, 0
      %v4208 = vsel %vm404, %v3861, 0
      %v4211 = vsel %vm404, %v3862, 0
      %v4214 = vsel %vm404, %v3863, 0
      %v4217 = vsel %vm404, %v3864, 0
      %v4220 = vsel %vm404, %v3865, 0
      %v4223 = vsel %vm404, %v3866, 0
      %v4226 = vsel %vm404, %v3867, 0
      %v4229 = vsel %vm404, %v3868, 0
      %v4232 = vsel %vm404, %v3869, 0
      %v4235 = vsel %vm404, %v3870, 0
      %v4238 = vsel %vm404, %v3871, 0
      %v4241 = vsel %vm404, %v3872, 0
      %v4244 = vsel %vm404, %v3873, 0
      %v4247 = vsel %vm404, %v3874, 0
      %v4250 = vsel %vm404, %v3875, 0
      %v4253 = vsel %vm404, %v3876, 0
      %v4256 = vsel %vm404, %v3877, 0
      %v4259 = vsel %vm404, %v3878, 0
      %v4262 = vsel %vm404, %v3879, 0
      %v4265 = vsel %vm404, %v3880, 0
      %v4268 = vsel %vm404, %v3881, 0
      %v4271 = vsel %vm404, %v3882, 0
      %v4274 = vsel %vm404, %v3883, 0
      %v4277 = vsel %vm404, %v3884, 0
      %v4280 = vsel %vm404, %v3885, 0
      %v4283 = vsel %vm404, %v3886, 0
      %v4286 = vsel %vm404, %v3887, 0
      %v4289 = vsel %vm404, %v3888, 0
      %v4292 = vsel %vm404, %v3889, 0
      %v4295 = vsel %vm404, %v3890, 0
      %v4298 = vsel %vm404, %v3891, 0
      %v4301 = vsel %vm745, %v3989, 0
      %4303 = vmatpush.msra.mxu0 0.0
      %4304 = vmatpush.msra.mxu0 0.0
      %4305 = vmatpush.msra.mxu0 0.0
      %4306 = vmatpush.msra.mxu0 0.0
      %4307 = vmatpush.msra.mxu0 0.0
      %4308 = vmatpush.msra.mxu0 0.0
      %4309 = vmatpush.msra.mxu0 0.0
      %4310 = vmatpush.msra.mxu0 0.0
      %4311 = vmatpush.msra.mxu0 0.0
      %4312 = vmatpush.msra.mxu0 0.0
      %4313 = vmatpush.msra.mxu0 0.0
      %4314 = vmatpush.msra.mxu0 0.0
      %4315 = vmatpush.msra.mxu0 0.0
      %4316 = vmatpush.msra.mxu0 0.0
      %4317 = vmatpush.msra.mxu0 0.0
      %4318 = vmatpush.msra.mxu0 %v4301
      %4319 = vmatmul.f32.gmra.mxu0 %v4205
      %v4320 = vpop.f32.mrf.mxu0
      %v4321 = vadd.f32 %v4109, %v4320
      %4322 = vmatmul.f32.gmra.mxu0 %v4208
      %v4323 = vpop.f32.mrf.mxu0
      %v4324 = vadd.f32 %v4112, %v4323
      %4325 = vmatmul.f32.gmra.mxu0 %v4211
      %v4326 = vpop.f32.mrf.mxu0
      %v4327 = vadd.f32 %v4115, %v4326
      %4328 = vmatmul.f32.gmra.mxu0 %v4214
      %v4329 = vpop.f32.mrf.mxu0
      %v4330 = vadd.f32 %v4118, %v4329
      %4331 = vmatmul.f32.gmra.mxu0 %v4217
      %v4332 = vpop.f32.mrf.mxu0
      %v4333 = vadd.f32 %v4121, %v4332
      %4334 = vmatmul.f32.gmra.mxu0 %v4220
      %v4335 = vpop.f32.mrf.mxu0
      %v4336 = vadd.f32 %v4124, %v4335
      %4337 = vmatmul.f32.gmra.mxu0 %v4223
      %v4338 = vpop.f32.mrf.mxu0
      %v4339 = vadd.f32 %v4127, %v4338
      %4340 = vmatmul.f32.gmra.mxu0 %v4226
      %v4341 = vpop.f32.mrf.mxu0
      %v4342 = vadd.f32 %v4130, %v4341
      %4343 = vmatmul.f32.gmra.mxu0 %v4229
      %v4344 = vpop.f32.mrf.mxu0
      %v4345 = vadd.f32 %v4133, %v4344
      %4346 = vmatmul.f32.gmra.mxu0 %v4232
      %v4347 = vpop.f32.mrf.mxu0
      %v4348 = vadd.f32 %v4136, %v4347
      %4349 = vmatmul.f32.gmra.mxu0 %v4235
      %v4350 = vpop.f32.mrf.mxu0
      %v4351 = vadd.f32 %v4139, %v4350
      %4352 = vmatmul.f32.gmra.mxu0 %v4238
      %v4353 = vpop.f32.mrf.mxu0
      %v4354 = vadd.f32 %v4142, %v4353
      %4355 = vmatmul.f32.gmra.mxu0 %v4241
      %v4356 = vpop.f32.mrf.mxu0
      %v4357 = vadd.f32 %v4145, %v4356
      %4358 = vmatmul.f32.gmra.mxu0 %v4244
      %v4359 = vpop.f32.mrf.mxu0
      %v4360 = vadd.f32 %v4148, %v4359
      %4361 = vmatmul.f32.gmra.mxu0 %v4247
      %v4362 = vpop.f32.mrf.mxu0
      %v4363 = vadd.f32 %v4151, %v4362
      %4364 = vmatmul.f32.gmra.mxu0 %v4250
      %v4365 = vpop.f32.mrf.mxu0
      %v4366 = vadd.f32 %v4154, %v4365
      %4367 = vmatmul.f32.gmra.mxu0 %v4253
      %v4368 = vpop.f32.mrf.mxu0
      %v4369 = vadd.f32 %v4157, %v4368
      %4370 = vmatmul.f32.gmra.mxu0 %v4256
      %v4371 = vpop.f32.mrf.mxu0
      %v4372 = vadd.f32 %v4160, %v4371
      %4373 = vmatmul.f32.gmra.mxu0 %v4259
      %v4374 = vpop.f32.mrf.mxu0
      %v4375 = vadd.f32 %v4163, %v4374
      %4376 = vmatmul.f32.gmra.mxu0 %v4262
      %v4377 = vpop.f32.mrf.mxu0
      %v4378 = vadd.f32 %v4166, %v4377
      %4379 = vmatmul.f32.gmra.mxu0 %v4265
      %v4380 = vpop.f32.mrf.mxu0
      %v4381 = vadd.f32 %v4169, %v4380
      %4382 = vmatmul.f32.gmra.mxu0 %v4268
      %v4383 = vpop.f32.mrf.mxu0
      %v4384 = vadd.f32 %v4172, %v4383
      %4385 = vmatmul.f32.gmra.mxu0 %v4271
      %v4386 = vpop.f32.mrf.mxu0
      %v4387 = vadd.f32 %v4175, %v4386
      %4388 = vmatmul.f32.gmra.mxu0 %v4274
      %v4389 = vpop.f32.mrf.mxu0
      %v4390 = vadd.f32 %v4178, %v4389
      %4391 = vmatmul.f32.gmra.mxu0 %v4277
      %v4392 = vpop.f32.mrf.mxu0
      %v4393 = vadd.f32 %v4181, %v4392
      %4394 = vmatmul.f32.gmra.mxu0 %v4280
      %v4395 = vpop.f32.mrf.mxu0
      %v4396 = vadd.f32 %v4184, %v4395
      %4397 = vmatmul.f32.gmra.mxu0 %v4283
      %v4398 = vpop.f32.mrf.mxu0
      %v4399 = vadd.f32 %v4187, %v4398
      %4400 = vmatmul.f32.gmra.mxu0 %v4286
      %v4401 = vpop.f32.mrf.mxu0
      %v4402 = vadd.f32 %v4190, %v4401
      %4403 = vmatmul.f32.gmra.mxu0 %v4289
      %v4404 = vpop.f32.mrf.mxu0
      %v4405 = vadd.f32 %v4193, %v4404
      %4406 = vmatmul.f32.gmra.mxu0 %v4292
      %v4407 = vpop.f32.mrf.mxu0
      %v4408 = vadd.f32 %v4196, %v4407
      %4409 = vmatmul.f32.gmra.mxu0 %v4295
      %v4410 = vpop.f32.mrf.mxu0
      %v4411 = vadd.f32 %v4199, %v4410
      %4412 = vmatmul.f32.gmra.mxu0 %v4298
      %v4413 = vpop.f32.mrf.mxu0
      %v4414 = vadd.f32 %v4202, %v4413
      %4415 = vdwg.mxu0
      %s4416 = scalar_lea.vmem %s3, 56
      %v4417 = vld [vmem:[%s4416] sm:$0xf]
      %v4419 = vsel %vm404, %v3924, 0
      %v4422 = vsel %vm404, %v3925, 0
      %v4425 = vsel %vm404, %v3926, 0
      %v4428 = vsel %vm404, %v3927, 0
      %v4431 = vsel %vm404, %v3928, 0
      %v4434 = vsel %vm404, %v3929, 0
      %v4437 = vsel %vm404, %v3930, 0
      %v4440 = vsel %vm404, %v3931, 0
      %v4443 = vsel %vm404, %v3932, 0
      %v4446 = vsel %vm404, %v3933, 0
      %v4449 = vsel %vm404, %v3934, 0
      %v4452 = vsel %vm404, %v3935, 0
      %v4455 = vsel %vm404, %v3936, 0
      %v4458 = vsel %vm404, %v3937, 0
      %v4461 = vsel %vm404, %v3938, 0
      %v4464 = vsel %vm404, %v3939, 0
      %v4467 = vsel %vm404, %v3940, 0
      %v4470 = vsel %vm404, %v3941, 0
      %v4473 = vsel %vm404, %v3942, 0
      %v4476 = vsel %vm404, %v3943, 0
      %v4479 = vsel %vm404, %v3944, 0
      %v4482 = vsel %vm404, %v3945, 0
      %v4485 = vsel %vm404, %v3946, 0
      %v4488 = vsel %vm404, %v3947, 0
      %v4491 = vsel %vm404, %v3948, 0
      %v4494 = vsel %vm404, %v3949, 0
      %v4497 = vsel %vm404, %v3950, 0
      %v4500 = vsel %vm404, %v3951, 0
      %v4503 = vsel %vm404, %v3952, 0
      %v4506 = vsel %vm404, %v3953, 0
      %v4509 = vsel %vm404, %v3954, 0
      %v4512 = vsel %vm404, %v3955, 0
      %v4515 = vsel %vm745, %v4417, 0
      %4517 = vmatpush.msra.mxu0 0.0
      %4518 = vmatpush.msra.mxu0 0.0
      %4519 = vmatpush.msra.mxu0 0.0
      %4520 = vmatpush.msra.mxu0 0.0
      %4521 = vmatpush.msra.mxu0 0.0
      %4522 = vmatpush.msra.mxu0 0.0
      %4523 = vmatpush.msra.mxu0 0.0
      %4524 = vmatpush.msra.mxu0 0.0
      %4525 = vmatpush.msra.mxu0 0.0
      %4526 = vmatpush.msra.mxu0 0.0
      %4527 = vmatpush.msra.mxu0 0.0
      %4528 = vmatpush.msra.mxu0 0.0
      %4529 = vmatpush.msra.mxu0 0.0
      %4530 = vmatpush.msra.mxu0 0.0
      %4531 = vmatpush.msra.mxu0 0.0
      %4532 = vmatpush.msra.mxu0 %v4515
      %4533 = vmatmul.f32.gmra.mxu0 %v4419
      %v4534 = vpop.f32.mrf.mxu0
      %v4535 = vadd.f32 0.0, %v4534
      %4536 = vmatmul.f32.gmra.mxu0 %v4422
      %v4537 = vpop.f32.mrf.mxu0
      %v4538 = vadd.f32 0.0, %v4537
      %4539 = vmatmul.f32.gmra.mxu0 %v4425
      %v4540 = vpop.f32.mrf.mxu0
      %v4541 = vadd.f32 0.0, %v4540
      %4542 = vmatmul.f32.gmra.mxu0 %v4428
      %v4543 = vpop.f32.mrf.mxu0
      %v4544 = vadd.f32 0.0, %v4543
      %4545 = vmatmul.f32.gmra.mxu0 %v4431
      %v4546 = vpop.f32.mrf.mxu0
      %v4547 = vadd.f32 0.0, %v4546
      %4548 = vmatmul.f32.gmra.mxu0 %v4434
      %v4549 = vpop.f32.mrf.mxu0
      %v4550 = vadd.f32 0.0, %v4549
      %4551 = vmatmul.f32.gmra.mxu0 %v4437
      %v4552 = vpop.f32.mrf.mxu0
      %v4553 = vadd.f32 0.0, %v4552
      %4554 = vmatmul.f32.gmra.mxu0 %v4440
      %v4555 = vpop.f32.mrf.mxu0
      %v4556 = vadd.f32 0.0, %v4555
      %4557 = vmatmul.f32.gmra.mxu0 %v4443
      %v4558 = vpop.f32.mrf.mxu0
      %v4559 = vadd.f32 0.0, %v4558
      %4560 = vmatmul.f32.gmra.mxu0 %v4446
      %v4561 = vpop.f32.mrf.mxu0
      %v4562 = vadd.f32 0.0, %v4561
      %4563 = vmatmul.f32.gmra.mxu0 %v4449
      %v4564 = vpop.f32.mrf.mxu0
      %v4565 = vadd.f32 0.0, %v4564
      %4566 = vmatmul.f32.gmra.mxu0 %v4452
      %v4567 = vpop.f32.mrf.mxu0
      %v4568 = vadd.f32 0.0, %v4567
      %4569 = vmatmul.f32.gmra.mxu0 %v4455
      %v4570 = vpop.f32.mrf.mxu0
      %v4571 = vadd.f32 0.0, %v4570
      %4572 = vmatmul.f32.gmra.mxu0 %v4458
      %v4573 = vpop.f32.mrf.mxu0
      %v4574 = vadd.f32 0.0, %v4573
      %4575 = vmatmul.f32.gmra.mxu0 %v4461
      %v4576 = vpop.f32.mrf.mxu0
      %v4577 = vadd.f32 0.0, %v4576
      %4578 = vmatmul.f32.gmra.mxu0 %v4464
      %v4579 = vpop.f32.mrf.mxu0
      %v4580 = vadd.f32 0.0, %v4579
      %4581 = vmatmul.f32.gmra.mxu0 %v4467
      %v4582 = vpop.f32.mrf.mxu0
      %v4583 = vadd.f32 0.0, %v4582
      %4584 = vmatmul.f32.gmra.mxu0 %v4470
      %v4585 = vpop.f32.mrf.mxu0
      %v4586 = vadd.f32 0.0, %v4585
      %4587 = vmatmul.f32.gmra.mxu0 %v4473
      %v4588 = vpop.f32.mrf.mxu0
      %v4589 = vadd.f32 0.0, %v4588
      %4590 = vmatmul.f32.gmra.mxu0 %v4476
      %v4591 = vpop.f32.mrf.mxu0
      %v4592 = vadd.f32 0.0, %v4591
      %4593 = vmatmul.f32.gmra.mxu0 %v4479
      %v4594 = vpop.f32.mrf.mxu0
      %v4595 = vadd.f32 0.0, %v4594
      %4596 = vmatmul.f32.gmra.mxu0 %v4482
      %v4597 = vpop.f32.mrf.mxu0
      %v4598 = vadd.f32 0.0, %v4597
      %4599 = vmatmul.f32.gmra.mxu0 %v4485
      %v4600 = vpop.f32.mrf.mxu0
      %v4601 = vadd.f32 0.0, %v4600
      %4602 = vmatmul.f32.gmra.mxu0 %v4488
      %v4603 = vpop.f32.mrf.mxu0
      %v4604 = vadd.f32 0.0, %v4603
      %4605 = vmatmul.f32.gmra.mxu0 %v4491
      %v4606 = vpop.f32.mrf.mxu0
      %v4607 = vadd.f32 0.0, %v4606
      %4608 = vmatmul.f32.gmra.mxu0 %v4494
      %v4609 = vpop.f32.mrf.mxu0
      %v4610 = vadd.f32 0.0, %v4609
      %4611 = vmatmul.f32.gmra.mxu0 %v4497
      %v4612 = vpop.f32.mrf.mxu0
      %v4613 = vadd.f32 0.0, %v4612
      %4614 = vmatmul.f32.gmra.mxu0 %v4500
      %v4615 = vpop.f32.mrf.mxu0
      %v4616 = vadd.f32 0.0, %v4615
      %4617 = vmatmul.f32.gmra.mxu0 %v4503
      %v4618 = vpop.f32.mrf.mxu0
      %v4619 = vadd.f32 0.0, %v4618
      %4620 = vmatmul.f32.gmra.mxu0 %v4506
      %v4621 = vpop.f32.mrf.mxu0
      %v4622 = vadd.f32 0.0, %v4621
      %4623 = vmatmul.f32.gmra.mxu0 %v4509
      %v4624 = vpop.f32.mrf.mxu0
      %v4625 = vadd.f32 0.0, %v4624
      %4626 = vmatmul.f32.gmra.mxu0 %v4512
      %v4627 = vpop.f32.mrf.mxu0
      %v4628 = vadd.f32 0.0, %v4627
      %4629 = vdwg.mxu0
      %v4630 = vadd.f32 %v4321, %v4535
      %v4631 = vadd.f32 %v4324, %v4538
      %v4632 = vadd.f32 %v4327, %v4541
      %v4633 = vadd.f32 %v4330, %v4544
      %v4634 = vadd.f32 %v4333, %v4547
      %v4635 = vadd.f32 %v4336, %v4550
      %v4636 = vadd.f32 %v4339, %v4553
      %v4637 = vadd.f32 %v4342, %v4556
      %v4638 = vadd.f32 %v4345, %v4559
      %v4639 = vadd.f32 %v4348, %v4562
      %v4640 = vadd.f32 %v4351, %v4565
      %v4641 = vadd.f32 %v4354, %v4568
      %v4642 = vadd.f32 %v4357, %v4571
      %v4643 = vadd.f32 %v4360, %v4574
      %v4644 = vadd.f32 %v4363, %v4577
      %v4645 = vadd.f32 %v4366, %v4580
      %v4646 = vadd.f32 %v4369, %v4583
      %v4647 = vadd.f32 %v4372, %v4586
      %v4648 = vadd.f32 %v4375, %v4589
      %v4649 = vadd.f32 %v4378, %v4592
      %v4650 = vadd.f32 %v4381, %v4595
      %v4651 = vadd.f32 %v4384, %v4598
      %v4652 = vadd.f32 %v4387, %v4601
      %v4653 = vadd.f32 %v4390, %v4604
      %v4654 = vadd.f32 %v4393, %v4607
      %v4655 = vadd.f32 %v4396, %v4610
      %v4656 = vadd.f32 %v4399, %v4613
      %v4657 = vadd.f32 %v4402, %v4616
      %v4658 = vadd.f32 %v4405, %v4619
      %v4659 = vadd.f32 %v4408, %v4622
      %v4660 = vadd.f32 %v4411, %v4625
      %v4661 = vadd.f32 %v4414, %v4628
      %s4662 = scalar_lea.vmem %s3, 60
      %v4663 = vld [vmem:[%s4662] sm:$0xf]
      %v4665 = vsel %vm404, %v3956, 0
      %v4668 = vsel %vm404, %v3957, 0
      %v4671 = vsel %vm404, %v3958, 0
      %v4674 = vsel %vm404, %v3959, 0
      %v4677 = vsel %vm404, %v3960, 0
      %v4680 = vsel %vm404, %v3961, 0
      %v4683 = vsel %vm404, %v3962, 0
      %v4686 = vsel %vm404, %v3963, 0
      %v4689 = vsel %vm404, %v3964, 0
      %v4692 = vsel %vm404, %v3965, 0
      %v4695 = vsel %vm404, %v3966, 0
      %v4698 = vsel %vm404, %v3967, 0
      %v4701 = vsel %vm404, %v3968, 0
      %v4704 = vsel %vm404, %v3969, 0
      %v4707 = vsel %vm404, %v3970, 0
      %v4710 = vsel %vm404, %v3971, 0
      %v4713 = vsel %vm404, %v3972, 0
      %v4716 = vsel %vm404, %v3973, 0
      %v4719 = vsel %vm404, %v3974, 0
      %v4722 = vsel %vm404, %v3975, 0
      %v4725 = vsel %vm404, %v3976, 0
      %v4728 = vsel %vm404, %v3977, 0
      %v4731 = vsel %vm404, %v3978, 0
      %v4734 = vsel %vm404, %v3979, 0
      %v4737 = vsel %vm404, %v3980, 0
      %v4740 = vsel %vm404, %v3981, 0
      %v4743 = vsel %vm404, %v3982, 0
      %v4746 = vsel %vm404, %v3983, 0
      %v4749 = vsel %vm404, %v3984, 0
      %v4752 = vsel %vm404, %v3985, 0
      %v4755 = vsel %vm404, %v3986, 0
      %v4758 = vsel %vm404, %v3987, 0
      %v4761 = vsel %vm745, %v4663, 0
      %4763 = vmatpush.msra.mxu0 0.0
      %4764 = vmatpush.msra.mxu0 0.0
      %4765 = vmatpush.msra.mxu0 0.0
      %4766 = vmatpush.msra.mxu0 0.0
      %4767 = vmatpush.msra.mxu0 0.0
      %4768 = vmatpush.msra.mxu0 0.0
      %4769 = vmatpush.msra.mxu0 0.0
      %4770 = vmatpush.msra.mxu0 0.0
      %4771 = vmatpush.msra.mxu0 0.0
      %4772 = vmatpush.msra.mxu0 0.0
      %4773 = vmatpush.msra.mxu0 0.0
      %4774 = vmatpush.msra.mxu0 0.0
      %4775 = vmatpush.msra.mxu0 0.0
      %4776 = vmatpush.msra.mxu0 0.0
      %4777 = vmatpush.msra.mxu0 0.0
      %4778 = vmatpush.msra.mxu0 %v4761
      %4779 = vmatmul.f32.gmra.mxu0 %v4665
      %v4780 = vpop.f32.mrf.mxu0
      %v4781 = vadd.f32 0.0, %v4780
      %4782 = vmatmul.f32.gmra.mxu0 %v4668
      %v4783 = vpop.f32.mrf.mxu0
      %v4784 = vadd.f32 0.0, %v4783
      %4785 = vmatmul.f32.gmra.mxu0 %v4671
      %v4786 = vpop.f32.mrf.mxu0
      %v4787 = vadd.f32 0.0, %v4786
      %4788 = vmatmul.f32.gmra.mxu0 %v4674
      %v4789 = vpop.f32.mrf.mxu0
      %v4790 = vadd.f32 0.0, %v4789
      %4791 = vmatmul.f32.gmra.mxu0 %v4677
      %v4792 = vpop.f32.mrf.mxu0
      %v4793 = vadd.f32 0.0, %v4792
      %4794 = vmatmul.f32.gmra.mxu0 %v4680
      %v4795 = vpop.f32.mrf.mxu0
      %v4796 = vadd.f32 0.0, %v4795
      %4797 = vmatmul.f32.gmra.mxu0 %v4683
      %v4798 = vpop.f32.mrf.mxu0
      %v4799 = vadd.f32 0.0, %v4798
      %4800 = vmatmul.f32.gmra.mxu0 %v4686
      %v4801 = vpop.f32.mrf.mxu0
      %v4802 = vadd.f32 0.0, %v4801
      %4803 = vmatmul.f32.gmra.mxu0 %v4689
      %v4804 = vpop.f32.mrf.mxu0
      %v4805 = vadd.f32 0.0, %v4804
      %4806 = vmatmul.f32.gmra.mxu0 %v4692
      %v4807 = vpop.f32.mrf.mxu0
      %v4808 = vadd.f32 0.0, %v4807
      %4809 = vmatmul.f32.gmra.mxu0 %v4695
      %v4810 = vpop.f32.mrf.mxu0
      %v4811 = vadd.f32 0.0, %v4810
      %4812 = vmatmul.f32.gmra.mxu0 %v4698
      %v4813 = vpop.f32.mrf.mxu0
      %v4814 = vadd.f32 0.0, %v4813
      %4815 = vmatmul.f32.gmra.mxu0 %v4701
      %v4816 = vpop.f32.mrf.mxu0
      %v4817 = vadd.f32 0.0, %v4816
      %4818 = vmatmul.f32.gmra.mxu0 %v4704
      %v4819 = vpop.f32.mrf.mxu0
      %v4820 = vadd.f32 0.0, %v4819
      %4821 = vmatmul.f32.gmra.mxu0 %v4707
      %v4822 = vpop.f32.mrf.mxu0
      %v4823 = vadd.f32 0.0, %v4822
      %4824 = vmatmul.f32.gmra.mxu0 %v4710
      %v4825 = vpop.f32.mrf.mxu0
      %v4826 = vadd.f32 0.0, %v4825
      %4827 = vmatmul.f32.gmra.mxu0 %v4713
      %v4828 = vpop.f32.mrf.mxu0
      %v4829 = vadd.f32 0.0, %v4828
      %4830 = vmatmul.f32.gmra.mxu0 %v4716
      %v4831 = vpop.f32.mrf.mxu0
      %v4832 = vadd.f32 0.0, %v4831
      %4833 = vmatmul.f32.gmra.mxu0 %v4719
      %v4834 = vpop.f32.mrf.mxu0
      %v4835 = vadd.f32 0.0, %v4834
      %4836 = vmatmul.f32.gmra.mxu0 %v4722
      %v4837 = vpop.f32.mrf.mxu0
      %v4838 = vadd.f32 0.0, %v4837
      %4839 = vmatmul.f32.gmra.mxu0 %v4725
      %v4840 = vpop.f32.mrf.mxu0
      %v4841 = vadd.f32 0.0, %v4840
      %4842 = vmatmul.f32.gmra.mxu0 %v4728
      %v4843 = vpop.f32.mrf.mxu0
      %v4844 = vadd.f32 0.0, %v4843
      %4845 = vmatmul.f32.gmra.mxu0 %v4731
      %v4846 = vpop.f32.mrf.mxu0
      %v4847 = vadd.f32 0.0, %v4846
      %4848 = vmatmul.f32.gmra.mxu0 %v4734
      %v4849 = vpop.f32.mrf.mxu0
      %v4850 = vadd.f32 0.0, %v4849
      %4851 = vmatmul.f32.gmra.mxu0 %v4737
      %v4852 = vpop.f32.mrf.mxu0
      %v4853 = vadd.f32 0.0, %v4852
      %4854 = vmatmul.f32.gmra.mxu0 %v4740
      %v4855 = vpop.f32.mrf.mxu0
      %v4856 = vadd.f32 0.0, %v4855
      %4857 = vmatmul.f32.gmra.mxu0 %v4743
      %v4858 = vpop.f32.mrf.mxu0
      %v4859 = vadd.f32 0.0, %v4858
      %4860 = vmatmul.f32.gmra.mxu0 %v4746
      %v4861 = vpop.f32.mrf.mxu0
      %v4862 = vadd.f32 0.0, %v4861
      %4863 = vmatmul.f32.gmra.mxu0 %v4749
      %v4864 = vpop.f32.mrf.mxu0
      %v4865 = vadd.f32 0.0, %v4864
      %4866 = vmatmul.f32.gmra.mxu0 %v4752
      %v4867 = vpop.f32.mrf.mxu0
      %v4868 = vadd.f32 0.0, %v4867
      %4869 = vmatmul.f32.gmra.mxu0 %v4755
      %v4870 = vpop.f32.mrf.mxu0
      %v4871 = vadd.f32 0.0, %v4870
      %4872 = vmatmul.f32.gmra.mxu0 %v4758
      %v4873 = vpop.f32.mrf.mxu0
      %v4874 = vadd.f32 0.0, %v4873
      %4875 = vdwg.mxu0
      %v4876 = vadd.f32 %v4630, %v4781
      %v4877 = vadd.f32 %v4631, %v4784
      %v4878 = vadd.f32 %v4632, %v4787
      %v4879 = vadd.f32 %v4633, %v4790
      %v4880 = vadd.f32 %v4634, %v4793
      %v4881 = vadd.f32 %v4635, %v4796
      %v4882 = vadd.f32 %v4636, %v4799
      %v4883 = vadd.f32 %v4637, %v4802
      %v4884 = vadd.f32 %v4638, %v4805
      %v4885 = vadd.f32 %v4639, %v4808
      %v4886 = vadd.f32 %v4640, %v4811
      %v4887 = vadd.f32 %v4641, %v4814
      %v4888 = vadd.f32 %v4642, %v4817
      %v4889 = vadd.f32 %v4643, %v4820
      %v4890 = vadd.f32 %v4644, %v4823
      %v4891 = vadd.f32 %v4645, %v4826
      %v4892 = vadd.f32 %v4646, %v4829
      %v4893 = vadd.f32 %v4647, %v4832
      %v4894 = vadd.f32 %v4648, %v4835
      %v4895 = vadd.f32 %v4649, %v4838
      %v4896 = vadd.f32 %v4650, %v4841
      %v4897 = vadd.f32 %v4651, %v4844
      %v4898 = vadd.f32 %v4652, %v4847
      %v4899 = vadd.f32 %v4653, %v4850
      %v4900 = vadd.f32 %v4654, %v4853
      %v4901 = vadd.f32 %v4655, %v4856
      %v4902 = vadd.f32 %v4656, %v4859
      %v4903 = vadd.f32 %v4657, %v4862
      %v4904 = vadd.f32 %v4658, %v4865
      %v4905 = vadd.f32 %v4659, %v4868
      %v4906 = vadd.f32 %v4660, %v4871
      %v4907 = vadd.f32 %v4661, %v4874
      %v4908 = vadd.f32 %v4876, %v1567
      %v4909 = vadd.f32 %v4877, %v1567
      %v4910 = vadd.f32 %v4878, %v1567
      %v4911 = vadd.f32 %v4879, %v1567
      %v4912 = vadd.f32 %v4880, %v1567
      %v4913 = vadd.f32 %v4881, %v1567
      %v4914 = vadd.f32 %v4882, %v1567
      %v4915 = vadd.f32 %v4883, %v1567
      %v4916 = vadd.f32 %v4884, %v1567
      %v4917 = vadd.f32 %v4885, %v1567
      %v4918 = vadd.f32 %v4886, %v1567
      %v4919 = vadd.f32 %v4887, %v1567
      %v4920 = vadd.f32 %v4888, %v1567
      %v4921 = vadd.f32 %v4889, %v1567
      %v4922 = vadd.f32 %v4890, %v1567
      %v4923 = vadd.f32 %v4891, %v1567
      %v4924 = vadd.f32 %v4892, %v1567
      %v4925 = vadd.f32 %v4893, %v1567
      %v4926 = vadd.f32 %v4894, %v1567
      %v4927 = vadd.f32 %v4895, %v1567
      %v4928 = vadd.f32 %v4896, %v1567
      %v4929 = vadd.f32 %v4897, %v1567
      %v4930 = vadd.f32 %v4898, %v1567
      %v4931 = vadd.f32 %v4899, %v1567
      %v4932 = vadd.f32 %v4900, %v1567
      %v4933 = vadd.f32 %v4901, %v1567
      %v4934 = vadd.f32 %v4902, %v1567
      %v4935 = vadd.f32 %v4903, %v1567
      %v4936 = vadd.f32 %v4904, %v1567
      %v4937 = vadd.f32 %v4905, %v1567
      %v4938 = vadd.f32 %v4906, %v1567
      %v4939 = vadd.f32 %v4907, %v1567
      %s4940 = scalar_lea.vmem %s391, 768
      %4941 = vst.msk [vmem:[%s4940] sm:$0xff] %vm404, %v4908
      %4942 = vst.msk [vmem:[%s4940 + $0x8] sm:$0xff] %vm404, %v4909
      %4943 = vst.msk [vmem:[%s4940 + $0x10] sm:$0xff] %vm404, %v4910
      %4944 = vst.msk [vmem:[%s4940 + $0x18] sm:$0xff] %vm404, %v4911
      %4945 = vst.msk [vmem:[%s4940 + $0x20] sm:$0xff] %vm404, %v4912
      %4946 = vst.msk [vmem:[%s4940 + $0x28] sm:$0xff] %vm404, %v4913
      %4947 = vst.msk [vmem:[%s4940 + $0x30] sm:$0xff] %vm404, %v4914
      %4948 = vst.msk [vmem:[%s4940 + $0x38] sm:$0xff] %vm404, %v4915
      %4949 = vst.msk [vmem:[%s4940 + $0x40] sm:$0xff] %vm404, %v4916
      %4950 = vst.msk [vmem:[%s4940 + $0x48] sm:$0xff] %vm404, %v4917
      %4951 = vst.msk [vmem:[%s4940 + $0x50] sm:$0xff] %vm404, %v4918
      %4952 = vst.msk [vmem:[%s4940 + $0x58] sm:$0xff] %vm404, %v4919
      %4953 = vst.msk [vmem:[%s4940 + $0x60] sm:$0xff] %vm404, %v4920
      %4954 = vst.msk [vmem:[%s4940 + $0x68] sm:$0xff] %vm404, %v4921
      %4955 = vst.msk [vmem:[%s4940 + $0x70] sm:$0xff] %vm404, %v4922
      %4956 = vst.msk [vmem:[%s4940 + $0x78] sm:$0xff] %vm404, %v4923
      %4957 = vst.msk [vmem:[%s4940 + $0x80] sm:$0xff] %vm404, %v4924
      %4958 = vst.msk [vmem:[%s4940 + $0x88] sm:$0xff] %vm404, %v4925
      %4959 = vst.msk [vmem:[%s4940 + $0x90] sm:$0xff] %vm404, %v4926
      %4960 = vst.msk [vmem:[%s4940 + $0x98] sm:$0xff] %vm404, %v4927
      %4961 = vst.msk [vmem:[%s4940 + $0xa0] sm:$0xff] %vm404, %v4928
      %4962 = vst.msk [vmem:[%s4940 + $0xa8] sm:$0xff] %vm404, %v4929
      %4963 = vst.msk [vmem:[%s4940 + $0xb0] sm:$0xff] %vm404, %v4930
      %4964 = vst.msk [vmem:[%s4940 + $0xb8] sm:$0xff] %vm404, %v4931
      %4965 = vst.msk [vmem:[%s4940 + $0xc0] sm:$0xff] %vm404, %v4932
      %4966 = vst.msk [vmem:[%s4940 + $0xc8] sm:$0xff] %vm404, %v4933
      %4967 = vst.msk [vmem:[%s4940 + $0xd0] sm:$0xff] %vm404, %v4934
      %4968 = vst.msk [vmem:[%s4940 + $0xd8] sm:$0xff] %vm404, %v4935
      %4969 = vst.msk [vmem:[%s4940 + $0xe0] sm:$0xff] %vm404, %v4936
      %4970 = vst.msk [vmem:[%s4940 + $0xe8] sm:$0xff] %vm404, %v4937
      %4971 = vst.msk [vmem:[%s4940 + $0xf0] sm:$0xff] %vm404, %v4938
      %4972 = vst.msk [vmem:[%s4940 + $0xf8] sm:$0xff] %vm404, %v4939
      %s4973 = smul.u32 16, %s21
      %p4974 = scmp.lt.s32.totalorder %s20, 1
      %s4975 = scalar_select %p4974, %s20, 1
      %p4976 = scmp.lt.s32.totalorder %s4973, 15
      %s4977 = scalar_select %p4976, %s4973, 15
      %s4978 = smul.addr %s4977, 2
      %s4979 = smul.addr %s4975, 128
      %s4980 = sadd.s32 %s4978, %s4979
      %s4981 = smul.addr %s4980, 8
      %s4982 = scalar_lea.vmem %s5, %s4981
      // Predicated region
      $region41: #{tpu_custom_call.1} parent=39 // pred_check
        %p4983 = pneg %p190
      $region42: #{tpu_custom_call.1} parent=39 // pred_check_branch
        %4985 = sbr.rel (%p4983) target = $region44
      $region43: #{tpu_custom_call.1} parent=39 // pred_region
        %s4986 = smul.u32 16, %s21
      $region44: #{tpu_custom_call.1} parent=39 // pred_fallthru
        _
    $region40: #{tpu_custom_call.1} parent=5 // pred_fallthru
      _
    %p4987 = scmp.le.s32.totalorder 2, %s11
    // Predicated region
    $region45: #{tpu_custom_call.1} parent=5 // pred_check
      %p4988 = pneg %p4987
    $region46: #{tpu_custom_call.1} parent=5 // pred_check_branch
      %4990 = sbr.rel (%p4988) target = $region48
    $region47: #{tpu_custom_call.1} parent=5 // pred_region
      %s4991 = ssub.s32 %s11, 2
      // Predicated region
      $region49: #{tpu_custom_call.1} parent=47 // pred_check
        %p4992 = pneg %p196
      $region50: #{tpu_custom_call.1} parent=47 // pred_check_branch
        %4994 = sbr.rel (%p4992) target = $region52
      $region51: #{tpu_custom_call.1} parent=47 // pred_region
        %s4995 = smul.u32 16, %s23
        %p4996 = scmp.lt.s32.totalorder %s22, 1
        %s4997 = scalar_select %p4996, %s22, 1
        %p4998 = scmp.lt.s32.totalorder %s4995, 15
        %s4999 = scalar_select %p4998, %s4995, 15
        %s5000 = smul.addr %s4999, 2
        %s5001 = smul.addr %s4997, 128
        %s5002 = sadd.s32 %s5000, %s5001
        %s5003 = smul.addr %s5002, 8
        %s5004 = scalar_lea.vmem %s5, %s5003
      $region52: #{tpu_custom_call.1} parent=47 // pred_fallthru
        _
    $region48: #{tpu_custom_call.1} parent=5 // pred_fallthru
      _
  $region6: #{tpu_custom_call.1} parent=0 // loop_footer
    %s15 = sadd.s32 1, %s11
  $region7: #{tpu_custom_call.1} parent=0 // loop_footer_branch
    %10 = sbr.rel target = $region3
  $region8: #{tpu_custom_call.1} parent=0 // loop_exit
    _

</llo_original>
